<compile_context>
chip_gen: v6e
topology: v6e:2x2x1
jax: 0.10.0
libtpu: 0.0.40
codegen_flags: <defaults>
</compile_context>

<pallas_src>
import functools

import jax
import jax.numpy as jnp
from jax import lax
from jax.experimental import pallas as pl
from jax.experimental.pallas import tpu as pltpu

NEG_SLOPE = 0.2
BN_EPS = 1e-5
LANE = 128          # channel (Cout) padding granularity -> lane-dense stores
WO_ALIGN = 16       # output-width padding (bf16 sublane-pack friendly)
GEMM_ROWS = 256     # target GEMM rows (to * wo_pad) per grid step


def _round_up(x, m):
    return ((x + m - 1) // m) * m


def _cdiv(a, b):
    return (a + b - 1) // b


def _vmem_limit_bytes():
    # Raise the scoped-VMEM budget where the physical capacity is known
    # (perf-review item); fall back to compiler defaults otherwise.
    try:
        cap = int(pltpu.get_tpu_info().vmem_capacity_bytes)
    except Exception:
        return None
    if cap < 32 * 1024 * 1024:
        return None
    return min((cap * 3) // 4, 96 * 1024 * 1024)


_VMEM_LIMIT = _vmem_limit_bytes()


def _compiler_params(dimension_semantics):
    return pltpu.CompilerParams(
        dimension_semantics=dimension_semantics,
        vmem_limit_bytes=_VMEM_LIMIT,
    )


# ----------------------------- conv kernel -------------------------------- #

def _conv_kernel(x_ref, w_ref, b_ref, o_ref, *, stride, to, wo_pad, hh, wh,
                 apply_act):
    """One (image, output-row-block) step: 16-tap accumulated GEMM.

    x_ref : (1, s*hh, s*wh, cin)   phase-split padded image (bf16), resident
    w_ref : (16, cin, cout_pad)    per-tap weight matrices (bf16), resident
    b_ref : (1, cout_pad)          bias (f32), resident
    o_ref : (to*wo_pad, cout_pad)  output rows of this block (bf16)
    """
    r = pl.program_id(1)
    row0 = r * to
    cin = x_ref.shape[-1]
    acc = None
    for kh in range(4):
        ph, qh = kh % stride, kh // stride
        for kw in range(4):
            pw, qw = kw % stride, kw // stride
            # Contiguous window thanks to the JAX-side stride phase split.
            win = x_ref[0,
                        pl.ds(ph * hh + qh + row0, to),
                        pl.ds(pw * wh + qw, wo_pad),
                        :]                                  # (to, wo_pad, cin)
            a = win.reshape(to * wo_pad, cin)               # VMEM patch tile
            part = jnp.dot(a, w_ref[kh * 4 + kw],
                           preferred_element_type=jnp.float32)
            acc = part if acc is None else acc + part
    acc = acc + b_ref[...]                                  # epilogue: bias
    if apply_act:
        acc = jnp.where(acc >= 0, acc, NEG_SLOPE * acc)     # fused LeakyReLU
    o_ref[...] = acc.astype(o_ref.dtype)


def conv4x4(x_nhwc, w_hwio, bias, stride, apply_act, cout_pad):
    """Conv2d(kernel=4, padding=2, stride) [+ fused LeakyReLU(0.2)]."""
    n, h, wdt, cin_act = x_nhwc.shape
    _, _, cin_w, cout = w_hwio.shape
    s = stride
    ho = h // s + 1
    wo = wdt // s + 1
    wo_pad = _round_up(wo, WO_ALIGN)
    to = max(1, min(ho, GEMM_ROWS // wo_pad))
    nrb = _cdiv(ho, to)
    ho_pad = nrb * to
    hp = s * (ho_pad - 1) + 4          # padded rows actually referenced
    wp = s * (wo_pad - 1) + 4
    hh, wh = hp // s, wp // s

    xpad = jnp.pad(x_nhwc.astype(jnp.bfloat16),
                   ((0, 0), (2, hp - h - 2), (2, wp - wdt - 2), (0, 0)))
    if s > 1:
        # De-interleave rows/cols by stride so every tap window is contiguous.
        x_ph = (xpad.reshape(n, hh, s, wh, s, cin_act)
                    .transpose(0, 2, 1, 4, 3, 5)
                    .reshape(n, s * hh, s * wh, cin_act))
    else:
        x_ph = xpad

    # Zero-pad weights to the activation channel count / lane-dense Cout.
    w_p = jnp.zeros((4, 4, cin_act, cout_pad), jnp.float32)
    w_p = w_p.at[:, :, :cin_w, :cout].set(w_hwio)
    w_taps = w_p.reshape(16, cin_act, cout_pad).astype(jnp.bfloat16)
    b_p = jnp.zeros((1, cout_pad), jnp.float32).at[0, :cout].set(bias)

    kernel = functools.partial(_conv_kernel, stride=s, to=to, wo_pad=wo_pad,
                               hh=hh, wh=wh, apply_act=apply_act)
    out2d = pl.pallas_call(
        kernel,
        out_shape=jax.ShapeDtypeStruct((n * ho_pad * wo_pad, cout_pad),
                                       jnp.bfloat16),
        grid=(n, nrb),
        in_specs=[
            # Whole phase-split image: index depends only on the batch axis,
            # so it stays resident across the row-block axis (no re-DMA).
            pl.BlockSpec((1, s * hh, s * wh, cin_act),
                         lambda ni, ri: (ni, 0, 0, 0)),
            # Weights / bias: constant index -> DMA'd once for the whole grid.
            pl.BlockSpec((16, cin_act, cout_pad), lambda ni, ri: (0, 0, 0)),
            pl.BlockSpec((1, cout_pad), lambda ni, ri: (0, 0)),
        ],
        out_specs=pl.BlockSpec((to * wo_pad, cout_pad),
                               lambda ni, ri: (ni * nrb + ri, 0)),
        compiler_params=_compiler_params(("parallel", "arbitrary")),
    )(x_ph, w_taps, b_p)

    out = out2d.reshape(n, ho_pad, wo_pad, cout_pad)[:, :ho, :wo, :]
    return out


# -------------------- BatchNorm2d + LeakyReLU (two-pass) ------------------- #

def _bn_reduce_kernel(x_ref, sum_ref, sq_ref):
    @pl.when(pl.program_id(0) == 0)
    def _init():
        sum_ref[...] = jnp.zeros_like(sum_ref)
        sq_ref[...] = jnp.zeros_like(sq_ref)

    x = x_ref[...].astype(jnp.float32)
    sum_ref[...] += jnp.sum(x, axis=0, keepdims=True)
    sq_ref[...] += jnp.sum(x * x, axis=0, keepdims=True)


def _bn_apply_kernel(x_ref, scale_ref, shift_ref, o_ref):
    y = x_ref[...].astype(jnp.float32) * scale_ref[...] + shift_ref[...]
    o_ref[...] = jnp.where(y >= 0, y, NEG_SLOPE * y).astype(o_ref.dtype)


def batchnorm_lrelu(x_nhwc, gamma_pad, beta_pad):
    """Training-mode BatchNorm2d (biased batch stats) + LeakyReLU(0.2)."""
    n, h, w, c = x_nhwc.shape
    m = n * h * w
    x2d = x_nhwc.reshape(m, c)
    tm = min(512, _round_up(m, 8))
    m_pad = _round_up(m, tm)
    if m_pad != m:
        # Zero rows contribute nothing to sums; divisor below is the true m.
        x2d = jnp.pad(x2d, ((0, m_pad - m), (0, 0)))
    nb = m_pad // tm

    ssum, ssq = pl.pallas_call(
        _bn_reduce_kernel,
        out_shape=(jax.ShapeDtypeStruct((1, c), jnp.float32),
                   jax.ShapeDtypeStruct((1, c), jnp.float32)),
        grid=(nb,),
        in_specs=[pl.BlockSpec((tm, c), lambda i: (i, 0))],
        out_specs=(pl.BlockSpec((1, c), lambda i: (0, 0)),
                   pl.BlockSpec((1, c), lambda i: (0, 0))),
        compiler_params=_compiler_params(("arbitrary",)),
    )(x2d)

    mean = ssum / m
    var = jnp.maximum(ssq / m - mean * mean, 0.0)            # biased variance
    scale = gamma_pad.reshape(1, c) * lax.rsqrt(var + BN_EPS)
    shift = beta_pad.reshape(1, c) - mean * scale

    y2d = pl.pallas_call(
        _bn_apply_kernel,
        out_shape=jax.ShapeDtypeStruct((m_pad, c), jnp.bfloat16),
        grid=(nb,),
        in_specs=[pl.BlockSpec((tm, c), lambda i: (i, 0)),
                  pl.BlockSpec((1, c), lambda i: (0, 0)),
                  pl.BlockSpec((1, c), lambda i: (0, 0))],
        out_specs=pl.BlockSpec((tm, c), lambda i: (i, 0)),
        compiler_params=_compiler_params(("parallel",)),
    )(x2d, scale, shift)
    return y2d[:m].reshape(n, h, w, c)


# -------------------- module parameters / forward pass --------------------- #

def make_params(key, cin, ndf=8, layers=3):
    """Mirror DiscriminatorLayer.__init__ (sigmoid=False, getIntermFeat=False)."""
    specs = [(cin, ndf, 2, False, True)]                   # conv + LeakyReLU
    nf = ndf
    for _ in range(1, layers):
        nf_prev, nf = nf, min(nf * 2, 512)
        specs.append((nf_prev, nf, 2, True, True))         # conv + BN + LeakyReLU
    nf_prev, nf = nf, min(nf * 2, 512)
    specs.append((nf_prev, nf, 1, True, True))             # conv + BN + LeakyReLU
    specs.append((nf, 1, 1, False, False))                 # conv only
    params = []
    for ci, co, stride, has_bn, has_act in specs:
        key, kw_, kb_, kg_, kt_ = jax.random.split(key, 5)
        p = dict(
            w=jax.random.normal(kw_, (4, 4, ci, co), jnp.float32) * 0.05,
            b=jax.random.normal(kb_, (co,), jnp.float32) * 0.05,
            stride=stride, has_bn=has_bn, has_act=has_act,
        )
        if has_bn:
            p["gamma"] = 1.0 + 0.1 * jax.random.normal(kg_, (co,), jnp.float32)
            p["beta"] = 0.1 * jax.random.normal(kt_, (co,), jnp.float32)
        params.append(p)
    return params


def discriminator_forward(params, x_nchw):
    x = jnp.transpose(x_nchw, (0, 2, 3, 1))                # NCHW -> NHWC
    for p in params:
        cout = p["w"].shape[-1]
        cout_pad = _round_up(cout, LANE)
        fuse_act = p["has_act"] and not p["has_bn"]
        x = conv4x4(x, p["w"], p["b"], p["stride"], fuse_act, cout_pad)
        if p["has_bn"]:
            gamma_pad = jnp.zeros((cout_pad,), jnp.float32).at[:cout].set(p["gamma"])
            beta_pad = jnp.zeros((cout_pad,), jnp.float32).at[:cout].set(p["beta"])
            x = batchnorm_lrelu(x, gamma_pad, beta_pad)
    cout_last = params[-1]["w"].shape[-1]
    x = x[..., :cout_last].astype(jnp.float32)             # drop zero lane pad
    return jnp.transpose(x, (0, 3, 1, 2))                  # NHWC -> NCHW


def reference_forward(params, x_nchw):
    """Pure-JAX f32 reference matching the PyTorch module semantics."""
    x = jnp.transpose(x_nchw, (0, 2, 3, 1))
    for p in params:
        x = lax.conv_general_dilated(
            x, p["w"], window_strides=(p["stride"], p["stride"]),
            padding=((2, 2), (2, 2)),
            dimension_numbers=("NHWC", "HWIO", "NHWC")) + p["b"]
        if p["has_bn"]:
            mean = jnp.mean(x, axis=(0, 1, 2), keepdims=True)
            var = jnp.mean((x - mean) ** 2, axis=(0, 1, 2), keepdims=True)
            x = (x - mean) / jnp.sqrt(var + BN_EPS) * p["gamma"] + p["beta"]
        if p["has_act"]:
            x = jnp.where(x >= 0, x, NEG_SLOPE * x)
    return jnp.transpose(x, (0, 3, 1, 2))


if __name__ == "__main__":
    key = jax.random.PRNGKey(0)
    kx, kp = jax.random.split(key)
    # small shapes: batch=2, in_channels=4, spatial=16, ndf=8, layers=3
    x = jax.random.normal(kx, (2, 4, 16, 16), jnp.float32)
    params = make_params(kp, cin=4, ndf=8, layers=3)

    out = jax.block_until_ready(discriminator_forward(params, x))
    ref = jax.block_until_ready(reference_forward(params, x))

    assert out.shape == ref.shape == (2, 1, 5, 5), out.shape
    # Tolerance accounts for bf16 MXU inputs / bf16 inter-layer activations
    # compared against the pure-f32 reference.
    assert jnp.allclose(out, ref, rtol=5e-2, atol=5e-2), "mismatch vs reference"

    print("KERNEL_OK")
</pallas_src>

<mosaic_0001>
module attributes {stable_mosaic.version = 11 : i64} {
  func.func @_conv_kernel(%arg0: i32, %arg1: i32, %arg2: memref<1x20x34x4xbf16, #tpu.memory_space<vmem>>, %arg3: memref<16x4x128xbf16, #tpu.memory_space<vmem>>, %arg4: memref<1x128xf32, #tpu.memory_space<vmem>>, %arg5: memref<144x128xbf16, #tpu.memory_space<vmem>>) attributes {dimension_semantics = [#tpu.dimension_semantics<parallel>, #tpu.dimension_semantics<arbitrary>], iteration_bounds = array<i64: 2, 1>, scalar_prefetch = 0 : i64, scratch_operands = 0 : i64, tpu.core_type = #tpu.core_type<tc>, window_params = [{transform_indices = @transform_0, window_bounds = array<i64: 1, 20, 34, 4>}, {pipeline_mode = #tpu.pipeline_mode<synchronous>, transform_indices = @transform_1, window_bounds = array<i64: 16, 4, 128>}, {pipeline_mode = #tpu.pipeline_mode<synchronous>, transform_indices = @transform_2, window_bounds = array<i64: 1, 128>}, {transform_indices = @transform_3, window_bounds = array<i64: 144, 128>}]} {
    %c9_i32 = arith.constant 9 : i32
    %0 = arith.muli %arg1, %c9_i32 : i32
    %c0_i32 = arith.constant 0 : i32
    %1 = arith.addi %c0_i32, %0 : i32
    %c0 = arith.constant 0 : index
    %2 = arith.index_cast %1 : i32 to index
    %c0_0 = arith.constant 0 : index
    %c0_1 = arith.constant 0 : index
    %3 = vector.load %arg2[%c0, %2, %c0_0, %c0_1] : memref<1x20x34x4xbf16, #tpu.memory_space<vmem>>, vector<1x9x16x4xbf16>
    %4 = vector.shape_cast %3 : vector<1x9x16x4xbf16> to vector<9x16x4xbf16>
    %5 = vector.shape_cast %4 : vector<9x16x4xbf16> to vector<144x4xbf16>
    %c0_2 = arith.constant 0 : index
    %c0_3 = arith.constant 0 : index
    %c0_4 = arith.constant 0 : index
    %6 = vector.load %arg3[%c0_2, %c0_3, %c0_4] : memref<16x4x128xbf16, #tpu.memory_space<vmem>>, vector<1x4x128xbf16>
    %7 = vector.shape_cast %6 : vector<1x4x128xbf16> to vector<4x128xbf16>
    %cst = arith.constant dense<0.000000e+00> : vector<144x128xf32>
    %8 = tpu.matmul %5, %7, %cst {dimension_numbers = #tpu.dot_dimension_numbers<[1], [0], [0], [1], [0, 0, 1, 1], [], []>} : vector<144x4xbf16>, vector<4x128xbf16>, vector<144x128xf32> -> vector<144x128xf32>
    %c0_i32_5 = arith.constant 0 : i32
    %9 = arith.addi %c0_i32_5, %0 : i32
    %c0_6 = arith.constant 0 : index
    %10 = arith.index_cast %9 : i32 to index
    %c17 = arith.constant 17 : index
    %c0_7 = arith.constant 0 : index
    %11 = vector.load %arg2[%c0_6, %10, %c17, %c0_7] : memref<1x20x34x4xbf16, #tpu.memory_space<vmem>>, vector<1x9x16x4xbf16>
    %12 = vector.shape_cast %11 : vector<1x9x16x4xbf16> to vector<9x16x4xbf16>
    %13 = vector.shape_cast %12 : vector<9x16x4xbf16> to vector<144x4xbf16>
    %c1 = arith.constant 1 : index
    %c0_8 = arith.constant 0 : index
    %c0_9 = arith.constant 0 : index
    %14 = vector.load %arg3[%c1, %c0_8, %c0_9] : memref<16x4x128xbf16, #tpu.memory_space<vmem>>, vector<1x4x128xbf16>
    %15 = vector.shape_cast %14 : vector<1x4x128xbf16> to vector<4x128xbf16>
    %cst_10 = arith.constant dense<0.000000e+00> : vector<144x128xf32>
    %16 = tpu.matmul %13, %15, %cst_10 {dimension_numbers = #tpu.dot_dimension_numbers<[1], [0], [0], [1], [0, 0, 1, 1], [], []>} : vector<144x4xbf16>, vector<4x128xbf16>, vector<144x128xf32> -> vector<144x128xf32>
    %17 = arith.addf %8, %16 : vector<144x128xf32>
    %c0_i32_11 = arith.constant 0 : i32
    %18 = arith.addi %c0_i32_11, %0 : i32
    %c0_12 = arith.constant 0 : index
    %19 = arith.index_cast %18 : i32 to index
    %c1_13 = arith.constant 1 : index
    %c0_14 = arith.constant 0 : index
    %20 = vector.load %arg2[%c0_12, %19, %c1_13, %c0_14] : memref<1x20x34x4xbf16, #tpu.memory_space<vmem>>, vector<1x9x16x4xbf16>
    %21 = vector.shape_cast %20 : vector<1x9x16x4xbf16> to vector<9x16x4xbf16>
    %22 = vector.shape_cast %21 : vector<9x16x4xbf16> to vector<144x4xbf16>
    %c2 = arith.constant 2 : index
    %c0_15 = arith.constant 0 : index
    %c0_16 = arith.constant 0 : index
    %23 = vector.load %arg3[%c2, %c0_15, %c0_16] : memref<16x4x128xbf16, #tpu.memory_space<vmem>>, vector<1x4x128xbf16>
    %24 = vector.shape_cast %23 : vector<1x4x128xbf16> to vector<4x128xbf16>
    %cst_17 = arith.constant dense<0.000000e+00> : vector<144x128xf32>
    %25 = tpu.matmul %22, %24, %cst_17 {dimension_numbers = #tpu.dot_dimension_numbers<[1], [0], [0], [1], [0, 0, 1, 1], [], []>} : vector<144x4xbf16>, vector<4x128xbf16>, vector<144x128xf32> -> vector<144x128xf32>
    %26 = arith.addf %17, %25 : vector<144x128xf32>
    %c0_i32_18 = arith.constant 0 : i32
    %27 = arith.addi %c0_i32_18, %0 : i32
    %c0_19 = arith.constant 0 : index
    %28 = arith.index_cast %27 : i32 to index
    %c18 = arith.constant 18 : index
    %c0_20 = arith.constant 0 : index
    %29 = vector.load %arg2[%c0_19, %28, %c18, %c0_20] : memref<1x20x34x4xbf16, #tpu.memory_space<vmem>>, vector<1x9x16x4xbf16>
    %30 = vector.shape_cast %29 : vector<1x9x16x4xbf16> to vector<9x16x4xbf16>
    %31 = vector.shape_cast %30 : vector<9x16x4xbf16> to vector<144x4xbf16>
    %c3 = arith.constant 3 : index
    %c0_21 = arith.constant 0 : index
    %c0_22 = arith.constant 0 : index
    %32 = vector.load %arg3[%c3, %c0_21, %c0_22] : memref<16x4x128xbf16, #tpu.memory_space<vmem>>, vector<1x4x128xbf16>
    %33 = vector.shape_cast %32 : vector<1x4x128xbf16> to vector<4x128xbf16>
    %cst_23 = arith.constant dense<0.000000e+00> : vector<144x128xf32>
    %34 = tpu.matmul %31, %33, %cst_23 {dimension_numbers = #tpu.dot_dimension_numbers<[1], [0], [0], [1], [0, 0, 1, 1], [], []>} : vector<144x4xbf16>, vector<4x128xbf16>, vector<144x128xf32> -> vector<144x128xf32>
    %35 = arith.addf %26, %34 : vector<144x128xf32>
    %c10_i32 = arith.constant 10 : i32
    %36 = arith.addi %c10_i32, %0 : i32
    %c0_24 = arith.constant 0 : index
    %37 = arith.index_cast %36 : i32 to index
    %c0_25 = arith.constant 0 : index
    %c0_26 = arith.constant 0 : index
    %38 = vector.load %arg2[%c0_24, %37, %c0_25, %c0_26] : memref<1x20x34x4xbf16, #tpu.memory_space<vmem>>, vector<1x9x16x4xbf16>
    %39 = vector.shape_cast %38 : vector<1x9x16x4xbf16> to vector<9x16x4xbf16>
    %40 = vector.shape_cast %39 : vector<9x16x4xbf16> to vector<144x4xbf16>
    %c4 = arith.constant 4 : index
    %c0_27 = arith.constant 0 : index
    %c0_28 = arith.constant 0 : index
    %41 = vector.load %arg3[%c4, %c0_27, %c0_28] : memref<16x4x128xbf16, #tpu.memory_space<vmem>>, vector<1x4x128xbf16>
    %42 = vector.shape_cast %41 : vector<1x4x128xbf16> to vector<4x128xbf16>
    %cst_29 = arith.constant dense<0.000000e+00> : vector<144x128xf32>
    %43 = tpu.matmul %40, %42, %cst_29 {dimension_numbers = #tpu.dot_dimension_numbers<[1], [0], [0], [1], [0, 0, 1, 1], [], []>} : vector<144x4xbf16>, vector<4x128xbf16>, vector<144x128xf32> -> vector<144x128xf32>
    %44 = arith.addf %35, %43 : vector<144x128xf32>
    %c10_i32_30 = arith.constant 10 : i32
    %45 = arith.addi %c10_i32_30, %0 : i32
    %c0_31 = arith.constant 0 : index
    %46 = arith.index_cast %45 : i32 to index
    %c17_32 = arith.constant 17 : index
    %c0_33 = arith.constant 0 : index
    %47 = vector.load %arg2[%c0_31, %46, %c17_32, %c0_33] : memref<1x20x34x4xbf16, #tpu.memory_space<vmem>>, vector<1x9x16x4xbf16>
    %48 = vector.shape_cast %47 : vector<1x9x16x4xbf16> to vector<9x16x4xbf16>
    %49 = vector.shape_cast %48 : vector<9x16x4xbf16> to vector<144x4xbf16>
    %c5 = arith.constant 5 : index
    %c0_34 = arith.constant 0 : index
    %c0_35 = arith.constant 0 : index
    %50 = vector.load %arg3[%c5, %c0_34, %c0_35] : memref<16x4x128xbf16, #tpu.memory_space<vmem>>, vector<1x4x128xbf16>
    %51 = vector.shape_cast %50 : vector<1x4x128xbf16> to vector<4x128xbf16>
    %cst_36 = arith.constant dense<0.000000e+00> : vector<144x128xf32>
    %52 = tpu.matmul %49, %51, %cst_36 {dimension_numbers = #tpu.dot_dimension_numbers<[1], [0], [0], [1], [0, 0, 1, 1], [], []>} : vector<144x4xbf16>, vector<4x128xbf16>, vector<144x128xf32> -> vector<144x128xf32>
    %53 = arith.addf %44, %52 : vector<144x128xf32>
    %c10_i32_37 = arith.constant 10 : i32
    %54 = arith.addi %c10_i32_37, %0 : i32
    %c0_38 = arith.constant 0 : index
    %55 = arith.index_cast %54 : i32 to index
    %c1_39 = arith.constant 1 : index
    %c0_40 = arith.constant 0 : index
    %56 = vector.load %arg2[%c0_38, %55, %c1_39, %c0_40] : memref<1x20x34x4xbf16, #tpu.memory_space<vmem>>, vector<1x9x16x4xbf16>
    %57 = vector.shape_cast %56 : vector<1x9x16x4xbf16> to vector<9x16x4xbf16>
    %58 = vector.shape_cast %57 : vector<9x16x4xbf16> to vector<144x4xbf16>
    %c6 = arith.constant 6 : index
    %c0_41 = arith.constant 0 : index
    %c0_42 = arith.constant 0 : index
    %59 = vector.load %arg3[%c6, %c0_41, %c0_42] : memref<16x4x128xbf16, #tpu.memory_space<vmem>>, vector<1x4x128xbf16>
    %60 = vector.shape_cast %59 : vector<1x4x128xbf16> to vector<4x128xbf16>
    %cst_43 = arith.constant dense<0.000000e+00> : vector<144x128xf32>
    %61 = tpu.matmul %58, %60, %cst_43 {dimension_numbers = #tpu.dot_dimension_numbers<[1], [0], [0], [1], [0, 0, 1, 1], [], []>} : vector<144x4xbf16>, vector<4x128xbf16>, vector<144x128xf32> -> vector<144x128xf32>
    %62 = arith.addf %53, %61 : vector<144x128xf32>
    %c10_i32_44 = arith.constant 10 : i32
    %63 = arith.addi %c10_i32_44, %0 : i32
    %c0_45 = arith.constant 0 : index
    %64 = arith.index_cast %63 : i32 to index
    %c18_46 = arith.constant 18 : index
    %c0_47 = arith.constant 0 : index
    %65 = vector.load %arg2[%c0_45, %64, %c18_46, %c0_47] : memref<1x20x34x4xbf16, #tpu.memory_space<vmem>>, vector<1x9x16x4xbf16>
    %66 = vector.shape_cast %65 : vector<1x9x16x4xbf16> to vector<9x16x4xbf16>
    %67 = vector.shape_cast %66 : vector<9x16x4xbf16> to vector<144x4xbf16>
    %c7 = arith.constant 7 : index
    %c0_48 = arith.constant 0 : index
    %c0_49 = arith.constant 0 : index
    %68 = vector.load %arg3[%c7, %c0_48, %c0_49] : memref<16x4x128xbf16, #tpu.memory_space<vmem>>, vector<1x4x128xbf16>
    %69 = vector.shape_cast %68 : vector<1x4x128xbf16> to vector<4x128xbf16>
    %cst_50 = arith.constant dense<0.000000e+00> : vector<144x128xf32>
    %70 = tpu.matmul %67, %69, %cst_50 {dimension_numbers = #tpu.dot_dimension_numbers<[1], [0], [0], [1], [0, 0, 1, 1], [], []>} : vector<144x4xbf16>, vector<4x128xbf16>, vector<144x128xf32> -> vector<144x128xf32>
    %71 = arith.addf %62, %70 : vector<144x128xf32>
    %c1_i32 = arith.constant 1 : i32
    %72 = arith.addi %c1_i32, %0 : i32
    %c0_51 = arith.constant 0 : index
    %73 = arith.index_cast %72 : i32 to index
    %c0_52 = arith.constant 0 : index
    %c0_53 = arith.constant 0 : index
    %74 = vector.load %arg2[%c0_51, %73, %c0_52, %c0_53] : memref<1x20x34x4xbf16, #tpu.memory_space<vmem>>, vector<1x9x16x4xbf16>
    %75 = vector.shape_cast %74 : vector<1x9x16x4xbf16> to vector<9x16x4xbf16>
    %76 = vector.shape_cast %75 : vector<9x16x4xbf16> to vector<144x4xbf16>
    %c8 = arith.constant 8 : index
    %c0_54 = arith.constant 0 : index
    %c0_55 = arith.constant 0 : index
    %77 = vector.load %arg3[%c8, %c0_54, %c0_55] : memref<16x4x128xbf16, #tpu.memory_space<vmem>>, vector<1x4x128xbf16>
    %78 = vector.shape_cast %77 : vector<1x4x128xbf16> to vector<4x128xbf16>
    %cst_56 = arith.constant dense<0.000000e+00> : vector<144x128xf32>
    %79 = tpu.matmul %76, %78, %cst_56 {dimension_numbers = #tpu.dot_dimension_numbers<[1], [0], [0], [1], [0, 0, 1, 1], [], []>} : vector<144x4xbf16>, vector<4x128xbf16>, vector<144x128xf32> -> vector<144x128xf32>
    %80 = arith.addf %71, %79 : vector<144x128xf32>
    %c1_i32_57 = arith.constant 1 : i32
    %81 = arith.addi %c1_i32_57, %0 : i32
    %c0_58 = arith.constant 0 : index
    %82 = arith.index_cast %81 : i32 to index
    %c17_59 = arith.constant 17 : index
    %c0_60 = arith.constant 0 : index
    %83 = vector.load %arg2[%c0_58, %82, %c17_59, %c0_60] : memref<1x20x34x4xbf16, #tpu.memory_space<vmem>>, vector<1x9x16x4xbf16>
    %84 = vector.shape_cast %83 : vector<1x9x16x4xbf16> to vector<9x16x4xbf16>
    %85 = vector.shape_cast %84 : vector<9x16x4xbf16> to vector<144x4xbf16>
    %c9 = arith.constant 9 : index
    %c0_61 = arith.constant 0 : index
    %c0_62 = arith.constant 0 : index
    %86 = vector.load %arg3[%c9, %c0_61, %c0_62] : memref<16x4x128xbf16, #tpu.memory_space<vmem>>, vector<1x4x128xbf16>
    %87 = vector.shape_cast %86 : vector<1x4x128xbf16> to vector<4x128xbf16>
    %cst_63 = arith.constant dense<0.000000e+00> : vector<144x128xf32>
    %88 = tpu.matmul %85, %87, %cst_63 {dimension_numbers = #tpu.dot_dimension_numbers<[1], [0], [0], [1], [0, 0, 1, 1], [], []>} : vector<144x4xbf16>, vector<4x128xbf16>, vector<144x128xf32> -> vector<144x128xf32>
    %89 = arith.addf %80, %88 : vector<144x128xf32>
    %c1_i32_64 = arith.constant 1 : i32
    %90 = arith.addi %c1_i32_64, %0 : i32
    %c0_65 = arith.constant 0 : index
    %91 = arith.index_cast %90 : i32 to index
    %c1_66 = arith.constant 1 : index
    %c0_67 = arith.constant 0 : index
    %92 = vector.load %arg2[%c0_65, %91, %c1_66, %c0_67] : memref<1x20x34x4xbf16, #tpu.memory_space<vmem>>, vector<1x9x16x4xbf16>
    %93 = vector.shape_cast %92 : vector<1x9x16x4xbf16> to vector<9x16x4xbf16>
    %94 = vector.shape_cast %93 : vector<9x16x4xbf16> to vector<144x4xbf16>
    %c10 = arith.constant 10 : index
    %c0_68 = arith.constant 0 : index
    %c0_69 = arith.constant 0 : index
    %95 = vector.load %arg3[%c10, %c0_68, %c0_69] : memref<16x4x128xbf16, #tpu.memory_space<vmem>>, vector<1x4x128xbf16>
    %96 = vector.shape_cast %95 : vector<1x4x128xbf16> to vector<4x128xbf16>
    %cst_70 = arith.constant dense<0.000000e+00> : vector<144x128xf32>
    %97 = tpu.matmul %94, %96, %cst_70 {dimension_numbers = #tpu.dot_dimension_numbers<[1], [0], [0], [1], [0, 0, 1, 1], [], []>} : vector<144x4xbf16>, vector<4x128xbf16>, vector<144x128xf32> -> vector<144x128xf32>
    %98 = arith.addf %89, %97 : vector<144x128xf32>
    %c1_i32_71 = arith.constant 1 : i32
    %99 = arith.addi %c1_i32_71, %0 : i32
    %c0_72 = arith.constant 0 : index
    %100 = arith.index_cast %99 : i32 to index
    %c18_73 = arith.constant 18 : index
    %c0_74 = arith.constant 0 : index
    %101 = vector.load %arg2[%c0_72, %100, %c18_73, %c0_74] : memref<1x20x34x4xbf16, #tpu.memory_space<vmem>>, vector<1x9x16x4xbf16>
    %102 = vector.shape_cast %101 : vector<1x9x16x4xbf16> to vector<9x16x4xbf16>
    %103 = vector.shape_cast %102 : vector<9x16x4xbf16> to vector<144x4xbf16>
    %c11 = arith.constant 11 : index
    %c0_75 = arith.constant 0 : index
    %c0_76 = arith.constant 0 : index
    %104 = vector.load %arg3[%c11, %c0_75, %c0_76] : memref<16x4x128xbf16, #tpu.memory_space<vmem>>, vector<1x4x128xbf16>
    %105 = vector.shape_cast %104 : vector<1x4x128xbf16> to vector<4x128xbf16>
    %cst_77 = arith.constant dense<0.000000e+00> : vector<144x128xf32>
    %106 = tpu.matmul %103, %105, %cst_77 {dimension_numbers = #tpu.dot_dimension_numbers<[1], [0], [0], [1], [0, 0, 1, 1], [], []>} : vector<144x4xbf16>, vector<4x128xbf16>, vector<144x128xf32> -> vector<144x128xf32>
    %107 = arith.addf %98, %106 : vector<144x128xf32>
    %c11_i32 = arith.constant 11 : i32
    %108 = arith.addi %c11_i32, %0 : i32
    %c0_78 = arith.constant 0 : index
    %109 = arith.index_cast %108 : i32 to index
    %c0_79 = arith.constant 0 : index
    %c0_80 = arith.constant 0 : index
    %110 = vector.load %arg2[%c0_78, %109, %c0_79, %c0_80] : memref<1x20x34x4xbf16, #tpu.memory_space<vmem>>, vector<1x9x16x4xbf16>
    %111 = vector.shape_cast %110 : vector<1x9x16x4xbf16> to vector<9x16x4xbf16>
    %112 = vector.shape_cast %111 : vector<9x16x4xbf16> to vector<144x4xbf16>
    %c12 = arith.constant 12 : index
    %c0_81 = arith.constant 0 : index
    %c0_82 = arith.constant 0 : index
    %113 = vector.load %arg3[%c12, %c0_81, %c0_82] : memref<16x4x128xbf16, #tpu.memory_space<vmem>>, vector<1x4x128xbf16>
    %114 = vector.shape_cast %113 : vector<1x4x128xbf16> to vector<4x128xbf16>
    %cst_83 = arith.constant dense<0.000000e+00> : vector<144x128xf32>
    %115 = tpu.matmul %112, %114, %cst_83 {dimension_numbers = #tpu.dot_dimension_numbers<[1], [0], [0], [1], [0, 0, 1, 1], [], []>} : vector<144x4xbf16>, vector<4x128xbf16>, vector<144x128xf32> -> vector<144x128xf32>
    %116 = arith.addf %107, %115 : vector<144x128xf32>
    %c11_i32_84 = arith.constant 11 : i32
    %117 = arith.addi %c11_i32_84, %0 : i32
    %c0_85 = arith.constant 0 : index
    %118 = arith.index_cast %117 : i32 to index
    %c17_86 = arith.constant 17 : index
    %c0_87 = arith.constant 0 : index
    %119 = vector.load %arg2[%c0_85, %118, %c17_86, %c0_87] : memref<1x20x34x4xbf16, #tpu.memory_space<vmem>>, vector<1x9x16x4xbf16>
    %120 = vector.shape_cast %119 : vector<1x9x16x4xbf16> to vector<9x16x4xbf16>
    %121 = vector.shape_cast %120 : vector<9x16x4xbf16> to vector<144x4xbf16>
    %c13 = arith.constant 13 : index
    %c0_88 = arith.constant 0 : index
    %c0_89 = arith.constant 0 : index
    %122 = vector.load %arg3[%c13, %c0_88, %c0_89] : memref<16x4x128xbf16, #tpu.memory_space<vmem>>, vector<1x4x128xbf16>
    %123 = vector.shape_cast %122 : vector<1x4x128xbf16> to vector<4x128xbf16>
    %cst_90 = arith.constant dense<0.000000e+00> : vector<144x128xf32>
    %124 = tpu.matmul %121, %123, %cst_90 {dimension_numbers = #tpu.dot_dimension_numbers<[1], [0], [0], [1], [0, 0, 1, 1], [], []>} : vector<144x4xbf16>, vector<4x128xbf16>, vector<144x128xf32> -> vector<144x128xf32>
    %125 = arith.addf %116, %124 : vector<144x128xf32>
    %c11_i32_91 = arith.constant 11 : i32
    %126 = arith.addi %c11_i32_91, %0 : i32
    %c0_92 = arith.constant 0 : index
    %127 = arith.index_cast %126 : i32 to index
    %c1_93 = arith.constant 1 : index
    %c0_94 = arith.constant 0 : index
    %128 = vector.load %arg2[%c0_92, %127, %c1_93, %c0_94] : memref<1x20x34x4xbf16, #tpu.memory_space<vmem>>, vector<1x9x16x4xbf16>
    %129 = vector.shape_cast %128 : vector<1x9x16x4xbf16> to vector<9x16x4xbf16>
    %130 = vector.shape_cast %129 : vector<9x16x4xbf16> to vector<144x4xbf16>
    %c14 = arith.constant 14 : index
    %c0_95 = arith.constant 0 : index
    %c0_96 = arith.constant 0 : index
    %131 = vector.load %arg3[%c14, %c0_95, %c0_96] : memref<16x4x128xbf16, #tpu.memory_space<vmem>>, vector<1x4x128xbf16>
    %132 = vector.shape_cast %131 : vector<1x4x128xbf16> to vector<4x128xbf16>
    %cst_97 = arith.constant dense<0.000000e+00> : vector<144x128xf32>
    %133 = tpu.matmul %130, %132, %cst_97 {dimension_numbers = #tpu.dot_dimension_numbers<[1], [0], [0], [1], [0, 0, 1, 1], [], []>} : vector<144x4xbf16>, vector<4x128xbf16>, vector<144x128xf32> -> vector<144x128xf32>
    %134 = arith.addf %125, %133 : vector<144x128xf32>
    %c11_i32_98 = arith.constant 11 : i32
    %135 = arith.addi %c11_i32_98, %0 : i32
    %c0_99 = arith.constant 0 : index
    %136 = arith.index_cast %135 : i32 to index
    %c18_100 = arith.constant 18 : index
    %c0_101 = arith.constant 0 : index
    %137 = vector.load %arg2[%c0_99, %136, %c18_100, %c0_101] : memref<1x20x34x4xbf16, #tpu.memory_space<vmem>>, vector<1x9x16x4xbf16>
    %138 = vector.shape_cast %137 : vector<1x9x16x4xbf16> to vector<9x16x4xbf16>
    %139 = vector.shape_cast %138 : vector<9x16x4xbf16> to vector<144x4xbf16>
    %c15 = arith.constant 15 : index
    %c0_102 = arith.constant 0 : index
    %c0_103 = arith.constant 0 : index
    %140 = vector.load %arg3[%c15, %c0_102, %c0_103] : memref<16x4x128xbf16, #tpu.memory_space<vmem>>, vector<1x4x128xbf16>
    %141 = vector.shape_cast %140 : vector<1x4x128xbf16> to vector<4x128xbf16>
    %cst_104 = arith.constant dense<0.000000e+00> : vector<144x128xf32>
    %142 = tpu.matmul %139, %141, %cst_104 {dimension_numbers = #tpu.dot_dimension_numbers<[1], [0], [0], [1], [0, 0, 1, 1], [], []>} : vector<144x4xbf16>, vector<4x128xbf16>, vector<144x128xf32> -> vector<144x128xf32>
    %143 = arith.addf %134, %142 : vector<144x128xf32>
    %c0_105 = arith.constant 0 : index
    %c0_106 = arith.constant 0 : index
    %144 = vector.load %arg4[%c0_105, %c0_106] : memref<1x128xf32, #tpu.memory_space<vmem>>, vector<1x128xf32>
    %145 = vector.broadcast %144 : vector<1x128xf32> to vector<144x128xf32>
    %146 = arith.addf %143, %145 : vector<144x128xf32>
    %cst_107 = arith.constant 0.000000e+00 : f32
    %147 = vector.broadcast %cst_107 : f32 to vector<144x128xf32>
    %148 = arith.cmpf oge, %146, %147 : vector<144x128xf32>
    %cst_108 = arith.constant 2.000000e-01 : f32
    %149 = vector.broadcast %cst_108 : f32 to vector<144x128xf32>
    %150 = arith.mulf %149, %146 : vector<144x128xf32>
    %151 = arith.select %148, %146, %150 : vector<144x128xi1>, vector<144x128xf32>
    %152 = arith.truncf %151 : vector<144x128xf32> to vector<144x128xbf16>
    %c0_109 = arith.constant 0 : index
    %c0_110 = arith.constant 0 : index
    %153 = vector.load %arg5[%c0_109, %c0_110] : memref<144x128xbf16, #tpu.memory_space<vmem>>, vector<144x128xbf16>
    tpu.vector_store %arg5[%c0_109, %c0_110], %152 {strides = array<i32>} : memref<144x128xbf16, #tpu.memory_space<vmem>>, vector<144x128xbf16>,
    return
  }
  func.func @transform_0(%arg0: i32, %arg1: i32) -> (i32, i32, i32, i32) {
    %c0_i32 = arith.constant 0 : i32
    %c0_i32_0 = arith.constant 0 : i32
    %c0_i32_1 = arith.constant 0 : i32
    %c0_i32_2 = arith.constant 0 : i32
    return %arg0, %c0_i32, %c0_i32_0, %c0_i32_1 : i32, i32, i32, i32
  }
  func.func @transform_1(%arg0: i32, %arg1: i32) -> (i32, i32, i32) {
    %c0_i32 = arith.constant 0 : i32
    %c0_i32_0 = arith.constant 0 : i32
    %c0_i32_1 = arith.constant 0 : i32
    %c0_i32_2 = arith.constant 0 : i32
    return %c0_i32, %c0_i32_0, %c0_i32_1 : i32, i32, i32
  }
  func.func @transform_2(%arg0: i32, %arg1: i32) -> (i32, i32) {
    %c0_i32 = arith.constant 0 : i32
    %c0_i32_0 = arith.constant 0 : i32
    %c0_i32_1 = arith.constant 0 : i32
    return %c0_i32, %c0_i32_0 : i32, i32
  }
  func.func @transform_3(%arg0: i32, %arg1: i32) -> (i32, i32) {
    %c1_i32 = arith.constant 1 : i32
    %0 = arith.muli %arg0, %c1_i32 : i32
    %1 = arith.addi %0, %arg1 : i32
    %c0_i32 = arith.constant 0 : i32
    %c0_i32_0 = arith.constant 0 : i32
    return %1, %c0_i32 : i32, i32
  }
}

</mosaic_0001>

<llo_original>
// kernel: tpu_custom_call.1
$region0: #{tpu_custom_call.1}
  #allocation0 [shape = 'u32[]', space=smem, size = 0x4, offset = 0x4, fixed_abs, tag = 'smem constant byte address 0x4 - core index']
  #allocation1 [shape = 'u32[144,128]{1,0:T(1,128)}', space=vmem, size = 0x12000, scoped, tag = 'internal scratch']
  %s0 = inlined_call_operand.vmem [shape: bf16[2,20,34,4], index: 0, kind: input, shape index: {}]
  %s1 = inlined_call_operand.vmem [shape: bf16[16,4,128], index: 1, kind: input, shape index: {}]
  %s2 = inlined_call_operand.vmem [shape: f32[1,128], index: 2, kind: input, shape index: {}]
  %s3 = inlined_call_operand.hbm [shape: bf16[288,128], index: 3, kind: output, shape index: {}]
  %s4 = sld [smem:[#allocation0]]
  $region45: #{tpu_custom_call.1} parent=0
    _
  %s6 = ssub.s32 1, %s4
  %s7 = scalar_select 0, %s6, %s4
  $region1: #{tpu_custom_call.1} parent=0
    #allocation2 [shape = 'u8[73728]{0}', space=vmem, size = 0x12000, scoped, tag = 'output window, operand 0']
    #allocation3 [shape = 's32[2]{0}', space=sflag, size = 0x8, scoped, tag = 'scoped memory for tpu_custom_call.1']
    %8 = vsyncpa [#allocation3], 0
    %s9 = scalar_lea.sflag [#allocation3], 1
    %10 = vsyncpa %s9, 0
    loop: start=0, step=1, limit=4
    $region2: #{tpu_custom_call.1} parent=1 // loop_pre_header
      _
    $region3: #{tpu_custom_call.1} parent=1 // loop_header
      %s12 = sphi 0, %s16
      %p13 = scmp.ge.s32.totalorder %s12, 4
      %s19 = sphi 0, %s31
      %s20 = sphi 0, %s27
      %s21 = sphi 0, %s19
      %s22 = sphi 0, %s20
      %s23 = sphi 0, %s21
      %s24 = sphi 0, %s22
      %s34 = sphi 0, %s36
      %s37 = sphi 0, %s34
      %s38 = sphi 0, %s37
      %s54 = sphi 0, %s38
      %s58 = sphi 0, %s58
      %s60 = sphi 0, %s58
      %s61 = sphi 0, %s60
      %s75 = sphi 0, %s61
      %s79 = sphi 0, %s79
      %s81 = sphi 0, %s79
      %s82 = sphi 0, %s81
      %s96 = sphi 0, %s82
      %s104 = sphi 0, %s106
      %s107 = sphi 0, %s104
      %s108 = sphi 0, %s107
      %s124 = sphi 0, %s108
    $region4: #{tpu_custom_call.1} parent=1 // loop_header_branch
      %15 = sbr.rel (%p13) target = $region8
    $region5: #{tpu_custom_call.1} parent=1 // loop_body
      %s17 = ssub.s32 %s12, 1
      %s18 = ssub.s32 %s12, 2
      %s25 = sadd.s32 1, %s20
      %p26 = scmp.ge.s32.totalorder %s25, 1
      %s27 = scalar_select %p26, 0, %s25
      %s28 = sadd.s32 1, %s19
      %s29 = scalar_select %p26, %s28, %s19
      %p30 = scmp.ge.s32.totalorder %s29, 2
      %s31 = scalar_select %p30, 0, %s29
      %s32 = ssub.s32 %s19, %s31
      %p33 = scmp.eq.s32.totalorder %s32, 0
      %s35 = sadd.s32 %s34, 1
      %s36 = scalar_select %p33, %s34, %s35
      %p39 = pneg %p33
      %p40 = scmp.eq.s32.totalorder %s12, 1
      %p41 = por %p39, %p40
      %p42 = scmp.ne.s32.totalorder %s34, %s37
      %p43 = scmp.eq.s32.totalorder %s12, 0
      %p44 = por %p42, %p43
      %p45 = scmp.ne.s32.totalorder %s34, %s37
      %p46 = scmp.eq.s32.totalorder %s17, 1
      %p47 = por %p45, %p46
      %p48 = scmp.ne.s32.totalorder %s37, %s38
      %p49 = scmp.eq.s32.totalorder %s17, 0
      %p50 = por %p48, %p49
      %p51 = scmp.ne.s32.totalorder %s37, %s38
      %p52 = scmp.eq.s32.totalorder %s18, 1
      %p53 = por %p51, %p52
      %p55 = scmp.ne.s32.totalorder %s38, %s54
      %p56 = scmp.eq.s32.totalorder %s18, 0
      %p57 = por %p55, %p56
      %s59 = sadd.s32 %s58, 1
      %p62 = scmp.eq.s32.totalorder %s12, 1
      %p63 = scmp.ne.s32.totalorder %s58, %s60
      %p64 = scmp.eq.s32.totalorder %s12, 0
      %p65 = por %p63, %p64
      %p66 = scmp.ne.s32.totalorder %s58, %s60
      %p67 = scmp.eq.s32.totalorder %s17, 1
      %p68 = por %p66, %p67
      %p69 = scmp.ne.s32.totalorder %s60, %s61
      %p70 = scmp.eq.s32.totalorder %s17, 0
      %p71 = por %p69, %p70
      %p72 = scmp.ne.s32.totalorder %s60, %s61
      %p73 = scmp.eq.s32.totalorder %s18, 1
      %p74 = por %p72, %p73
      %p76 = scmp.ne.s32.totalorder %s61, %s75
      %p77 = scmp.eq.s32.totalorder %s18, 0
      %p78 = por %p76, %p77
      %s80 = sadd.s32 %s79, 1
      %p83 = scmp.eq.s32.totalorder %s12, 1
      %p84 = scmp.ne.s32.totalorder %s79, %s81
      %p85 = scmp.eq.s32.totalorder %s12, 0
      %p86 = por %p84, %p85
      %p87 = scmp.ne.s32.totalorder %s79, %s81
      %p88 = scmp.eq.s32.totalorder %s17, 1
      %p89 = por %p87, %p88
      %p90 = scmp.ne.s32.totalorder %s81, %s82
      %p91 = scmp.eq.s32.totalorder %s17, 0
      %p92 = por %p90, %p91
      %p93 = scmp.ne.s32.totalorder %s81, %s82
      %p94 = scmp.eq.s32.totalorder %s18, 1
      %p95 = por %p93, %p94
      %p97 = scmp.ne.s32.totalorder %s82, %s96
      %p98 = scmp.eq.s32.totalorder %s18, 0
      %p99 = por %p97, %p98
      %s100 = sadd.s32 %s19, %s20
      %s101 = sadd.s32 %s31, %s27
      %s102 = ssub.s32 %s100, %s101
      %p103 = scmp.eq.s32.totalorder %s102, 0
      %s105 = sadd.s32 %s104, 1
      %s106 = scalar_select %p103, %s104, %s105
      %p109 = pneg %p103
      %p110 = scmp.eq.s32.totalorder %s12, 1
      %p111 = por %p109, %p110
      %p112 = scmp.ne.s32.totalorder %s104, %s107
      %p113 = scmp.eq.s32.totalorder %s12, 0
      %p114 = por %p112, %p113
      %p115 = scmp.ne.s32.totalorder %s104, %s107
      %p116 = scmp.eq.s32.totalorder %s17, 1
      %p117 = por %p115, %p116
      %p118 = scmp.ne.s32.totalorder %s107, %s108
      %p119 = scmp.eq.s32.totalorder %s17, 0
      %p120 = por %p118, %p119
      %p121 = scmp.ne.s32.totalorder %s107, %s108
      %p122 = scmp.eq.s32.totalorder %s18, 1
      %p123 = por %p121, %p122
      %p125 = scmp.ne.s32.totalorder %s108, %s124
      %p126 = scmp.eq.s32.totalorder %s18, 0
      %p127 = por %p125, %p126
      %p128 = scmp.le.s32.totalorder 1, %s12
      %p129 = scmp.lt.s32.totalorder %s12, 3
      %p130 = pnand %p128, %p129
      %p131 = pneg %p130
      // Predicated region
      $region9: #{tpu_custom_call.1} parent=5 // pred_check
        _
      $region10: #{tpu_custom_call.1} parent=5 // pred_check_branch
        %133 = sbr.rel (%p130) target = $region12
      $region11: #{tpu_custom_call.1} parent=5 // pred_region
        %s134 = ssub.s32 %s12, 1
        // Predicated region
        $region13: #{tpu_custom_call.1} parent=11 // pred_check
          %p135 = pneg %p71
        $region14: #{tpu_custom_call.1} parent=11 // pred_check_branch
          %137 = sbr.rel (%p135) target = $region16
        $region15: #{tpu_custom_call.1} parent=11 // pred_region
          _
        $region16: #{tpu_custom_call.1} parent=11 // pred_fallthru
          _
        // Predicated region
        $region17: #{tpu_custom_call.1} parent=11 // pred_check
          %p138 = pneg %p92
        $region18: #{tpu_custom_call.1} parent=11 // pred_check_branch
          %140 = sbr.rel (%p138) target = $region20
        $region19: #{tpu_custom_call.1} parent=11 // pred_region
          _
        $region20: #{tpu_custom_call.1} parent=11 // pred_fallthru
          _
      $region12: #{tpu_custom_call.1} parent=5 // pred_fallthru
        _
      %p141 = scmp.lt.s32.totalorder %s12, 2
      // Predicated region
      $region21: #{tpu_custom_call.1} parent=5 // pred_check
        %p142 = pneg %p141
      $region22: #{tpu_custom_call.1} parent=5 // pred_check_branch
        %144 = sbr.rel (%p142) target = $region24
      $region23: #{tpu_custom_call.1} parent=5 // pred_region
        // Predicated region
        $region25: #{tpu_custom_call.1} parent=23 // pred_check
          %p145 = pneg %p44
        $region26: #{tpu_custom_call.1} parent=23 // pred_check_branch
          %147 = sbr.rel (%p145) target = $region28
        $region27: #{tpu_custom_call.1} parent=23 // pred_region
          %p148 = scmp.lt.s32.totalorder %s19, 1
          %s149 = scalar_select %p148, %s19, 1
          %s150 = smul.addr %s149, 100
          %s151 = smul.addr %s150, 4
          %s152 = scalar_lea.vmem %s0, %s151
        $region28: #{tpu_custom_call.1} parent=23 // pred_fallthru
          _
      $region24: #{tpu_custom_call.1} parent=5 // pred_fallthru
        _
      %p153 = scmp.le.s32.totalorder 1, %s12
      %p154 = scmp.lt.s32.totalorder %s12, 3
      %p155 = pnand %p153, %p154
      %p156 = pneg %p155
      // Predicated region
      $region29: #{tpu_custom_call.1} parent=5 // pred_check
        _
      $region30: #{tpu_custom_call.1} parent=5 // pred_check_branch
        %158 = sbr.rel (%p155) target = $region32
      $region31: #{tpu_custom_call.1} parent=5 // pred_region
        %s159 = ssub.s32 %s12, 1
        %p160 = scmp.lt.s32.totalorder %s21, 1
        %s161 = scalar_select %p160, %s21, 1
        %s162 = smul.addr %s161, 100
        %s163 = smul.addr %s162, 4
        %s164 = scalar_lea.vmem %s0, %s163
        %p165 = pneg %p50
        %p166 = pneg %p47
        %p167 = pneg %p71
        %p168 = pneg %p68
        %p169 = pneg %p92
        %p170 = pneg %p89
        %p171 = pneg %p120
        %p172 = pneg %p117
        %s173 = sand.u32 %s107, 1
        %s174 = scalar_lea.sflag [#allocation3], %s173
        %s175 = sand.u32 %s107, 1
        %s176 = smul.addr %s175, 72
        %s177 = scalar_lea.vmem [#allocation2], %s176
        %p178 = scmp.lt.s32.totalorder %s21, 1
        %s179 = scalar_select %p178, %s21, 1
        %s180 = smul.addr %s179, 100
        %s181 = smul.addr %s180, 4
        %s182 = scalar_lea.vmem %s0, %s181
        %s183 = sadd.s32 %s21, %s22
        %s184 = smul.u32 18, %s183
        %s186 = smul.u32 %s22, 9
        %s187 = smul.u32 %s186, 5
        %s188 = smul.addr %s187, 4
        %s189 = scalar_lea.vmem %s182, %s188
        %v190 = vld [vmem:[%s189] sm:$0xf]
        %v191 = vld [vmem:[%s189 + $0x4] sm:$0xf]
        %v192 = vld [vmem:[%s189 + $0x14] sm:$0xf]
        %v193 = vld [vmem:[%s189 + $0x18] sm:$0xf]
        %v194 = vld [vmem:[%s189 + $0x28] sm:$0xf]
        %v195 = vld [vmem:[%s189 + $0x2c] sm:$0xf]
        %v196 = vld [vmem:[%s189 + $0x3c] sm:$0xf]
        %v197 = vld [vmem:[%s189 + $0x40] sm:$0xf]
        %v198 = vld [vmem:[%s189 + $0x50] sm:$0xf]
        %v199 = vld [vmem:[%s189 + $0x54] sm:$0xf]
        %v200 = vld [vmem:[%s189 + $0x64] sm:$0xf]
        %v201 = vld [vmem:[%s189 + $0x68] sm:$0xf]
        %v202 = vld [vmem:[%s189 + $0x78] sm:$0xf]
        %v203 = vld [vmem:[%s189 + $0x7c] sm:$0xf]
        %v204 = vld [vmem:[%s189 + $0x8c] sm:$0xf]
        %v205 = vld [vmem:[%s189 + $0x90] sm:$0xf]
        %v206 = vld [vmem:[%s189 + $0xa0] sm:$0xf]
        %v207 = vld [vmem:[%s189 + $0xa4] sm:$0xf]
        %v208 = vld [vmem:[%s1] sm:$0x3]
        %v209 = vld [vmem:[%s189 + $0x8] sm:$0xf]
        %v210 = vld [vmem:[%s189 + $0xc] sm:$0xf]
        %v211 = vld [vmem:[%s189 + $0x10] sm:$0x1]
        %v212 = vld [vmem:[%s189 + $0x1c] sm:$0xf]
        %v213 = vld [vmem:[%s189 + $0x20] sm:$0xf]
        %v214 = vld [vmem:[%s189 + $0x24] sm:$0x1]
        %v215 = vld [vmem:[%s189 + $0x30] sm:$0xf]
        %v216 = vld [vmem:[%s189 + $0x34] sm:$0xf]
        %v217 = vld [vmem:[%s189 + $0x38] sm:$0x1]
        %v218 = vld [vmem:[%s189 + $0x44] sm:$0xf]
        %v219 = vld [vmem:[%s189 + $0x48] sm:$0xf]
        %v220 = vld [vmem:[%s189 + $0x4c] sm:$0x1]
        %v221 = vld [vmem:[%s189 + $0x58] sm:$0xf]
        %v222 = vld [vmem:[%s189 + $0x5c] sm:$0xf]
        %v223 = vld [vmem:[%s189 + $0x60] sm:$0x1]
        %v224 = vld [vmem:[%s189 + $0x6c] sm:$0xf]
        %v225 = vld [vmem:[%s189 + $0x70] sm:$0xf]
        %v226 = vld [vmem:[%s189 + $0x74] sm:$0x1]
        %v227 = vld [vmem:[%s189 + $0x80] sm:$0xf]
        %v228 = vld [vmem:[%s189 + $0x84] sm:$0xf]
        %v229 = vld [vmem:[%s189 + $0x88] sm:$0x1]
        %v230 = vld [vmem:[%s189 + $0x94] sm:$0xf]
        %v231 = vld [vmem:[%s189 + $0x98] sm:$0xf]
        %v232 = vld [vmem:[%s189 + $0x9c] sm:$0x1]
        %v233 = vld [vmem:[%s189 + $0xa8] sm:$0xf]
        %v234 = vld [vmem:[%s189 + $0xac] sm:$0xf]
        %v235 = vld [vmem:[%s189 + $0xb0] sm:$0x1]
        %vm236 = vsmask.f32 3328
        %vm237 = vsmask.f32 7440
        %vm238 = vmor %vm236, %vm237
        %v240 = vshrl.u32 %v209, 16
        %v242 = vrot.slane %v240, 4
        %v243 = vshll.u32 %v209, 16
        %v245 = vrot.slane %v243, 5
        %v246 = vor.u32 %v242, %v245
        %v247 = vrot.slane %v246, 4
        %v249 = vshll.u32 %v210, 16
        %v251 = vrot.slane %v249, 5
        %v252 = vsel %vm238, %v247, %v251
        %v253 = vshrl.u32 %v210, 16
        %v255 = vrot.slane %v253, 4
        %v256 = vor.u32 %v255, %v251
        %v257 = vrot.slane %v256, 4
        %v259 = vshll.u32 %v211, 16
        %v261 = vrot.slane %v259, 5
        %v262 = vsel %vm238, %v257, %v261
        %v264 = vshrl.u32 %v212, 16
        %v266 = vrot.slane %v264, 4
        %v267 = vshll.u32 %v212, 16
        %v269 = vrot.slane %v267, 5
        %v270 = vor.u32 %v266, %v269
        %v271 = vrot.slane %v270, 4
        %v273 = vshll.u32 %v213, 16
        %v275 = vrot.slane %v273, 5
        %v276 = vsel %vm238, %v271, %v275
        %v277 = vshrl.u32 %v213, 16
        %v279 = vrot.slane %v277, 4
        %v280 = vor.u32 %v279, %v275
        %v281 = vrot.slane %v280, 4
        %v283 = vshll.u32 %v214, 16
        %v285 = vrot.slane %v283, 5
        %v286 = vsel %vm238, %v281, %v285
        %v288 = vshrl.u32 %v215, 16
        %v290 = vrot.slane %v288, 4
        %v291 = vshll.u32 %v215, 16
        %v293 = vrot.slane %v291, 5
        %v294 = vor.u32 %v290, %v293
        %v295 = vrot.slane %v294, 4
        %v297 = vshll.u32 %v216, 16
        %v299 = vrot.slane %v297, 5
        %v300 = vsel %vm238, %v295, %v299
        %v301 = vshrl.u32 %v216, 16
        %v303 = vrot.slane %v301, 4
        %v304 = vor.u32 %v303, %v299
        %v305 = vrot.slane %v304, 4
        %v307 = vshll.u32 %v217, 16
        %v309 = vrot.slane %v307, 5
        %v310 = vsel %vm238, %v305, %v309
        %v312 = vshrl.u32 %v218, 16
        %v314 = vrot.slane %v312, 4
        %v315 = vshll.u32 %v218, 16
        %v317 = vrot.slane %v315, 5
        %v318 = vor.u32 %v314, %v317
        %v319 = vrot.slane %v318, 4
        %v321 = vshll.u32 %v219, 16
        %v323 = vrot.slane %v321, 5
        %v324 = vsel %vm238, %v319, %v323
        %v325 = vshrl.u32 %v219, 16
        %v327 = vrot.slane %v325, 4
        %v328 = vor.u32 %v327, %v323
        %v329 = vrot.slane %v328, 4
        %v331 = vshll.u32 %v220, 16
        %v333 = vrot.slane %v331, 5
        %v334 = vsel %vm238, %v329, %v333
        %v336 = vshrl.u32 %v221, 16
        %v338 = vrot.slane %v336, 4
        %v339 = vshll.u32 %v221, 16
        %v341 = vrot.slane %v339, 5
        %v342 = vor.u32 %v338, %v341
        %v343 = vrot.slane %v342, 4
        %v345 = vshll.u32 %v222, 16
        %v347 = vrot.slane %v345, 5
        %v348 = vsel %vm238, %v343, %v347
        %v349 = vshrl.u32 %v222, 16
        %v351 = vrot.slane %v349, 4
        %v352 = vor.u32 %v351, %v347
        %v353 = vrot.slane %v352, 4
        %v355 = vshll.u32 %v223, 16
        %v357 = vrot.slane %v355, 5
        %v358 = vsel %vm238, %v353, %v357
        %v360 = vshrl.u32 %v224, 16
        %v362 = vrot.slane %v360, 4
        %v363 = vshll.u32 %v224, 16
        %v365 = vrot.slane %v363, 5
        %v366 = vor.u32 %v362, %v365
        %v367 = vrot.slane %v366, 4
        %v369 = vshll.u32 %v225, 16
        %v371 = vrot.slane %v369, 5
        %v372 = vsel %vm238, %v367, %v371
        %v373 = vshrl.u32 %v225, 16
        %v375 = vrot.slane %v373, 4
        %v376 = vor.u32 %v375, %v371
        %v377 = vrot.slane %v376, 4
        %v379 = vshll.u32 %v226, 16
        %v381 = vrot.slane %v379, 5
        %v382 = vsel %vm238, %v377, %v381
        %v384 = vshrl.u32 %v227, 16
        %v386 = vrot.slane %v384, 4
        %v387 = vshll.u32 %v227, 16
        %v389 = vrot.slane %v387, 5
        %v390 = vor.u32 %v386, %v389
        %v391 = vrot.slane %v390, 4
        %v393 = vshll.u32 %v228, 16
        %v395 = vrot.slane %v393, 5
        %v396 = vsel %vm238, %v391, %v395
        %v397 = vshrl.u32 %v228, 16
        %v399 = vrot.slane %v397, 4
        %v400 = vor.u32 %v399, %v395
        %v401 = vrot.slane %v400, 4
        %v403 = vshll.u32 %v229, 16
        %v405 = vrot.slane %v403, 5
        %v406 = vsel %vm238, %v401, %v405
        %v408 = vshrl.u32 %v230, 16
        %v410 = vrot.slane %v408, 4
        %v411 = vshll.u32 %v230, 16
        %v413 = vrot.slane %v411, 5
        %v414 = vor.u32 %v410, %v413
        %v415 = vrot.slane %v414, 4
        %v417 = vshll.u32 %v231, 16
        %v419 = vrot.slane %v417, 5
        %v420 = vsel %vm238, %v415, %v419
        %v421 = vshrl.u32 %v231, 16
        %v423 = vrot.slane %v421, 4
        %v424 = vor.u32 %v423, %v419
        %v425 = vrot.slane %v424, 4
        %v427 = vshll.u32 %v232, 16
        %v429 = vrot.slane %v427, 5
        %v430 = vsel %vm238, %v425, %v429
        %v432 = vshrl.u32 %v233, 16
        %v434 = vrot.slane %v432, 4
        %v435 = vshll.u32 %v233, 16
        %v437 = vrot.slane %v435, 5
        %v438 = vor.u32 %v434, %v437
        %v439 = vrot.slane %v438, 4
        %v441 = vshll.u32 %v234, 16
        %v443 = vrot.slane %v441, 5
        %v444 = vsel %vm238, %v439, %v443
        %v445 = vshrl.u32 %v234, 16
        %v447 = vrot.slane %v445, 4
        %v448 = vor.u32 %v447, %v443
        %v449 = vrot.slane %v448, 4
        %v451 = vshll.u32 %v235, 16
        %v453 = vrot.slane %v451, 5
        %v454 = vsel %vm238, %v449, %v453
        %s455 = scalar_lea.vmem %s1, 2
        %v456 = vld [vmem:[%s455] sm:$0x3]
        %v457 = vunpack.c.l.b16 %v252
        %v458 = vunpack.c.l.b16 %v262
        %v459 = vunpack.c.l.b16 %v276
        %v460 = vunpack.c.l.b16 %v286
        %v461 = vunpack.c.l.b16 %v300
        %v462 = vunpack.c.l.b16 %v310
        %v463 = vunpack.c.l.b16 %v324
        %v464 = vunpack.c.l.b16 %v334
        %v465 = vunpack.c.l.b16 %v348
        %v466 = vunpack.c.l.b16 %v358
        %v467 = vunpack.c.l.b16 %v372
        %v468 = vunpack.c.l.b16 %v382
        %v469 = vunpack.c.l.b16 %v396
        %v470 = vunpack.c.l.b16 %v406
        %v471 = vunpack.c.l.b16 %v420
        %v472 = vunpack.c.l.b16 %v430
        %v473 = vunpack.c.l.b16 %v444
        %v474 = vunpack.c.l.b16 %v454
        %v475 = vpack.c.b16 %v458, %v457
        %v476 = vpack.c.b16 %v460, %v459
        %v477 = vpack.c.b16 %v462, %v461
        %v478 = vpack.c.b16 %v464, %v463
        %v479 = vpack.c.b16 %v466, %v465
        %v480 = vpack.c.b16 %v468, %v467
        %v481 = vpack.c.b16 %v470, %v469
        %v482 = vpack.c.b16 %v472, %v471
        %v483 = vpack.c.b16 %v474, %v473
        %vm484 = vcmask 31744
        %v486 = vsel %vm484, %v475, 0
        %v489 = vsel %vm484, %v476, 0
        %v492 = vsel %vm484, %v477, 0
        %v495 = vsel %vm484, %v478, 0
        %v498 = vsel %vm484, %v479, 0
        %v501 = vsel %vm484, %v480, 0
        %v504 = vsel %vm484, %v481, 0
        %v507 = vsel %vm484, %v482, 0
        %v510 = vsel %vm484, %v483, 0
        %vm512 = vcmask 1041408
        %v514 = vsel %vm512, %v456, 0
        %516 = vmatprep.subr.bf16.mxu0 0
        %517 = vmatpush1.bf16.msra.mxu0 0
        %518 = vmatprep.subr.bf16.mxu0 0
        %519 = vmatpush1.bf16.msra.mxu0 0
        %520 = vmatprep.subr.bf16.mxu0 0
        %521 = vmatpush1.bf16.msra.mxu0 0
        %522 = vmatprep.subr.bf16.mxu0 0
        %523 = vmatpush1.bf16.msra.mxu0 0
        %524 = vmatprep.subr.bf16.mxu0 0
        %525 = vmatpush1.bf16.msra.mxu0 0
        %526 = vmatprep.subr.bf16.mxu0 0
        %527 = vmatpush1.bf16.msra.mxu0 0
        %528 = vmatprep.subr.bf16.mxu0 0
        %529 = vmatpush1.bf16.msra.mxu0 0
        %530 = vmatprep.subr.bf16.mxu0 0
        %531 = vmatpush1.bf16.msra.mxu0 %v514
        %532 = vmatprep.subr.bf16.mxu0 0
        %533 = vmatpush2.bf16.msra.mxu0 0
        %534 = vmatprep.subr.bf16.mxu0 0
        %535 = vmatpush2.bf16.msra.mxu0 0
        %536 = vmatprep.subr.bf16.mxu0 0
        %537 = vmatpush2.bf16.msra.mxu0 0
        %538 = vmatprep.subr.bf16.mxu0 0
        %539 = vmatpush2.bf16.msra.mxu0 0
        %540 = vmatprep.subr.bf16.mxu0 0
        %541 = vmatpush2.bf16.msra.mxu0 0
        %542 = vmatprep.subr.bf16.mxu0 0
        %543 = vmatpush2.bf16.msra.mxu0 0
        %544 = vmatprep.subr.bf16.mxu0 0
        %545 = vmatpush2.bf16.msra.mxu0 0
        %546 = vmatprep.subr.bf16.mxu0 0
        %547 = vmatpush2.bf16.msra.mxu0 0
        %548 = vmatprep.mubr.bf16.mxu0 0
        %549 = vmatmul.mubr.bf16.gmra.mxu0 %v486
        %v550 = vpop.f32.mrf.mxu0
        %v551 = vadd.f32 0.0, %v550
        %v552 = vpop.f32.mrf.mxu0
        %v553 = vpop.f32.mrf.mxu0
        %v554 = vadd.f32 0.0, %v553
        %v555 = vpop.f32.mrf.mxu0
        %556 = vmatprep.mubr.bf16.mxu0 0
        %557 = vmatmul.mubr.bf16.gmra.mxu0 %v489
        %v558 = vpop.f32.mrf.mxu0
        %v559 = vadd.f32 0.0, %v558
        %v560 = vpop.f32.mrf.mxu0
        %v561 = vpop.f32.mrf.mxu0
        %v562 = vadd.f32 0.0, %v561
        %v563 = vpop.f32.mrf.mxu0
        %564 = vmatprep.mubr.bf16.mxu0 0
        %565 = vmatmul.mubr.bf16.gmra.mxu0 %v492
        %v566 = vpop.f32.mrf.mxu0
        %v567 = vadd.f32 0.0, %v566
        %v568 = vpop.f32.mrf.mxu0
        %v569 = vpop.f32.mrf.mxu0
        %v570 = vadd.f32 0.0, %v569
        %v571 = vpop.f32.mrf.mxu0
        %572 = vmatprep.mubr.bf16.mxu0 0
        %573 = vmatmul.mubr.bf16.gmra.mxu0 %v495
        %v574 = vpop.f32.mrf.mxu0
        %v575 = vadd.f32 0.0, %v574
        %v576 = vpop.f32.mrf.mxu0
        %v577 = vpop.f32.mrf.mxu0
        %v578 = vadd.f32 0.0, %v577
        %v579 = vpop.f32.mrf.mxu0
        %580 = vmatprep.mubr.bf16.mxu0 0
        %581 = vmatmul.mubr.bf16.gmra.mxu0 %v498
        %v582 = vpop.f32.mrf.mxu0
        %v583 = vadd.f32 0.0, %v582
        %v584 = vpop.f32.mrf.mxu0
        %v585 = vpop.f32.mrf.mxu0
        %v586 = vadd.f32 0.0, %v585
        %v587 = vpop.f32.mrf.mxu0
        %588 = vmatprep.mubr.bf16.mxu0 0
        %589 = vmatmul.mubr.bf16.gmra.mxu0 %v501
        %v590 = vpop.f32.mrf.mxu0
        %v591 = vadd.f32 0.0, %v590
        %v592 = vpop.f32.mrf.mxu0
        %v593 = vpop.f32.mrf.mxu0
        %v594 = vadd.f32 0.0, %v593
        %v595 = vpop.f32.mrf.mxu0
        %596 = vmatprep.mubr.bf16.mxu0 0
        %597 = vmatmul.mubr.bf16.gmra.mxu0 %v504
        %v598 = vpop.f32.mrf.mxu0
        %v599 = vadd.f32 0.0, %v598
        %v600 = vpop.f32.mrf.mxu0
        %v601 = vpop.f32.mrf.mxu0
        %v602 = vadd.f32 0.0, %v601
        %v603 = vpop.f32.mrf.mxu0
        %604 = vmatprep.mubr.bf16.mxu0 0
        %605 = vmatmul.mubr.bf16.gmra.mxu0 %v507
        %v606 = vpop.f32.mrf.mxu0
        %v607 = vadd.f32 0.0, %v606
        %v608 = vpop.f32.mrf.mxu0
        %v609 = vpop.f32.mrf.mxu0
        %v610 = vadd.f32 0.0, %v609
        %v611 = vpop.f32.mrf.mxu0
        %612 = vmatprep.mubr.bf16.mxu0 0
        %613 = vmatmul.mubr.bf16.gmra.mxu0 %v510
        %v614 = vpop.f32.mrf.mxu0
        %v615 = vadd.f32 0.0, %v614
        %v616 = vpop.f32.mrf.mxu0
        %v617 = vpop.f32.mrf.mxu0
        %v618 = vadd.f32 0.0, %v617
        %v619 = vpop.f32.mrf.mxu0
        %620 = vdwg.mxu0
        %v639 = vunpack.c.l.b16 %v190
        %v640 = vunpack.c.l.b16 %v191
        %v641 = vunpack.c.l.b16 %v192
        %v642 = vunpack.c.l.b16 %v193
        %v643 = vunpack.c.l.b16 %v194
        %v644 = vunpack.c.l.b16 %v195
        %v645 = vunpack.c.l.b16 %v196
        %v646 = vunpack.c.l.b16 %v197
        %v647 = vunpack.c.l.b16 %v198
        %v648 = vunpack.c.l.b16 %v199
        %v649 = vunpack.c.l.b16 %v200
        %v650 = vunpack.c.l.b16 %v201
        %v651 = vunpack.c.l.b16 %v202
        %v652 = vunpack.c.l.b16 %v203
        %v653 = vunpack.c.l.b16 %v204
        %v654 = vunpack.c.l.b16 %v205
        %v655 = vunpack.c.l.b16 %v206
        %v656 = vunpack.c.l.b16 %v207
        %v657 = vpack.c.b16 %v640, %v639
        %v658 = vpack.c.b16 %v642, %v641
        %v659 = vpack.c.b16 %v644, %v643
        %v660 = vpack.c.b16 %v646, %v645
        %v661 = vpack.c.b16 %v648, %v647
        %v662 = vpack.c.b16 %v650, %v649
        %v663 = vpack.c.b16 %v652, %v651
        %v664 = vpack.c.b16 %v654, %v653
        %v665 = vpack.c.b16 %v656, %v655
        %v667 = vsel %vm484, %v657, 0
        %v670 = vsel %vm484, %v658, 0
        %v673 = vsel %vm484, %v659, 0
        %v676 = vsel %vm484, %v660, 0
        %v679 = vsel %vm484, %v661, 0
        %v682 = vsel %vm484, %v662, 0
        %v685 = vsel %vm484, %v663, 0
        %v688 = vsel %vm484, %v664, 0
        %v691 = vsel %vm484, %v665, 0
        %v694 = vsel %vm512, %v208, 0
        %696 = vmatprep.subr.bf16.mxu0 0
        %697 = vmatpush1.bf16.msra.mxu0 0
        %698 = vmatprep.subr.bf16.mxu0 0
        %699 = vmatpush1.bf16.msra.mxu0 0
        %700 = vmatprep.subr.bf16.mxu0 0
        %701 = vmatpush1.bf16.msra.mxu0 0
        %702 = vmatprep.subr.bf16.mxu0 0
        %703 = vmatpush1.bf16.msra.mxu0 0
        %704 = vmatprep.subr.bf16.mxu0 0
        %705 = vmatpush1.bf16.msra.mxu0 0
        %706 = vmatprep.subr.bf16.mxu0 0
        %707 = vmatpush1.bf16.msra.mxu0 0
        %708 = vmatprep.subr.bf16.mxu0 0
        %709 = vmatpush1.bf16.msra.mxu0 0
        %710 = vmatprep.subr.bf16.mxu0 0
        %711 = vmatpush1.bf16.msra.mxu0 %v694
        %712 = vmatprep.subr.bf16.mxu0 0
        %713 = vmatpush2.bf16.msra.mxu0 0
        %714 = vmatprep.subr.bf16.mxu0 0
        %715 = vmatpush2.bf16.msra.mxu0 0
        %716 = vmatprep.subr.bf16.mxu0 0
        %717 = vmatpush2.bf16.msra.mxu0 0
        %718 = vmatprep.subr.bf16.mxu0 0
        %719 = vmatpush2.bf16.msra.mxu0 0
        %720 = vmatprep.subr.bf16.mxu0 0
        %721 = vmatpush2.bf16.msra.mxu0 0
        %722 = vmatprep.subr.bf16.mxu0 0
        %723 = vmatpush2.bf16.msra.mxu0 0
        %724 = vmatprep.subr.bf16.mxu0 0
        %725 = vmatpush2.bf16.msra.mxu0 0
        %726 = vmatprep.subr.bf16.mxu0 0
        %727 = vmatpush2.bf16.msra.mxu0 0
        %728 = vmatprep.mubr.bf16.mxu0 0
        %729 = vmatmul.mubr.bf16.gmra.mxu0 %v667
        %v730 = vpop.f32.mrf.mxu0
        %v731 = vadd.f32 %v551, %v730
        %v732 = vpop.f32.mrf.mxu0
        %v733 = vpop.f32.mrf.mxu0
        %v734 = vadd.f32 %v554, %v733
        %v735 = vpop.f32.mrf.mxu0
        %736 = vmatprep.mubr.bf16.mxu0 0
        %737 = vmatmul.mubr.bf16.gmra.mxu0 %v670
        %v738 = vpop.f32.mrf.mxu0
        %v739 = vadd.f32 %v559, %v738
        %v740 = vpop.f32.mrf.mxu0
        %v741 = vpop.f32.mrf.mxu0
        %v742 = vadd.f32 %v562, %v741
        %v743 = vpop.f32.mrf.mxu0
        %744 = vmatprep.mubr.bf16.mxu0 0
        %745 = vmatmul.mubr.bf16.gmra.mxu0 %v673
        %v746 = vpop.f32.mrf.mxu0
        %v747 = vadd.f32 %v567, %v746
        %v748 = vpop.f32.mrf.mxu0
        %v749 = vpop.f32.mrf.mxu0
        %v750 = vadd.f32 %v570, %v749
        %v751 = vpop.f32.mrf.mxu0
        %752 = vmatprep.mubr.bf16.mxu0 0
        %753 = vmatmul.mubr.bf16.gmra.mxu0 %v676
        %v754 = vpop.f32.mrf.mxu0
        %v755 = vadd.f32 %v575, %v754
        %v756 = vpop.f32.mrf.mxu0
        %v757 = vpop.f32.mrf.mxu0
        %v758 = vadd.f32 %v578, %v757
        %v759 = vpop.f32.mrf.mxu0
        %760 = vmatprep.mubr.bf16.mxu0 0
        %761 = vmatmul.mubr.bf16.gmra.mxu0 %v679
        %v762 = vpop.f32.mrf.mxu0
        %v763 = vadd.f32 %v583, %v762
        %v764 = vpop.f32.mrf.mxu0
        %v765 = vpop.f32.mrf.mxu0
        %v766 = vadd.f32 %v586, %v765
        %v767 = vpop.f32.mrf.mxu0
        %768 = vmatprep.mubr.bf16.mxu0 0
        %769 = vmatmul.mubr.bf16.gmra.mxu0 %v682
        %v770 = vpop.f32.mrf.mxu0
        %v771 = vadd.f32 %v591, %v770
        %v772 = vpop.f32.mrf.mxu0
        %v773 = vpop.f32.mrf.mxu0
        %v774 = vadd.f32 %v594, %v773
        %v775 = vpop.f32.mrf.mxu0
        %776 = vmatprep.mubr.bf16.mxu0 0
        %777 = vmatmul.mubr.bf16.gmra.mxu0 %v685
        %v778 = vpop.f32.mrf.mxu0
        %v779 = vadd.f32 %v599, %v778
        %v780 = vpop.f32.mrf.mxu0
        %v781 = vpop.f32.mrf.mxu0
        %v782 = vadd.f32 %v602, %v781
        %v783 = vpop.f32.mrf.mxu0
        %784 = vmatprep.mubr.bf16.mxu0 0
        %785 = vmatmul.mubr.bf16.gmra.mxu0 %v688
        %v786 = vpop.f32.mrf.mxu0
        %v787 = vadd.f32 %v607, %v786
        %v788 = vpop.f32.mrf.mxu0
        %v789 = vpop.f32.mrf.mxu0
        %v790 = vadd.f32 %v610, %v789
        %v791 = vpop.f32.mrf.mxu0
        %792 = vmatprep.mubr.bf16.mxu0 0
        %793 = vmatmul.mubr.bf16.gmra.mxu0 %v691
        %v794 = vpop.f32.mrf.mxu0
        %v795 = vadd.f32 %v615, %v794
        %v796 = vpop.f32.mrf.mxu0
        %v797 = vpop.f32.mrf.mxu0
        %v798 = vadd.f32 %v618, %v797
        %v799 = vpop.f32.mrf.mxu0
        %800 = vdwg.mxu0
        %v801 = vld [vmem:[%s189] sm:$0xf]
        %v802 = vld [vmem:[%s189 + $0x4] sm:$0xf]
        %v803 = vld [vmem:[%s189 + $0x8] sm:$0x1]
        %v804 = vld [vmem:[%s189 + $0x14] sm:$0xf]
        %v805 = vld [vmem:[%s189 + $0x18] sm:$0xf]
        %v806 = vld [vmem:[%s189 + $0x1c] sm:$0x1]
        %v807 = vld [vmem:[%s189 + $0x28] sm:$0xf]
        %v808 = vld [vmem:[%s189 + $0x2c] sm:$0xf]
        %v809 = vld [vmem:[%s189 + $0x30] sm:$0x1]
        %v810 = vld [vmem:[%s189 + $0x3c] sm:$0xf]
        %v811 = vld [vmem:[%s189 + $0x40] sm:$0xf]
        %v812 = vld [vmem:[%s189 + $0x44] sm:$0x1]
        %v813 = vld [vmem:[%s189 + $0x50] sm:$0xf]
        %v814 = vld [vmem:[%s189 + $0x54] sm:$0xf]
        %v815 = vld [vmem:[%s189 + $0x58] sm:$0x1]
        %v816 = vld [vmem:[%s189 + $0x64] sm:$0xf]
        %v817 = vld [vmem:[%s189 + $0x68] sm:$0xf]
        %v818 = vld [vmem:[%s189 + $0x6c] sm:$0x1]
        %v819 = vld [vmem:[%s189 + $0x78] sm:$0xf]
        %v820 = vld [vmem:[%s189 + $0x7c] sm:$0xf]
        %v821 = vld [vmem:[%s189 + $0x80] sm:$0x1]
        %v822 = vld [vmem:[%s189 + $0x8c] sm:$0xf]
        %v823 = vld [vmem:[%s189 + $0x90] sm:$0xf]
        %v824 = vld [vmem:[%s189 + $0x94] sm:$0x1]
        %v825 = vld [vmem:[%s189 + $0xa0] sm:$0xf]
        %v826 = vld [vmem:[%s189 + $0xa4] sm:$0xf]
        %v827 = vld [vmem:[%s189 + $0xa8] sm:$0x1]
        %v829 = vshrl.u32 %v801, 16
        %v831 = vrot.slane %v829, 4
        %v832 = vshll.u32 %v801, 16
        %v834 = vrot.slane %v832, 5
        %v835 = vor.u32 %v831, %v834
        %v836 = vrot.slane %v835, 4
        %v838 = vshll.u32 %v802, 16
        %v840 = vrot.slane %v838, 5
        %v841 = vsel %vm238, %v836, %v840
        %v842 = vshrl.u32 %v802, 16
        %v844 = vrot.slane %v842, 4
        %v845 = vor.u32 %v844, %v840
        %v846 = vrot.slane %v845, 4
        %v848 = vshll.u32 %v803, 16
        %v850 = vrot.slane %v848, 5
        %v851 = vsel %vm238, %v846, %v850
        %v853 = vshrl.u32 %v804, 16
        %v855 = vrot.slane %v853, 4
        %v856 = vshll.u32 %v804, 16
        %v858 = vrot.slane %v856, 5
        %v859 = vor.u32 %v855, %v858
        %v860 = vrot.slane %v859, 4
        %v862 = vshll.u32 %v805, 16
        %v864 = vrot.slane %v862, 5
        %v865 = vsel %vm238, %v860, %v864
        %v866 = vshrl.u32 %v805, 16
        %v868 = vrot.slane %v866, 4
        %v869 = vor.u32 %v868, %v864
        %v870 = vrot.slane %v869, 4
        %v872 = vshll.u32 %v806, 16
        %v874 = vrot.slane %v872, 5
        %v875 = vsel %vm238, %v870, %v874
        %v877 = vshrl.u32 %v807, 16
        %v879 = vrot.slane %v877, 4
        %v880 = vshll.u32 %v807, 16
        %v882 = vrot.slane %v880, 5
        %v883 = vor.u32 %v879, %v882
        %v884 = vrot.slane %v883, 4
        %v886 = vshll.u32 %v808, 16
        %v888 = vrot.slane %v886, 5
        %v889 = vsel %vm238, %v884, %v888
        %v890 = vshrl.u32 %v808, 16
        %v892 = vrot.slane %v890, 4
        %v893 = vor.u32 %v892, %v888
        %v894 = vrot.slane %v893, 4
        %v896 = vshll.u32 %v809, 16
        %v898 = vrot.slane %v896, 5
        %v899 = vsel %vm238, %v894, %v898
        %v901 = vshrl.u32 %v810, 16
        %v903 = vrot.slane %v901, 4
        %v904 = vshll.u32 %v810, 16
        %v906 = vrot.slane %v904, 5
        %v907 = vor.u32 %v903, %v906
        %v908 = vrot.slane %v907, 4
        %v910 = vshll.u32 %v811, 16
        %v912 = vrot.slane %v910, 5
        %v913 = vsel %vm238, %v908, %v912
        %v914 = vshrl.u32 %v811, 16
        %v916 = vrot.slane %v914, 4
        %v917 = vor.u32 %v916, %v912
        %v918 = vrot.slane %v917, 4
        %v920 = vshll.u32 %v812, 16
        %v922 = vrot.slane %v920, 5
        %v923 = vsel %vm238, %v918, %v922
        %v925 = vshrl.u32 %v813, 16
        %v927 = vrot.slane %v925, 4
        %v928 = vshll.u32 %v813, 16
        %v930 = vrot.slane %v928, 5
        %v931 = vor.u32 %v927, %v930
        %v932 = vrot.slane %v931, 4
        %v934 = vshll.u32 %v814, 16
        %v936 = vrot.slane %v934, 5
        %v937 = vsel %vm238, %v932, %v936
        %v938 = vshrl.u32 %v814, 16
        %v940 = vrot.slane %v938, 4
        %v941 = vor.u32 %v940, %v936
        %v942 = vrot.slane %v941, 4
        %v944 = vshll.u32 %v815, 16
        %v946 = vrot.slane %v944, 5
        %v947 = vsel %vm238, %v942, %v946
        %v949 = vshrl.u32 %v816, 16
        %v951 = vrot.slane %v949, 4
        %v952 = vshll.u32 %v816, 16
        %v954 = vrot.slane %v952, 5
        %v955 = vor.u32 %v951, %v954
        %v956 = vrot.slane %v955, 4
        %v958 = vshll.u32 %v817, 16
        %v960 = vrot.slane %v958, 5
        %v961 = vsel %vm238, %v956, %v960
        %v962 = vshrl.u32 %v817, 16
        %v964 = vrot.slane %v962, 4
        %v965 = vor.u32 %v964, %v960
        %v966 = vrot.slane %v965, 4
        %v968 = vshll.u32 %v818, 16
        %v970 = vrot.slane %v968, 5
        %v971 = vsel %vm238, %v966, %v970
        %v973 = vshrl.u32 %v819, 16
        %v975 = vrot.slane %v973, 4
        %v976 = vshll.u32 %v819, 16
        %v978 = vrot.slane %v976, 5
        %v979 = vor.u32 %v975, %v978
        %v980 = vrot.slane %v979, 4
        %v982 = vshll.u32 %v820, 16
        %v984 = vrot.slane %v982, 5
        %v985 = vsel %vm238, %v980, %v984
        %v986 = vshrl.u32 %v820, 16
        %v988 = vrot.slane %v986, 4
        %v989 = vor.u32 %v988, %v984
        %v990 = vrot.slane %v989, 4
        %v992 = vshll.u32 %v821, 16
        %v994 = vrot.slane %v992, 5
        %v995 = vsel %vm238, %v990, %v994
        %v997 = vshrl.u32 %v822, 16
        %v999 = vrot.slane %v997, 4
        %v1000 = vshll.u32 %v822, 16
        %v1002 = vrot.slane %v1000, 5
        %v1003 = vor.u32 %v999, %v1002
        %v1004 = vrot.slane %v1003, 4
        %v1006 = vshll.u32 %v823, 16
        %v1008 = vrot.slane %v1006, 5
        %v1009 = vsel %vm238, %v1004, %v1008
        %v1010 = vshrl.u32 %v823, 16
        %v1012 = vrot.slane %v1010, 4
        %v1013 = vor.u32 %v1012, %v1008
        %v1014 = vrot.slane %v1013, 4
        %v1016 = vshll.u32 %v824, 16
        %v1018 = vrot.slane %v1016, 5
        %v1019 = vsel %vm238, %v1014, %v1018
        %v1021 = vshrl.u32 %v825, 16
        %v1023 = vrot.slane %v1021, 4
        %v1024 = vshll.u32 %v825, 16
        %v1026 = vrot.slane %v1024, 5
        %v1027 = vor.u32 %v1023, %v1026
        %v1028 = vrot.slane %v1027, 4
        %v1030 = vshll.u32 %v826, 16
        %v1032 = vrot.slane %v1030, 5
        %v1033 = vsel %vm238, %v1028, %v1032
        %v1034 = vshrl.u32 %v826, 16
        %v1036 = vrot.slane %v1034, 4
        %v1037 = vor.u32 %v1036, %v1032
        %v1038 = vrot.slane %v1037, 4
        %v1040 = vshll.u32 %v827, 16
        %v1042 = vrot.slane %v1040, 5
        %v1043 = vsel %vm238, %v1038, %v1042
        %s1044 = scalar_lea.vmem %s1, 4
        %v1045 = vld [vmem:[%s1044] sm:$0x3]
        %v1046 = vunpack.c.l.b16 %v841
        %v1047 = vunpack.c.l.b16 %v851
        %v1048 = vunpack.c.l.b16 %v865
        %v1049 = vunpack.c.l.b16 %v875
        %v1050 = vunpack.c.l.b16 %v889
        %v1051 = vunpack.c.l.b16 %v899
        %v1052 = vunpack.c.l.b16 %v913
        %v1053 = vunpack.c.l.b16 %v923
        %v1054 = vunpack.c.l.b16 %v937
        %v1055 = vunpack.c.l.b16 %v947
        %v1056 = vunpack.c.l.b16 %v961
        %v1057 = vunpack.c.l.b16 %v971
        %v1058 = vunpack.c.l.b16 %v985
        %v1059 = vunpack.c.l.b16 %v995
        %v1060 = vunpack.c.l.b16 %v1009
        %v1061 = vunpack.c.l.b16 %v1019
        %v1062 = vunpack.c.l.b16 %v1033
        %v1063 = vunpack.c.l.b16 %v1043
        %v1064 = vpack.c.b16 %v1047, %v1046
        %v1065 = vpack.c.b16 %v1049, %v1048
        %v1066 = vpack.c.b16 %v1051, %v1050
        %v1067 = vpack.c.b16 %v1053, %v1052
        %v1068 = vpack.c.b16 %v1055, %v1054
        %v1069 = vpack.c.b16 %v1057, %v1056
        %v1070 = vpack.c.b16 %v1059, %v1058
        %v1071 = vpack.c.b16 %v1061, %v1060
        %v1072 = vpack.c.b16 %v1063, %v1062
        %v1074 = vsel %vm484, %v1064, 0
        %v1077 = vsel %vm484, %v1065, 0
        %v1080 = vsel %vm484, %v1066, 0
        %v1083 = vsel %vm484, %v1067, 0
        %v1086 = vsel %vm484, %v1068, 0
        %v1089 = vsel %vm484, %v1069, 0
        %v1092 = vsel %vm484, %v1070, 0
        %v1095 = vsel %vm484, %v1071, 0
        %v1098 = vsel %vm484, %v1072, 0
        %v1101 = vsel %vm512, %v1045, 0
        %1103 = vmatprep.subr.bf16.mxu0 0
        %1104 = vmatpush1.bf16.msra.mxu0 0
        %1105 = vmatprep.subr.bf16.mxu0 0
        %1106 = vmatpush1.bf16.msra.mxu0 0
        %1107 = vmatprep.subr.bf16.mxu0 0
        %1108 = vmatpush1.bf16.msra.mxu0 0
        %1109 = vmatprep.subr.bf16.mxu0 0
        %1110 = vmatpush1.bf16.msra.mxu0 0
        %1111 = vmatprep.subr.bf16.mxu0 0
        %1112 = vmatpush1.bf16.msra.mxu0 0
        %1113 = vmatprep.subr.bf16.mxu0 0
        %1114 = vmatpush1.bf16.msra.mxu0 0
        %1115 = vmatprep.subr.bf16.mxu0 0
        %1116 = vmatpush1.bf16.msra.mxu0 0
        %1117 = vmatprep.subr.bf16.mxu0 0
        %1118 = vmatpush1.bf16.msra.mxu0 %v1101
        %1119 = vmatprep.subr.bf16.mxu0 0
        %1120 = vmatpush2.bf16.msra.mxu0 0
        %1121 = vmatprep.subr.bf16.mxu0 0
        %1122 = vmatpush2.bf16.msra.mxu0 0
        %1123 = vmatprep.subr.bf16.mxu0 0
        %1124 = vmatpush2.bf16.msra.mxu0 0
        %1125 = vmatprep.subr.bf16.mxu0 0
        %1126 = vmatpush2.bf16.msra.mxu0 0
        %1127 = vmatprep.subr.bf16.mxu0 0
        %1128 = vmatpush2.bf16.msra.mxu0 0
        %1129 = vmatprep.subr.bf16.mxu0 0
        %1130 = vmatpush2.bf16.msra.mxu0 0
        %1131 = vmatprep.subr.bf16.mxu0 0
        %1132 = vmatpush2.bf16.msra.mxu0 0
        %1133 = vmatprep.subr.bf16.mxu0 0
        %1134 = vmatpush2.bf16.msra.mxu0 0
        %1135 = vmatprep.mubr.bf16.mxu0 0
        %1136 = vmatmul.mubr.bf16.gmra.mxu0 %v1074
        %v1137 = vpop.f32.mrf.mxu0
        %v1138 = vadd.f32 0.0, %v1137
        %v1139 = vpop.f32.mrf.mxu0
        %v1140 = vpop.f32.mrf.mxu0
        %v1141 = vadd.f32 0.0, %v1140
        %v1142 = vpop.f32.mrf.mxu0
        %1143 = vmatprep.mubr.bf16.mxu0 0
        %1144 = vmatmul.mubr.bf16.gmra.mxu0 %v1077
        %v1145 = vpop.f32.mrf.mxu0
        %v1146 = vadd.f32 0.0, %v1145
        %v1147 = vpop.f32.mrf.mxu0
        %v1148 = vpop.f32.mrf.mxu0
        %v1149 = vadd.f32 0.0, %v1148
        %v1150 = vpop.f32.mrf.mxu0
        %1151 = vmatprep.mubr.bf16.mxu0 0
        %1152 = vmatmul.mubr.bf16.gmra.mxu0 %v1080
        %v1153 = vpop.f32.mrf.mxu0
        %v1154 = vadd.f32 0.0, %v1153
        %v1155 = vpop.f32.mrf.mxu0
        %v1156 = vpop.f32.mrf.mxu0
        %v1157 = vadd.f32 0.0, %v1156
        %v1158 = vpop.f32.mrf.mxu0
        %1159 = vmatprep.mubr.bf16.mxu0 0
        %1160 = vmatmul.mubr.bf16.gmra.mxu0 %v1083
        %v1161 = vpop.f32.mrf.mxu0
        %v1162 = vadd.f32 0.0, %v1161
        %v1163 = vpop.f32.mrf.mxu0
        %v1164 = vpop.f32.mrf.mxu0
        %v1165 = vadd.f32 0.0, %v1164
        %v1166 = vpop.f32.mrf.mxu0
        %1167 = vmatprep.mubr.bf16.mxu0 0
        %1168 = vmatmul.mubr.bf16.gmra.mxu0 %v1086
        %v1169 = vpop.f32.mrf.mxu0
        %v1170 = vadd.f32 0.0, %v1169
        %v1171 = vpop.f32.mrf.mxu0
        %v1172 = vpop.f32.mrf.mxu0
        %v1173 = vadd.f32 0.0, %v1172
        %v1174 = vpop.f32.mrf.mxu0
        %1175 = vmatprep.mubr.bf16.mxu0 0
        %1176 = vmatmul.mubr.bf16.gmra.mxu0 %v1089
        %v1177 = vpop.f32.mrf.mxu0
        %v1178 = vadd.f32 0.0, %v1177
        %v1179 = vpop.f32.mrf.mxu0
        %v1180 = vpop.f32.mrf.mxu0
        %v1181 = vadd.f32 0.0, %v1180
        %v1182 = vpop.f32.mrf.mxu0
        %1183 = vmatprep.mubr.bf16.mxu0 0
        %1184 = vmatmul.mubr.bf16.gmra.mxu0 %v1092
        %v1185 = vpop.f32.mrf.mxu0
        %v1186 = vadd.f32 0.0, %v1185
        %v1187 = vpop.f32.mrf.mxu0
        %v1188 = vpop.f32.mrf.mxu0
        %v1189 = vadd.f32 0.0, %v1188
        %v1190 = vpop.f32.mrf.mxu0
        %1191 = vmatprep.mubr.bf16.mxu0 0
        %1192 = vmatmul.mubr.bf16.gmra.mxu0 %v1095
        %v1193 = vpop.f32.mrf.mxu0
        %v1194 = vadd.f32 0.0, %v1193
        %v1195 = vpop.f32.mrf.mxu0
        %v1196 = vpop.f32.mrf.mxu0
        %v1197 = vadd.f32 0.0, %v1196
        %v1198 = vpop.f32.mrf.mxu0
        %1199 = vmatprep.mubr.bf16.mxu0 0
        %1200 = vmatmul.mubr.bf16.gmra.mxu0 %v1098
        %v1201 = vpop.f32.mrf.mxu0
        %v1202 = vadd.f32 0.0, %v1201
        %v1203 = vpop.f32.mrf.mxu0
        %v1204 = vpop.f32.mrf.mxu0
        %v1205 = vadd.f32 0.0, %v1204
        %v1206 = vpop.f32.mrf.mxu0
        %1207 = vdwg.mxu0
        %v1208 = vadd.f32 %v731, %v1138
        %v1209 = vadd.f32 %v734, %v1141
        %v1210 = vadd.f32 %v739, %v1146
        %v1211 = vadd.f32 %v742, %v1149
        %v1212 = vadd.f32 %v747, %v1154
        %v1213 = vadd.f32 %v750, %v1157
        %v1214 = vadd.f32 %v755, %v1162
        %v1215 = vadd.f32 %v758, %v1165
        %v1216 = vadd.f32 %v763, %v1170
        %v1217 = vadd.f32 %v766, %v1173
        %v1218 = vadd.f32 %v771, %v1178
        %v1219 = vadd.f32 %v774, %v1181
        %v1220 = vadd.f32 %v779, %v1186
        %v1221 = vadd.f32 %v782, %v1189
        %v1222 = vadd.f32 %v787, %v1194
        %v1223 = vadd.f32 %v790, %v1197
        %v1224 = vadd.f32 %v795, %v1202
        %v1225 = vadd.f32 %v798, %v1205
        %v1226 = vld [vmem:[%s189 + $0x8] sm:$0xe]
        %v1227 = vld [vmem:[%s189 + $0x1c] sm:$0xe]
        %v1228 = vld [vmem:[%s189 + $0x30] sm:$0xe]
        %v1229 = vld [vmem:[%s189 + $0x44] sm:$0xe]
        %v1230 = vld [vmem:[%s189 + $0x58] sm:$0xe]
        %v1231 = vld [vmem:[%s189 + $0x6c] sm:$0xe]
        %v1232 = vld [vmem:[%s189 + $0x80] sm:$0xe]
        %v1233 = vld [vmem:[%s189 + $0x94] sm:$0xe]
        %v1234 = vld [vmem:[%s189 + $0xa8] sm:$0xe]
        %vm1262 = vcmask 1042432
        %vm1263 = vcmask 1046532
        %vm1264 = vmor %vm1262, %vm1263
        %v1265 = vrot.slane %v1226, 5
        %v1266 = vrot.slane %v1265, 4
        %v1267 = vrot.slane %v210, 5
        %v1268 = vsel %vm1264, %v1266, %v1267
        %v1269 = vrot.slane %v1267, 4
        %v1270 = vrot.slane %v211, 5
        %v1271 = vsel %vm1264, %v1269, %v1270
        %v1272 = vrot.slane %v1227, 5
        %v1273 = vrot.slane %v1272, 4
        %v1274 = vrot.slane %v213, 5
        %v1275 = vsel %vm1264, %v1273, %v1274
        %v1276 = vrot.slane %v1274, 4
        %v1277 = vrot.slane %v214, 5
        %v1278 = vsel %vm1264, %v1276, %v1277
        %v1279 = vrot.slane %v1228, 5
        %v1280 = vrot.slane %v1279, 4
        %v1281 = vrot.slane %v216, 5
        %v1282 = vsel %vm1264, %v1280, %v1281
        %v1283 = vrot.slane %v1281, 4
        %v1284 = vrot.slane %v217, 5
        %v1285 = vsel %vm1264, %v1283, %v1284
        %v1286 = vrot.slane %v1229, 5
        %v1287 = vrot.slane %v1286, 4
        %v1288 = vrot.slane %v219, 5
        %v1289 = vsel %vm1264, %v1287, %v1288
        %v1290 = vrot.slane %v1288, 4
        %v1291 = vrot.slane %v220, 5
        %v1292 = vsel %vm1264, %v1290, %v1291
        %v1293 = vrot.slane %v1230, 5
        %v1294 = vrot.slane %v1293, 4
        %v1295 = vrot.slane %v222, 5
        %v1296 = vsel %vm1264, %v1294, %v1295
        %v1297 = vrot.slane %v1295, 4
        %v1298 = vrot.slane %v223, 5
        %v1299 = vsel %vm1264, %v1297, %v1298
        %v1300 = vrot.slane %v1231, 5
        %v1301 = vrot.slane %v1300, 4
        %v1302 = vrot.slane %v225, 5
        %v1303 = vsel %vm1264, %v1301, %v1302
        %v1304 = vrot.slane %v1302, 4
        %v1305 = vrot.slane %v226, 5
        %v1306 = vsel %vm1264, %v1304, %v1305
        %v1307 = vrot.slane %v1232, 5
        %v1308 = vrot.slane %v1307, 4
        %v1309 = vrot.slane %v228, 5
        %v1310 = vsel %vm1264, %v1308, %v1309
        %v1311 = vrot.slane %v1309, 4
        %v1312 = vrot.slane %v229, 5
        %v1313 = vsel %vm1264, %v1311, %v1312
        %v1314 = vrot.slane %v1233, 5
        %v1315 = vrot.slane %v1314, 4
        %v1316 = vrot.slane %v231, 5
        %v1317 = vsel %vm1264, %v1315, %v1316
        %v1318 = vrot.slane %v1316, 4
        %v1319 = vrot.slane %v232, 5
        %v1320 = vsel %vm1264, %v1318, %v1319
        %v1321 = vrot.slane %v1234, 5
        %v1322 = vrot.slane %v1321, 4
        %v1323 = vrot.slane %v234, 5
        %v1324 = vsel %vm1264, %v1322, %v1323
        %v1325 = vrot.slane %v1323, 4
        %v1326 = vrot.slane %v235, 5
        %v1327 = vsel %vm1264, %v1325, %v1326
        %s1328 = scalar_lea.vmem %s1, 6
        %v1329 = vld [vmem:[%s1328] sm:$0x3]
        %v1330 = vunpack.c.l.b16 %v1268
        %v1331 = vunpack.c.l.b16 %v1271
        %v1332 = vunpack.c.l.b16 %v1275
        %v1333 = vunpack.c.l.b16 %v1278
        %v1334 = vunpack.c.l.b16 %v1282
        %v1335 = vunpack.c.l.b16 %v1285
        %v1336 = vunpack.c.l.b16 %v1289
        %v1337 = vunpack.c.l.b16 %v1292
        %v1338 = vunpack.c.l.b16 %v1296
        %v1339 = vunpack.c.l.b16 %v1299
        %v1340 = vunpack.c.l.b16 %v1303
        %v1341 = vunpack.c.l.b16 %v1306
        %v1342 = vunpack.c.l.b16 %v1310
        %v1343 = vunpack.c.l.b16 %v1313
        %v1344 = vunpack.c.l.b16 %v1317
        %v1345 = vunpack.c.l.b16 %v1320
        %v1346 = vunpack.c.l.b16 %v1324
        %v1347 = vunpack.c.l.b16 %v1327
        %v1348 = vpack.c.b16 %v1331, %v1330
        %v1349 = vpack.c.b16 %v1333, %v1332
        %v1350 = vpack.c.b16 %v1335, %v1334
        %v1351 = vpack.c.b16 %v1337, %v1336
        %v1352 = vpack.c.b16 %v1339, %v1338
        %v1353 = vpack.c.b16 %v1341, %v1340
        %v1354 = vpack.c.b16 %v1343, %v1342
        %v1355 = vpack.c.b16 %v1345, %v1344
        %v1356 = vpack.c.b16 %v1347, %v1346
        %v1358 = vsel %vm484, %v1348, 0
        %v1361 = vsel %vm484, %v1349, 0
        %v1364 = vsel %vm484, %v1350, 0
        %v1367 = vsel %vm484, %v1351, 0
        %v1370 = vsel %vm484, %v1352, 0
        %v1373 = vsel %vm484, %v1353, 0
        %v1376 = vsel %vm484, %v1354, 0
        %v1379 = vsel %vm484, %v1355, 0
        %v1382 = vsel %vm484, %v1356, 0
        %v1385 = vsel %vm512, %v1329, 0
        %1387 = vmatprep.subr.bf16.mxu0 0
        %1388 = vmatpush1.bf16.msra.mxu0 0
        %1389 = vmatprep.subr.bf16.mxu0 0
        %1390 = vmatpush1.bf16.msra.mxu0 0
        %1391 = vmatprep.subr.bf16.mxu0 0
        %1392 = vmatpush1.bf16.msra.mxu0 0
        %1393 = vmatprep.subr.bf16.mxu0 0
        %1394 = vmatpush1.bf16.msra.mxu0 0
        %1395 = vmatprep.subr.bf16.mxu0 0
        %1396 = vmatpush1.bf16.msra.mxu0 0
        %1397 = vmatprep.subr.bf16.mxu0 0
        %1398 = vmatpush1.bf16.msra.mxu0 0
        %1399 = vmatprep.subr.bf16.mxu0 0
        %1400 = vmatpush1.bf16.msra.mxu0 0
        %1401 = vmatprep.subr.bf16.mxu0 0
        %1402 = vmatpush1.bf16.msra.mxu0 %v1385
        %1403 = vmatprep.subr.bf16.mxu0 0
        %1404 = vmatpush2.bf16.msra.mxu0 0
        %1405 = vmatprep.subr.bf16.mxu0 0
        %1406 = vmatpush2.bf16.msra.mxu0 0
        %1407 = vmatprep.subr.bf16.mxu0 0
        %1408 = vmatpush2.bf16.msra.mxu0 0
        %1409 = vmatprep.subr.bf16.mxu0 0
        %1410 = vmatpush2.bf16.msra.mxu0 0
        %1411 = vmatprep.subr.bf16.mxu0 0
        %1412 = vmatpush2.bf16.msra.mxu0 0
        %1413 = vmatprep.subr.bf16.mxu0 0
        %1414 = vmatpush2.bf16.msra.mxu0 0
        %1415 = vmatprep.subr.bf16.mxu0 0
        %1416 = vmatpush2.bf16.msra.mxu0 0
        %1417 = vmatprep.subr.bf16.mxu0 0
        %1418 = vmatpush2.bf16.msra.mxu0 0
        %1419 = vmatprep.mubr.bf16.mxu0 0
        %1420 = vmatmul.mubr.bf16.gmra.mxu0 %v1358
        %v1421 = vpop.f32.mrf.mxu0
        %v1422 = vadd.f32 0.0, %v1421
        %v1423 = vpop.f32.mrf.mxu0
        %v1424 = vpop.f32.mrf.mxu0
        %v1425 = vadd.f32 0.0, %v1424
        %v1426 = vpop.f32.mrf.mxu0
        %1427 = vmatprep.mubr.bf16.mxu0 0
        %1428 = vmatmul.mubr.bf16.gmra.mxu0 %v1361
        %v1429 = vpop.f32.mrf.mxu0
        %v1430 = vadd.f32 0.0, %v1429
        %v1431 = vpop.f32.mrf.mxu0
        %v1432 = vpop.f32.mrf.mxu0
        %v1433 = vadd.f32 0.0, %v1432
        %v1434 = vpop.f32.mrf.mxu0
        %1435 = vmatprep.mubr.bf16.mxu0 0
        %1436 = vmatmul.mubr.bf16.gmra.mxu0 %v1364
        %v1437 = vpop.f32.mrf.mxu0
        %v1438 = vadd.f32 0.0, %v1437
        %v1439 = vpop.f32.mrf.mxu0
        %v1440 = vpop.f32.mrf.mxu0
        %v1441 = vadd.f32 0.0, %v1440
        %v1442 = vpop.f32.mrf.mxu0
        %1443 = vmatprep.mubr.bf16.mxu0 0
        %1444 = vmatmul.mubr.bf16.gmra.mxu0 %v1367
        %v1445 = vpop.f32.mrf.mxu0
        %v1446 = vadd.f32 0.0, %v1445
        %v1447 = vpop.f32.mrf.mxu0
        %v1448 = vpop.f32.mrf.mxu0
        %v1449 = vadd.f32 0.0, %v1448
        %v1450 = vpop.f32.mrf.mxu0
        %1451 = vmatprep.mubr.bf16.mxu0 0
        %1452 = vmatmul.mubr.bf16.gmra.mxu0 %v1370
        %v1453 = vpop.f32.mrf.mxu0
        %v1454 = vadd.f32 0.0, %v1453
        %v1455 = vpop.f32.mrf.mxu0
        %v1456 = vpop.f32.mrf.mxu0
        %v1457 = vadd.f32 0.0, %v1456
        %v1458 = vpop.f32.mrf.mxu0
        %1459 = vmatprep.mubr.bf16.mxu0 0
        %1460 = vmatmul.mubr.bf16.gmra.mxu0 %v1373
        %v1461 = vpop.f32.mrf.mxu0
        %v1462 = vadd.f32 0.0, %v1461
        %v1463 = vpop.f32.mrf.mxu0
        %v1464 = vpop.f32.mrf.mxu0
        %v1465 = vadd.f32 0.0, %v1464
        %v1466 = vpop.f32.mrf.mxu0
        %1467 = vmatprep.mubr.bf16.mxu0 0
        %1468 = vmatmul.mubr.bf16.gmra.mxu0 %v1376
        %v1469 = vpop.f32.mrf.mxu0
        %v1470 = vadd.f32 0.0, %v1469
        %v1471 = vpop.f32.mrf.mxu0
        %v1472 = vpop.f32.mrf.mxu0
        %v1473 = vadd.f32 0.0, %v1472
        %v1474 = vpop.f32.mrf.mxu0
        %1475 = vmatprep.mubr.bf16.mxu0 0
        %1476 = vmatmul.mubr.bf16.gmra.mxu0 %v1379
        %v1477 = vpop.f32.mrf.mxu0
        %v1478 = vadd.f32 0.0, %v1477
        %v1479 = vpop.f32.mrf.mxu0
        %v1480 = vpop.f32.mrf.mxu0
        %v1481 = vadd.f32 0.0, %v1480
        %v1482 = vpop.f32.mrf.mxu0
        %1483 = vmatprep.mubr.bf16.mxu0 0
        %1484 = vmatmul.mubr.bf16.gmra.mxu0 %v1382
        %v1485 = vpop.f32.mrf.mxu0
        %v1486 = vadd.f32 0.0, %v1485
        %v1487 = vpop.f32.mrf.mxu0
        %v1488 = vpop.f32.mrf.mxu0
        %v1489 = vadd.f32 0.0, %v1488
        %v1490 = vpop.f32.mrf.mxu0
        %1491 = vdwg.mxu0
        %v1492 = vadd.f32 %v1208, %v1422
        %v1493 = vadd.f32 %v1209, %v1425
        %v1494 = vadd.f32 %v1210, %v1430
        %v1495 = vadd.f32 %v1211, %v1433
        %v1496 = vadd.f32 %v1212, %v1438
        %v1497 = vadd.f32 %v1213, %v1441
        %v1498 = vadd.f32 %v1214, %v1446
        %v1499 = vadd.f32 %v1215, %v1449
        %v1500 = vadd.f32 %v1216, %v1454
        %v1501 = vadd.f32 %v1217, %v1457
        %v1502 = vadd.f32 %v1218, %v1462
        %v1503 = vadd.f32 %v1219, %v1465
        %v1504 = vadd.f32 %v1220, %v1470
        %v1505 = vadd.f32 %v1221, %v1473
        %v1506 = vadd.f32 %v1222, %v1478
        %v1507 = vadd.f32 %v1223, %v1481
        %v1508 = vadd.f32 %v1224, %v1486
        %v1509 = vadd.f32 %v1225, %v1489
        %s1510 = sadd.s32 %s186, 10
        %s1511 = smul.u32 %s1510, 5
        %s1512 = smul.addr %s1511, 4
        %s1513 = scalar_lea.vmem %s182, %s1512
        %v1514 = vld [vmem:[%s1513] sm:$0xf]
        %v1515 = vld [vmem:[%s1513 + $0x4] sm:$0xf]
        %v1516 = vld [vmem:[%s1513 + $0x14] sm:$0xf]
        %v1517 = vld [vmem:[%s1513 + $0x18] sm:$0xf]
        %v1518 = vld [vmem:[%s1513 + $0x28] sm:$0xf]
        %v1519 = vld [vmem:[%s1513 + $0x2c] sm:$0xf]
        %v1520 = vld [vmem:[%s1513 + $0x3c] sm:$0xf]
        %v1521 = vld [vmem:[%s1513 + $0x40] sm:$0xf]
        %v1522 = vld [vmem:[%s1513 + $0x50] sm:$0xf]
        %v1523 = vld [vmem:[%s1513 + $0x54] sm:$0xf]
        %v1524 = vld [vmem:[%s1513 + $0x64] sm:$0xf]
        %v1525 = vld [vmem:[%s1513 + $0x68] sm:$0xf]
        %v1526 = vld [vmem:[%s1513 + $0x78] sm:$0xf]
        %v1527 = vld [vmem:[%s1513 + $0x7c] sm:$0xf]
        %v1528 = vld [vmem:[%s1513 + $0x8c] sm:$0xf]
        %v1529 = vld [vmem:[%s1513 + $0x90] sm:$0xf]
        %v1530 = vld [vmem:[%s1513 + $0xa0] sm:$0xf]
        %v1531 = vld [vmem:[%s1513 + $0xa4] sm:$0xf]
        %s1532 = scalar_lea.vmem %s1, 8
        %v1533 = vld [vmem:[%s1532] sm:$0x3]
        %v1552 = vunpack.c.l.b16 %v1514
        %v1553 = vunpack.c.l.b16 %v1515
        %v1554 = vunpack.c.l.b16 %v1516
        %v1555 = vunpack.c.l.b16 %v1517
        %v1556 = vunpack.c.l.b16 %v1518
        %v1557 = vunpack.c.l.b16 %v1519
        %v1558 = vunpack.c.l.b16 %v1520
        %v1559 = vunpack.c.l.b16 %v1521
        %v1560 = vunpack.c.l.b16 %v1522
        %v1561 = vunpack.c.l.b16 %v1523
        %v1562 = vunpack.c.l.b16 %v1524
        %v1563 = vunpack.c.l.b16 %v1525
        %v1564 = vunpack.c.l.b16 %v1526
        %v1565 = vunpack.c.l.b16 %v1527
        %v1566 = vunpack.c.l.b16 %v1528
        %v1567 = vunpack.c.l.b16 %v1529
        %v1568 = vunpack.c.l.b16 %v1530
        %v1569 = vunpack.c.l.b16 %v1531
        %v1570 = vpack.c.b16 %v1553, %v1552
        %v1571 = vpack.c.b16 %v1555, %v1554
        %v1572 = vpack.c.b16 %v1557, %v1556
        %v1573 = vpack.c.b16 %v1559, %v1558
        %v1574 = vpack.c.b16 %v1561, %v1560
        %v1575 = vpack.c.b16 %v1563, %v1562
        %v1576 = vpack.c.b16 %v1565, %v1564
        %v1577 = vpack.c.b16 %v1567, %v1566
        %v1578 = vpack.c.b16 %v1569, %v1568
        %v1580 = vsel %vm484, %v1570, 0
        %v1583 = vsel %vm484, %v1571, 0
        %v1586 = vsel %vm484, %v1572, 0
        %v1589 = vsel %vm484, %v1573, 0
        %v1592 = vsel %vm484, %v1574, 0
        %v1595 = vsel %vm484, %v1575, 0
        %v1598 = vsel %vm484, %v1576, 0
        %v1601 = vsel %vm484, %v1577, 0
        %v1604 = vsel %vm484, %v1578, 0
        %v1607 = vsel %vm512, %v1533, 0
        %1609 = vmatprep.subr.bf16.mxu0 0
        %1610 = vmatpush1.bf16.msra.mxu0 0
        %1611 = vmatprep.subr.bf16.mxu0 0
        %1612 = vmatpush1.bf16.msra.mxu0 0
        %1613 = vmatprep.subr.bf16.mxu0 0
        %1614 = vmatpush1.bf16.msra.mxu0 0
        %1615 = vmatprep.subr.bf16.mxu0 0
        %1616 = vmatpush1.bf16.msra.mxu0 0
        %1617 = vmatprep.subr.bf16.mxu0 0
        %1618 = vmatpush1.bf16.msra.mxu0 0
        %1619 = vmatprep.subr.bf16.mxu0 0
        %1620 = vmatpush1.bf16.msra.mxu0 0
        %1621 = vmatprep.subr.bf16.mxu0 0
        %1622 = vmatpush1.bf16.msra.mxu0 0
        %1623 = vmatprep.subr.bf16.mxu0 0
        %1624 = vmatpush1.bf16.msra.mxu0 %v1607
        %1625 = vmatprep.subr.bf16.mxu0 0
        %1626 = vmatpush2.bf16.msra.mxu0 0
        %1627 = vmatprep.subr.bf16.mxu0 0
        %1628 = vmatpush2.bf16.msra.mxu0 0
        %1629 = vmatprep.subr.bf16.mxu0 0
        %1630 = vmatpush2.bf16.msra.mxu0 0
        %1631 = vmatprep.subr.bf16.mxu0 0
        %1632 = vmatpush2.bf16.msra.mxu0 0
        %1633 = vmatprep.subr.bf16.mxu0 0
        %1634 = vmatpush2.bf16.msra.mxu0 0
        %1635 = vmatprep.subr.bf16.mxu0 0
        %1636 = vmatpush2.bf16.msra.mxu0 0
        %1637 = vmatprep.subr.bf16.mxu0 0
        %1638 = vmatpush2.bf16.msra.mxu0 0
        %1639 = vmatprep.subr.bf16.mxu0 0
        %1640 = vmatpush2.bf16.msra.mxu0 0
        %1641 = vmatprep.mubr.bf16.mxu0 0
        %1642 = vmatmul.mubr.bf16.gmra.mxu0 %v1580
        %v1643 = vpop.f32.mrf.mxu0
        %v1644 = vadd.f32 0.0, %v1643
        %v1645 = vpop.f32.mrf.mxu0
        %v1646 = vpop.f32.mrf.mxu0
        %v1647 = vadd.f32 0.0, %v1646
        %v1648 = vpop.f32.mrf.mxu0
        %1649 = vmatprep.mubr.bf16.mxu0 0
        %1650 = vmatmul.mubr.bf16.gmra.mxu0 %v1583
        %v1651 = vpop.f32.mrf.mxu0
        %v1652 = vadd.f32 0.0, %v1651
        %v1653 = vpop.f32.mrf.mxu0
        %v1654 = vpop.f32.mrf.mxu0
        %v1655 = vadd.f32 0.0, %v1654
        %v1656 = vpop.f32.mrf.mxu0
        %1657 = vmatprep.mubr.bf16.mxu0 0
        %1658 = vmatmul.mubr.bf16.gmra.mxu0 %v1586
        %v1659 = vpop.f32.mrf.mxu0
        %v1660 = vadd.f32 0.0, %v1659
        %v1661 = vpop.f32.mrf.mxu0
        %v1662 = vpop.f32.mrf.mxu0
        %v1663 = vadd.f32 0.0, %v1662
        %v1664 = vpop.f32.mrf.mxu0
        %1665 = vmatprep.mubr.bf16.mxu0 0
        %1666 = vmatmul.mubr.bf16.gmra.mxu0 %v1589
        %v1667 = vpop.f32.mrf.mxu0
        %v1668 = vadd.f32 0.0, %v1667
        %v1669 = vpop.f32.mrf.mxu0
        %v1670 = vpop.f32.mrf.mxu0
        %v1671 = vadd.f32 0.0, %v1670
        %v1672 = vpop.f32.mrf.mxu0
        %1673 = vmatprep.mubr.bf16.mxu0 0
        %1674 = vmatmul.mubr.bf16.gmra.mxu0 %v1592
        %v1675 = vpop.f32.mrf.mxu0
        %v1676 = vadd.f32 0.0, %v1675
        %v1677 = vpop.f32.mrf.mxu0
        %v1678 = vpop.f32.mrf.mxu0
        %v1679 = vadd.f32 0.0, %v1678
        %v1680 = vpop.f32.mrf.mxu0
        %1681 = vmatprep.mubr.bf16.mxu0 0
        %1682 = vmatmul.mubr.bf16.gmra.mxu0 %v1595
        %v1683 = vpop.f32.mrf.mxu0
        %v1684 = vadd.f32 0.0, %v1683
        %v1685 = vpop.f32.mrf.mxu0
        %v1686 = vpop.f32.mrf.mxu0
        %v1687 = vadd.f32 0.0, %v1686
        %v1688 = vpop.f32.mrf.mxu0
        %1689 = vmatprep.mubr.bf16.mxu0 0
        %1690 = vmatmul.mubr.bf16.gmra.mxu0 %v1598
        %v1691 = vpop.f32.mrf.mxu0
        %v1692 = vadd.f32 0.0, %v1691
        %v1693 = vpop.f32.mrf.mxu0
        %v1694 = vpop.f32.mrf.mxu0
        %v1695 = vadd.f32 0.0, %v1694
        %v1696 = vpop.f32.mrf.mxu0
        %1697 = vmatprep.mubr.bf16.mxu0 0
        %1698 = vmatmul.mubr.bf16.gmra.mxu0 %v1601
        %v1699 = vpop.f32.mrf.mxu0
        %v1700 = vadd.f32 0.0, %v1699
        %v1701 = vpop.f32.mrf.mxu0
        %v1702 = vpop.f32.mrf.mxu0
        %v1703 = vadd.f32 0.0, %v1702
        %v1704 = vpop.f32.mrf.mxu0
        %1705 = vmatprep.mubr.bf16.mxu0 0
        %1706 = vmatmul.mubr.bf16.gmra.mxu0 %v1604
        %v1707 = vpop.f32.mrf.mxu0
        %v1708 = vadd.f32 0.0, %v1707
        %v1709 = vpop.f32.mrf.mxu0
        %v1710 = vpop.f32.mrf.mxu0
        %v1711 = vadd.f32 0.0, %v1710
        %v1712 = vpop.f32.mrf.mxu0
        %1713 = vdwg.mxu0
        %v1714 = vadd.f32 %v1492, %v1644
        %v1715 = vadd.f32 %v1493, %v1647
        %v1716 = vadd.f32 %v1494, %v1652
        %v1717 = vadd.f32 %v1495, %v1655
        %v1718 = vadd.f32 %v1496, %v1660
        %v1719 = vadd.f32 %v1497, %v1663
        %v1720 = vadd.f32 %v1498, %v1668
        %v1721 = vadd.f32 %v1499, %v1671
        %v1722 = vadd.f32 %v1500, %v1676
        %v1723 = vadd.f32 %v1501, %v1679
        %v1724 = vadd.f32 %v1502, %v1684
        %v1725 = vadd.f32 %v1503, %v1687
        %v1726 = vadd.f32 %v1504, %v1692
        %v1727 = vadd.f32 %v1505, %v1695
        %v1728 = vadd.f32 %v1506, %v1700
        %v1729 = vadd.f32 %v1507, %v1703
        %v1730 = vadd.f32 %v1508, %v1708
        %v1731 = vadd.f32 %v1509, %v1711
        %v1732 = vld [vmem:[%s1513 + $0x8] sm:$0xf]
        %v1733 = vld [vmem:[%s1513 + $0xc] sm:$0xf]
        %v1734 = vld [vmem:[%s1513 + $0x10] sm:$0x1]
        %v1735 = vld [vmem:[%s1513 + $0x1c] sm:$0xf]
        %v1736 = vld [vmem:[%s1513 + $0x20] sm:$0xf]
        %v1737 = vld [vmem:[%s1513 + $0x24] sm:$0x1]
        %v1738 = vld [vmem:[%s1513 + $0x30] sm:$0xf]
        %v1739 = vld [vmem:[%s1513 + $0x34] sm:$0xf]
        %v1740 = vld [vmem:[%s1513 + $0x38] sm:$0x1]
        %v1741 = vld [vmem:[%s1513 + $0x44] sm:$0xf]
        %v1742 = vld [vmem:[%s1513 + $0x48] sm:$0xf]
        %v1743 = vld [vmem:[%s1513 + $0x4c] sm:$0x1]
        %v1744 = vld [vmem:[%s1513 + $0x58] sm:$0xf]
        %v1745 = vld [vmem:[%s1513 + $0x5c] sm:$0xf]
        %v1746 = vld [vmem:[%s1513 + $0x60] sm:$0x1]
        %v1747 = vld [vmem:[%s1513 + $0x6c] sm:$0xf]
        %v1748 = vld [vmem:[%s1513 + $0x70] sm:$0xf]
        %v1749 = vld [vmem:[%s1513 + $0x74] sm:$0x1]
        %v1750 = vld [vmem:[%s1513 + $0x80] sm:$0xf]
        %v1751 = vld [vmem:[%s1513 + $0x84] sm:$0xf]
        %v1752 = vld [vmem:[%s1513 + $0x88] sm:$0x1]
        %v1753 = vld [vmem:[%s1513 + $0x94] sm:$0xf]
        %v1754 = vld [vmem:[%s1513 + $0x98] sm:$0xf]
        %v1755 = vld [vmem:[%s1513 + $0x9c] sm:$0x1]
        %v1756 = vld [vmem:[%s1513 + $0xa8] sm:$0xf]
        %v1757 = vld [vmem:[%s1513 + $0xac] sm:$0xf]
        %v1758 = vld [vmem:[%s1513 + $0xb0] sm:$0x1]
        %v1760 = vshrl.u32 %v1732, 16
        %v1762 = vrot.slane %v1760, 4
        %v1763 = vshll.u32 %v1732, 16
        %v1765 = vrot.slane %v1763, 5
        %v1766 = vor.u32 %v1762, %v1765
        %v1767 = vrot.slane %v1766, 4
        %v1769 = vshll.u32 %v1733, 16
        %v1771 = vrot.slane %v1769, 5
        %v1772 = vsel %vm238, %v1767, %v1771
        %v1773 = vshrl.u32 %v1733, 16
        %v1775 = vrot.slane %v1773, 4
        %v1776 = vor.u32 %v1775, %v1771
        %v1777 = vrot.slane %v1776, 4
        %v1779 = vshll.u32 %v1734, 16
        %v1781 = vrot.slane %v1779, 5
        %v1782 = vsel %vm238, %v1777, %v1781
        %v1784 = vshrl.u32 %v1735, 16
        %v1786 = vrot.slane %v1784, 4
        %v1787 = vshll.u32 %v1735, 16
        %v1789 = vrot.slane %v1787, 5
        %v1790 = vor.u32 %v1786, %v1789
        %v1791 = vrot.slane %v1790, 4
        %v1793 = vshll.u32 %v1736, 16
        %v1795 = vrot.slane %v1793, 5
        %v1796 = vsel %vm238, %v1791, %v1795
        %v1797 = vshrl.u32 %v1736, 16
        %v1799 = vrot.slane %v1797, 4
        %v1800 = vor.u32 %v1799, %v1795
        %v1801 = vrot.slane %v1800, 4
        %v1803 = vshll.u32 %v1737, 16
        %v1805 = vrot.slane %v1803, 5
        %v1806 = vsel %vm238, %v1801, %v1805
        %v1808 = vshrl.u32 %v1738, 16
        %v1810 = vrot.slane %v1808, 4
        %v1811 = vshll.u32 %v1738, 16
        %v1813 = vrot.slane %v1811, 5
        %v1814 = vor.u32 %v1810, %v1813
        %v1815 = vrot.slane %v1814, 4
        %v1817 = vshll.u32 %v1739, 16
        %v1819 = vrot.slane %v1817, 5
        %v1820 = vsel %vm238, %v1815, %v1819
        %v1821 = vshrl.u32 %v1739, 16
        %v1823 = vrot.slane %v1821, 4
        %v1824 = vor.u32 %v1823, %v1819
        %v1825 = vrot.slane %v1824, 4
        %v1827 = vshll.u32 %v1740, 16
        %v1829 = vrot.slane %v1827, 5
        %v1830 = vsel %vm238, %v1825, %v1829
        %v1832 = vshrl.u32 %v1741, 16
        %v1834 = vrot.slane %v1832, 4
        %v1835 = vshll.u32 %v1741, 16
        %v1837 = vrot.slane %v1835, 5
        %v1838 = vor.u32 %v1834, %v1837
        %v1839 = vrot.slane %v1838, 4
        %v1841 = vshll.u32 %v1742, 16
        %v1843 = vrot.slane %v1841, 5
        %v1844 = vsel %vm238, %v1839, %v1843
        %v1845 = vshrl.u32 %v1742, 16
        %v1847 = vrot.slane %v1845, 4
        %v1848 = vor.u32 %v1847, %v1843
        %v1849 = vrot.slane %v1848, 4
        %v1851 = vshll.u32 %v1743, 16
        %v1853 = vrot.slane %v1851, 5
        %v1854 = vsel %vm238, %v1849, %v1853
        %v1856 = vshrl.u32 %v1744, 16
        %v1858 = vrot.slane %v1856, 4
        %v1859 = vshll.u32 %v1744, 16
        %v1861 = vrot.slane %v1859, 5
        %v1862 = vor.u32 %v1858, %v1861
        %v1863 = vrot.slane %v1862, 4
        %v1865 = vshll.u32 %v1745, 16
        %v1867 = vrot.slane %v1865, 5
        %v1868 = vsel %vm238, %v1863, %v1867
        %v1869 = vshrl.u32 %v1745, 16
        %v1871 = vrot.slane %v1869, 4
        %v1872 = vor.u32 %v1871, %v1867
        %v1873 = vrot.slane %v1872, 4
        %v1875 = vshll.u32 %v1746, 16
        %v1877 = vrot.slane %v1875, 5
        %v1878 = vsel %vm238, %v1873, %v1877
        %v1880 = vshrl.u32 %v1747, 16
        %v1882 = vrot.slane %v1880, 4
        %v1883 = vshll.u32 %v1747, 16
        %v1885 = vrot.slane %v1883, 5
        %v1886 = vor.u32 %v1882, %v1885
        %v1887 = vrot.slane %v1886, 4
        %v1889 = vshll.u32 %v1748, 16
        %v1891 = vrot.slane %v1889, 5
        %v1892 = vsel %vm238, %v1887, %v1891
        %v1893 = vshrl.u32 %v1748, 16
        %v1895 = vrot.slane %v1893, 4
        %v1896 = vor.u32 %v1895, %v1891
        %v1897 = vrot.slane %v1896, 4
        %v1899 = vshll.u32 %v1749, 16
        %v1901 = vrot.slane %v1899, 5
        %v1902 = vsel %vm238, %v1897, %v1901
        %v1904 = vshrl.u32 %v1750, 16
        %v1906 = vrot.slane %v1904, 4
        %v1907 = vshll.u32 %v1750, 16
        %v1909 = vrot.slane %v1907, 5
        %v1910 = vor.u32 %v1906, %v1909
        %v1911 = vrot.slane %v1910, 4
        %v1913 = vshll.u32 %v1751, 16
        %v1915 = vrot.slane %v1913, 5
        %v1916 = vsel %vm238, %v1911, %v1915
        %v1917 = vshrl.u32 %v1751, 16
        %v1919 = vrot.slane %v1917, 4
        %v1920 = vor.u32 %v1919, %v1915
        %v1921 = vrot.slane %v1920, 4
        %v1923 = vshll.u32 %v1752, 16
        %v1925 = vrot.slane %v1923, 5
        %v1926 = vsel %vm238, %v1921, %v1925
        %v1928 = vshrl.u32 %v1753, 16
        %v1930 = vrot.slane %v1928, 4
        %v1931 = vshll.u32 %v1753, 16
        %v1933 = vrot.slane %v1931, 5
        %v1934 = vor.u32 %v1930, %v1933
        %v1935 = vrot.slane %v1934, 4
        %v1937 = vshll.u32 %v1754, 16
        %v1939 = vrot.slane %v1937, 5
        %v1940 = vsel %vm238, %v1935, %v1939
        %v1941 = vshrl.u32 %v1754, 16
        %v1943 = vrot.slane %v1941, 4
        %v1944 = vor.u32 %v1943, %v1939
        %v1945 = vrot.slane %v1944, 4
        %v1947 = vshll.u32 %v1755, 16
        %v1949 = vrot.slane %v1947, 5
        %v1950 = vsel %vm238, %v1945, %v1949
        %v1952 = vshrl.u32 %v1756, 16
        %v1954 = vrot.slane %v1952, 4
        %v1955 = vshll.u32 %v1756, 16
        %v1957 = vrot.slane %v1955, 5
        %v1958 = vor.u32 %v1954, %v1957
        %v1959 = vrot.slane %v1958, 4
        %v1961 = vshll.u32 %v1757, 16
        %v1963 = vrot.slane %v1961, 5
        %v1964 = vsel %vm238, %v1959, %v1963
        %v1965 = vshrl.u32 %v1757, 16
        %v1967 = vrot.slane %v1965, 4
        %v1968 = vor.u32 %v1967, %v1963
        %v1969 = vrot.slane %v1968, 4
        %v1971 = vshll.u32 %v1758, 16
        %v1973 = vrot.slane %v1971, 5
        %v1974 = vsel %vm238, %v1969, %v1973
        %s1975 = scalar_lea.vmem %s1, 10
        %v1976 = vld [vmem:[%s1975] sm:$0x3]
        %v1977 = vunpack.c.l.b16 %v1772
        %v1978 = vunpack.c.l.b16 %v1782
        %v1979 = vunpack.c.l.b16 %v1796
        %v1980 = vunpack.c.l.b16 %v1806
        %v1981 = vunpack.c.l.b16 %v1820
        %v1982 = vunpack.c.l.b16 %v1830
        %v1983 = vunpack.c.l.b16 %v1844
        %v1984 = vunpack.c.l.b16 %v1854
        %v1985 = vunpack.c.l.b16 %v1868
        %v1986 = vunpack.c.l.b16 %v1878
        %v1987 = vunpack.c.l.b16 %v1892
        %v1988 = vunpack.c.l.b16 %v1902
        %v1989 = vunpack.c.l.b16 %v1916
        %v1990 = vunpack.c.l.b16 %v1926
        %v1991 = vunpack.c.l.b16 %v1940
        %v1992 = vunpack.c.l.b16 %v1950
        %v1993 = vunpack.c.l.b16 %v1964
        %v1994 = vunpack.c.l.b16 %v1974
        %v1995 = vpack.c.b16 %v1978, %v1977
        %v1996 = vpack.c.b16 %v1980, %v1979
        %v1997 = vpack.c.b16 %v1982, %v1981
        %v1998 = vpack.c.b16 %v1984, %v1983
        %v1999 = vpack.c.b16 %v1986, %v1985
        %v2000 = vpack.c.b16 %v1988, %v1987
        %v2001 = vpack.c.b16 %v1990, %v1989
        %v2002 = vpack.c.b16 %v1992, %v1991
        %v2003 = vpack.c.b16 %v1994, %v1993
        %v2005 = vsel %vm484, %v1995, 0
        %v2008 = vsel %vm484, %v1996, 0
        %v2011 = vsel %vm484, %v1997, 0
        %v2014 = vsel %vm484, %v1998, 0
        %v2017 = vsel %vm484, %v1999, 0
        %v2020 = vsel %vm484, %v2000, 0
        %v2023 = vsel %vm484, %v2001, 0
        %v2026 = vsel %vm484, %v2002, 0
        %v2029 = vsel %vm484, %v2003, 0
        %v2032 = vsel %vm512, %v1976, 0
        %2034 = vmatprep.subr.bf16.mxu0 0
        %2035 = vmatpush1.bf16.msra.mxu0 0
        %2036 = vmatprep.subr.bf16.mxu0 0
        %2037 = vmatpush1.bf16.msra.mxu0 0
        %2038 = vmatprep.subr.bf16.mxu0 0
        %2039 = vmatpush1.bf16.msra.mxu0 0
        %2040 = vmatprep.subr.bf16.mxu0 0
        %2041 = vmatpush1.bf16.msra.mxu0 0
        %2042 = vmatprep.subr.bf16.mxu0 0
        %2043 = vmatpush1.bf16.msra.mxu0 0
        %2044 = vmatprep.subr.bf16.mxu0 0
        %2045 = vmatpush1.bf16.msra.mxu0 0
        %2046 = vmatprep.subr.bf16.mxu0 0
        %2047 = vmatpush1.bf16.msra.mxu0 0
        %2048 = vmatprep.subr.bf16.mxu0 0
        %2049 = vmatpush1.bf16.msra.mxu0 %v2032
        %2050 = vmatprep.subr.bf16.mxu0 0
        %2051 = vmatpush2.bf16.msra.mxu0 0
        %2052 = vmatprep.subr.bf16.mxu0 0
        %2053 = vmatpush2.bf16.msra.mxu0 0
        %2054 = vmatprep.subr.bf16.mxu0 0
        %2055 = vmatpush2.bf16.msra.mxu0 0
        %2056 = vmatprep.subr.bf16.mxu0 0
        %2057 = vmatpush2.bf16.msra.mxu0 0
        %2058 = vmatprep.subr.bf16.mxu0 0
        %2059 = vmatpush2.bf16.msra.mxu0 0
        %2060 = vmatprep.subr.bf16.mxu0 0
        %2061 = vmatpush2.bf16.msra.mxu0 0
        %2062 = vmatprep.subr.bf16.mxu0 0
        %2063 = vmatpush2.bf16.msra.mxu0 0
        %2064 = vmatprep.subr.bf16.mxu0 0
        %2065 = vmatpush2.bf16.msra.mxu0 0
        %2066 = vmatprep.mubr.bf16.mxu0 0
        %2067 = vmatmul.mubr.bf16.gmra.mxu0 %v2005
        %v2068 = vpop.f32.mrf.mxu0
        %v2069 = vadd.f32 0.0, %v2068
        %v2070 = vpop.f32.mrf.mxu0
        %v2071 = vpop.f32.mrf.mxu0
        %v2072 = vadd.f32 0.0, %v2071
        %v2073 = vpop.f32.mrf.mxu0
        %2074 = vmatprep.mubr.bf16.mxu0 0
        %2075 = vmatmul.mubr.bf16.gmra.mxu0 %v2008
        %v2076 = vpop.f32.mrf.mxu0
        %v2077 = vadd.f32 0.0, %v2076
        %v2078 = vpop.f32.mrf.mxu0
        %v2079 = vpop.f32.mrf.mxu0
        %v2080 = vadd.f32 0.0, %v2079
        %v2081 = vpop.f32.mrf.mxu0
        %2082 = vmatprep.mubr.bf16.mxu0 0
        %2083 = vmatmul.mubr.bf16.gmra.mxu0 %v2011
        %v2084 = vpop.f32.mrf.mxu0
        %v2085 = vadd.f32 0.0, %v2084
        %v2086 = vpop.f32.mrf.mxu0
        %v2087 = vpop.f32.mrf.mxu0
        %v2088 = vadd.f32 0.0, %v2087
        %v2089 = vpop.f32.mrf.mxu0
        %2090 = vmatprep.mubr.bf16.mxu0 0
        %2091 = vmatmul.mubr.bf16.gmra.mxu0 %v2014
        %v2092 = vpop.f32.mrf.mxu0
        %v2093 = vadd.f32 0.0, %v2092
        %v2094 = vpop.f32.mrf.mxu0
        %v2095 = vpop.f32.mrf.mxu0
        %v2096 = vadd.f32 0.0, %v2095
        %v2097 = vpop.f32.mrf.mxu0
        %2098 = vmatprep.mubr.bf16.mxu0 0
        %2099 = vmatmul.mubr.bf16.gmra.mxu0 %v2017
        %v2100 = vpop.f32.mrf.mxu0
        %v2101 = vadd.f32 0.0, %v2100
        %v2102 = vpop.f32.mrf.mxu0
        %v2103 = vpop.f32.mrf.mxu0
        %v2104 = vadd.f32 0.0, %v2103
        %v2105 = vpop.f32.mrf.mxu0
        %2106 = vmatprep.mubr.bf16.mxu0 0
        %2107 = vmatmul.mubr.bf16.gmra.mxu0 %v2020
        %v2108 = vpop.f32.mrf.mxu0
        %v2109 = vadd.f32 0.0, %v2108
        %v2110 = vpop.f32.mrf.mxu0
        %v2111 = vpop.f32.mrf.mxu0
        %v2112 = vadd.f32 0.0, %v2111
        %v2113 = vpop.f32.mrf.mxu0
        %2114 = vmatprep.mubr.bf16.mxu0 0
        %2115 = vmatmul.mubr.bf16.gmra.mxu0 %v2023
        %v2116 = vpop.f32.mrf.mxu0
        %v2117 = vadd.f32 0.0, %v2116
        %v2118 = vpop.f32.mrf.mxu0
        %v2119 = vpop.f32.mrf.mxu0
        %v2120 = vadd.f32 0.0, %v2119
        %v2121 = vpop.f32.mrf.mxu0
        %2122 = vmatprep.mubr.bf16.mxu0 0
        %2123 = vmatmul.mubr.bf16.gmra.mxu0 %v2026
        %v2124 = vpop.f32.mrf.mxu0
        %v2125 = vadd.f32 0.0, %v2124
        %v2126 = vpop.f32.mrf.mxu0
        %v2127 = vpop.f32.mrf.mxu0
        %v2128 = vadd.f32 0.0, %v2127
        %v2129 = vpop.f32.mrf.mxu0
        %2130 = vmatprep.mubr.bf16.mxu0 0
        %2131 = vmatmul.mubr.bf16.gmra.mxu0 %v2029
        %v2132 = vpop.f32.mrf.mxu0
        %v2133 = vadd.f32 0.0, %v2132
        %v2134 = vpop.f32.mrf.mxu0
        %v2135 = vpop.f32.mrf.mxu0
        %v2136 = vadd.f32 0.0, %v2135
        %v2137 = vpop.f32.mrf.mxu0
        %2138 = vdwg.mxu0
        %v2139 = vadd.f32 %v1714, %v2069
        %v2140 = vadd.f32 %v1715, %v2072
        %v2141 = vadd.f32 %v1716, %v2077
        %v2142 = vadd.f32 %v1717, %v2080
        %v2143 = vadd.f32 %v1718, %v2085
        %v2144 = vadd.f32 %v1719, %v2088
        %v2145 = vadd.f32 %v1720, %v2093
        %v2146 = vadd.f32 %v1721, %v2096
        %v2147 = vadd.f32 %v1722, %v2101
        %v2148 = vadd.f32 %v1723, %v2104
        %v2149 = vadd.f32 %v1724, %v2109
        %v2150 = vadd.f32 %v1725, %v2112
        %v2151 = vadd.f32 %v1726, %v2117
        %v2152 = vadd.f32 %v1727, %v2120
        %v2153 = vadd.f32 %v1728, %v2125
        %v2154 = vadd.f32 %v1729, %v2128
        %v2155 = vadd.f32 %v1730, %v2133
        %v2156 = vadd.f32 %v1731, %v2136
        %v2157 = vld [vmem:[%s1513] sm:$0xf]
        %v2158 = vld [vmem:[%s1513 + $0x4] sm:$0xf]
        %v2159 = vld [vmem:[%s1513 + $0x8] sm:$0x1]
        %v2160 = vld [vmem:[%s1513 + $0x14] sm:$0xf]
        %v2161 = vld [vmem:[%s1513 + $0x18] sm:$0xf]
        %v2162 = vld [vmem:[%s1513 + $0x1c] sm:$0x1]
        %v2163 = vld [vmem:[%s1513 + $0x28] sm:$0xf]
        %v2164 = vld [vmem:[%s1513 + $0x2c] sm:$0xf]
        %v2165 = vld [vmem:[%s1513 + $0x30] sm:$0x1]
        %v2166 = vld [vmem:[%s1513 + $0x3c] sm:$0xf]
        %v2167 = vld [vmem:[%s1513 + $0x40] sm:$0xf]
        %v2168 = vld [vmem:[%s1513 + $0x44] sm:$0x1]
        %v2169 = vld [vmem:[%s1513 + $0x50] sm:$0xf]
        %v2170 = vld [vmem:[%s1513 + $0x54] sm:$0xf]
        %v2171 = vld [vmem:[%s1513 + $0x58] sm:$0x1]
        %v2172 = vld [vmem:[%s1513 + $0x64] sm:$0xf]
        %v2173 = vld [vmem:[%s1513 + $0x68] sm:$0xf]
        %v2174 = vld [vmem:[%s1513 + $0x6c] sm:$0x1]
        %v2175 = vld [vmem:[%s1513 + $0x78] sm:$0xf]
        %v2176 = vld [vmem:[%s1513 + $0x7c] sm:$0xf]
        %v2177 = vld [vmem:[%s1513 + $0x80] sm:$0x1]
        %v2178 = vld [vmem:[%s1513 + $0x8c] sm:$0xf]
        %v2179 = vld [vmem:[%s1513 + $0x90] sm:$0xf]
        %v2180 = vld [vmem:[%s1513 + $0x94] sm:$0x1]
        %v2181 = vld [vmem:[%s1513 + $0xa0] sm:$0xf]
        %v2182 = vld [vmem:[%s1513 + $0xa4] sm:$0xf]
        %v2183 = vld [vmem:[%s1513 + $0xa8] sm:$0x1]
        %v2185 = vshrl.u32 %v2157, 16
        %v2187 = vrot.slane %v2185, 4
        %v2188 = vshll.u32 %v2157, 16
        %v2190 = vrot.slane %v2188, 5
        %v2191 = vor.u32 %v2187, %v2190
        %v2192 = vrot.slane %v2191, 4
        %v2194 = vshll.u32 %v2158, 16
        %v2196 = vrot.slane %v2194, 5
        %v2197 = vsel %vm238, %v2192, %v2196
        %v2198 = vshrl.u32 %v2158, 16
        %v2200 = vrot.slane %v2198, 4
        %v2201 = vor.u32 %v2200, %v2196
        %v2202 = vrot.slane %v2201, 4
        %v2204 = vshll.u32 %v2159, 16
        %v2206 = vrot.slane %v2204, 5
        %v2207 = vsel %vm238, %v2202, %v2206
        %v2209 = vshrl.u32 %v2160, 16
        %v2211 = vrot.slane %v2209, 4
        %v2212 = vshll.u32 %v2160, 16
        %v2214 = vrot.slane %v2212, 5
        %v2215 = vor.u32 %v2211, %v2214
        %v2216 = vrot.slane %v2215, 4
        %v2218 = vshll.u32 %v2161, 16
        %v2220 = vrot.slane %v2218, 5
        %v2221 = vsel %vm238, %v2216, %v2220
        %v2222 = vshrl.u32 %v2161, 16
        %v2224 = vrot.slane %v2222, 4
        %v2225 = vor.u32 %v2224, %v2220
        %v2226 = vrot.slane %v2225, 4
        %v2228 = vshll.u32 %v2162, 16
        %v2230 = vrot.slane %v2228, 5
        %v2231 = vsel %vm238, %v2226, %v2230
        %v2233 = vshrl.u32 %v2163, 16
        %v2235 = vrot.slane %v2233, 4
        %v2236 = vshll.u32 %v2163, 16
        %v2238 = vrot.slane %v2236, 5
        %v2239 = vor.u32 %v2235, %v2238
        %v2240 = vrot.slane %v2239, 4
        %v2242 = vshll.u32 %v2164, 16
        %v2244 = vrot.slane %v2242, 5
        %v2245 = vsel %vm238, %v2240, %v2244
        %v2246 = vshrl.u32 %v2164, 16
        %v2248 = vrot.slane %v2246, 4
        %v2249 = vor.u32 %v2248, %v2244
        %v2250 = vrot.slane %v2249, 4
        %v2252 = vshll.u32 %v2165, 16
        %v2254 = vrot.slane %v2252, 5
        %v2255 = vsel %vm238, %v2250, %v2254
        %v2257 = vshrl.u32 %v2166, 16
        %v2259 = vrot.slane %v2257, 4
        %v2260 = vshll.u32 %v2166, 16
        %v2262 = vrot.slane %v2260, 5
        %v2263 = vor.u32 %v2259, %v2262
        %v2264 = vrot.slane %v2263, 4
        %v2266 = vshll.u32 %v2167, 16
        %v2268 = vrot.slane %v2266, 5
        %v2269 = vsel %vm238, %v2264, %v2268
        %v2270 = vshrl.u32 %v2167, 16
        %v2272 = vrot.slane %v2270, 4
        %v2273 = vor.u32 %v2272, %v2268
        %v2274 = vrot.slane %v2273, 4
        %v2276 = vshll.u32 %v2168, 16
        %v2278 = vrot.slane %v2276, 5
        %v2279 = vsel %vm238, %v2274, %v2278
        %v2281 = vshrl.u32 %v2169, 16
        %v2283 = vrot.slane %v2281, 4
        %v2284 = vshll.u32 %v2169, 16
        %v2286 = vrot.slane %v2284, 5
        %v2287 = vor.u32 %v2283, %v2286
        %v2288 = vrot.slane %v2287, 4
        %v2290 = vshll.u32 %v2170, 16
        %v2292 = vrot.slane %v2290, 5
        %v2293 = vsel %vm238, %v2288, %v2292
        %v2294 = vshrl.u32 %v2170, 16
        %v2296 = vrot.slane %v2294, 4
        %v2297 = vor.u32 %v2296, %v2292
        %v2298 = vrot.slane %v2297, 4
        %v2300 = vshll.u32 %v2171, 16
        %v2302 = vrot.slane %v2300, 5
        %v2303 = vsel %vm238, %v2298, %v2302
        %v2305 = vshrl.u32 %v2172, 16
        %v2307 = vrot.slane %v2305, 4
        %v2308 = vshll.u32 %v2172, 16
        %v2310 = vrot.slane %v2308, 5
        %v2311 = vor.u32 %v2307, %v2310
        %v2312 = vrot.slane %v2311, 4
        %v2314 = vshll.u32 %v2173, 16
        %v2316 = vrot.slane %v2314, 5
        %v2317 = vsel %vm238, %v2312, %v2316
        %v2318 = vshrl.u32 %v2173, 16
        %v2320 = vrot.slane %v2318, 4
        %v2321 = vor.u32 %v2320, %v2316
        %v2322 = vrot.slane %v2321, 4
        %v2324 = vshll.u32 %v2174, 16
        %v2326 = vrot.slane %v2324, 5
        %v2327 = vsel %vm238, %v2322, %v2326
        %v2329 = vshrl.u32 %v2175, 16
        %v2331 = vrot.slane %v2329, 4
        %v2332 = vshll.u32 %v2175, 16
        %v2334 = vrot.slane %v2332, 5
        %v2335 = vor.u32 %v2331, %v2334
        %v2336 = vrot.slane %v2335, 4
        %v2338 = vshll.u32 %v2176, 16
        %v2340 = vrot.slane %v2338, 5
        %v2341 = vsel %vm238, %v2336, %v2340
        %v2342 = vshrl.u32 %v2176, 16
        %v2344 = vrot.slane %v2342, 4
        %v2345 = vor.u32 %v2344, %v2340
        %v2346 = vrot.slane %v2345, 4
        %v2348 = vshll.u32 %v2177, 16
        %v2350 = vrot.slane %v2348, 5
        %v2351 = vsel %vm238, %v2346, %v2350
        %v2353 = vshrl.u32 %v2178, 16
        %v2355 = vrot.slane %v2353, 4
        %v2356 = vshll.u32 %v2178, 16
        %v2358 = vrot.slane %v2356, 5
        %v2359 = vor.u32 %v2355, %v2358
        %v2360 = vrot.slane %v2359, 4
        %v2362 = vshll.u32 %v2179, 16
        %v2364 = vrot.slane %v2362, 5
        %v2365 = vsel %vm238, %v2360, %v2364
        %v2366 = vshrl.u32 %v2179, 16
        %v2368 = vrot.slane %v2366, 4
        %v2369 = vor.u32 %v2368, %v2364
        %v2370 = vrot.slane %v2369, 4
        %v2372 = vshll.u32 %v2180, 16
        %v2374 = vrot.slane %v2372, 5
        %v2375 = vsel %vm238, %v2370, %v2374
        %v2377 = vshrl.u32 %v2181, 16
        %v2379 = vrot.slane %v2377, 4
        %v2380 = vshll.u32 %v2181, 16
        %v2382 = vrot.slane %v2380, 5
        %v2383 = vor.u32 %v2379, %v2382
        %v2384 = vrot.slane %v2383, 4
        %v2386 = vshll.u32 %v2182, 16
        %v2388 = vrot.slane %v2386, 5
        %v2389 = vsel %vm238, %v2384, %v2388
        %v2390 = vshrl.u32 %v2182, 16
        %v2392 = vrot.slane %v2390, 4
        %v2393 = vor.u32 %v2392, %v2388
        %v2394 = vrot.slane %v2393, 4
        %v2396 = vshll.u32 %v2183, 16
        %v2398 = vrot.slane %v2396, 5
        %v2399 = vsel %vm238, %v2394, %v2398
        %s2400 = scalar_lea.vmem %s1, 12
        %v2401 = vld [vmem:[%s2400] sm:$0x3]
        %v2402 = vunpack.c.l.b16 %v2197
        %v2403 = vunpack.c.l.b16 %v2207
        %v2404 = vunpack.c.l.b16 %v2221
        %v2405 = vunpack.c.l.b16 %v2231
        %v2406 = vunpack.c.l.b16 %v2245
        %v2407 = vunpack.c.l.b16 %v2255
        %v2408 = vunpack.c.l.b16 %v2269
        %v2409 = vunpack.c.l.b16 %v2279
        %v2410 = vunpack.c.l.b16 %v2293
        %v2411 = vunpack.c.l.b16 %v2303
        %v2412 = vunpack.c.l.b16 %v2317
        %v2413 = vunpack.c.l.b16 %v2327
        %v2414 = vunpack.c.l.b16 %v2341
        %v2415 = vunpack.c.l.b16 %v2351
        %v2416 = vunpack.c.l.b16 %v2365
        %v2417 = vunpack.c.l.b16 %v2375
        %v2418 = vunpack.c.l.b16 %v2389
        %v2419 = vunpack.c.l.b16 %v2399
        %v2420 = vpack.c.b16 %v2403, %v2402
        %v2421 = vpack.c.b16 %v2405, %v2404
        %v2422 = vpack.c.b16 %v2407, %v2406
        %v2423 = vpack.c.b16 %v2409, %v2408
        %v2424 = vpack.c.b16 %v2411, %v2410
        %v2425 = vpack.c.b16 %v2413, %v2412
        %v2426 = vpack.c.b16 %v2415, %v2414
        %v2427 = vpack.c.b16 %v2417, %v2416
        %v2428 = vpack.c.b16 %v2419, %v2418
        %v2430 = vsel %vm484, %v2420, 0
        %v2433 = vsel %vm484, %v2421, 0
        %v2436 = vsel %vm484, %v2422, 0
        %v2439 = vsel %vm484, %v2423, 0
        %v2442 = vsel %vm484, %v2424, 0
        %v2445 = vsel %vm484, %v2425, 0
        %v2448 = vsel %vm484, %v2426, 0
        %v2451 = vsel %vm484, %v2427, 0
        %v2454 = vsel %vm484, %v2428, 0
        %v2457 = vsel %vm512, %v2401, 0
        %2459 = vmatprep.subr.bf16.mxu0 0
        %2460 = vmatpush1.bf16.msra.mxu0 0
        %2461 = vmatprep.subr.bf16.mxu0 0
        %2462 = vmatpush1.bf16.msra.mxu0 0
        %2463 = vmatprep.subr.bf16.mxu0 0
        %2464 = vmatpush1.bf16.msra.mxu0 0
        %2465 = vmatprep.subr.bf16.mxu0 0
        %2466 = vmatpush1.bf16.msra.mxu0 0
        %2467 = vmatprep.subr.bf16.mxu0 0
        %2468 = vmatpush1.bf16.msra.mxu0 0
        %2469 = vmatprep.subr.bf16.mxu0 0
        %2470 = vmatpush1.bf16.msra.mxu0 0
        %2471 = vmatprep.subr.bf16.mxu0 0
        %2472 = vmatpush1.bf16.msra.mxu0 0
        %2473 = vmatprep.subr.bf16.mxu0 0
        %2474 = vmatpush1.bf16.msra.mxu0 %v2457
        %2475 = vmatprep.subr.bf16.mxu0 0
        %2476 = vmatpush2.bf16.msra.mxu0 0
        %2477 = vmatprep.subr.bf16.mxu0 0
        %2478 = vmatpush2.bf16.msra.mxu0 0
        %2479 = vmatprep.subr.bf16.mxu0 0
        %2480 = vmatpush2.bf16.msra.mxu0 0
        %2481 = vmatprep.subr.bf16.mxu0 0
        %2482 = vmatpush2.bf16.msra.mxu0 0
        %2483 = vmatprep.subr.bf16.mxu0 0
        %2484 = vmatpush2.bf16.msra.mxu0 0
        %2485 = vmatprep.subr.bf16.mxu0 0
        %2486 = vmatpush2.bf16.msra.mxu0 0
        %2487 = vmatprep.subr.bf16.mxu0 0
        %2488 = vmatpush2.bf16.msra.mxu0 0
        %2489 = vmatprep.subr.bf16.mxu0 0
        %2490 = vmatpush2.bf16.msra.mxu0 0
        %2491 = vmatprep.mubr.bf16.mxu0 0
        %2492 = vmatmul.mubr.bf16.gmra.mxu0 %v2430
        %v2493 = vpop.f32.mrf.mxu0
        %v2494 = vadd.f32 0.0, %v2493
        %v2495 = vpop.f32.mrf.mxu0
        %v2496 = vpop.f32.mrf.mxu0
        %v2497 = vadd.f32 0.0, %v2496
        %v2498 = vpop.f32.mrf.mxu0
        %2499 = vmatprep.mubr.bf16.mxu0 0
        %2500 = vmatmul.mubr.bf16.gmra.mxu0 %v2433
        %v2501 = vpop.f32.mrf.mxu0
        %v2502 = vadd.f32 0.0, %v2501
        %v2503 = vpop.f32.mrf.mxu0
        %v2504 = vpop.f32.mrf.mxu0
        %v2505 = vadd.f32 0.0, %v2504
        %v2506 = vpop.f32.mrf.mxu0
        %2507 = vmatprep.mubr.bf16.mxu0 0
        %2508 = vmatmul.mubr.bf16.gmra.mxu0 %v2436
        %v2509 = vpop.f32.mrf.mxu0
        %v2510 = vadd.f32 0.0, %v2509
        %v2511 = vpop.f32.mrf.mxu0
        %v2512 = vpop.f32.mrf.mxu0
        %v2513 = vadd.f32 0.0, %v2512
        %v2514 = vpop.f32.mrf.mxu0
        %2515 = vmatprep.mubr.bf16.mxu0 0
        %2516 = vmatmul.mubr.bf16.gmra.mxu0 %v2439
        %v2517 = vpop.f32.mrf.mxu0
        %v2518 = vadd.f32 0.0, %v2517
        %v2519 = vpop.f32.mrf.mxu0
        %v2520 = vpop.f32.mrf.mxu0
        %v2521 = vadd.f32 0.0, %v2520
        %v2522 = vpop.f32.mrf.mxu0
        %2523 = vmatprep.mubr.bf16.mxu0 0
        %2524 = vmatmul.mubr.bf16.gmra.mxu0 %v2442
        %v2525 = vpop.f32.mrf.mxu0
        %v2526 = vadd.f32 0.0, %v2525
        %v2527 = vpop.f32.mrf.mxu0
        %v2528 = vpop.f32.mrf.mxu0
        %v2529 = vadd.f32 0.0, %v2528
        %v2530 = vpop.f32.mrf.mxu0
        %2531 = vmatprep.mubr.bf16.mxu0 0
        %2532 = vmatmul.mubr.bf16.gmra.mxu0 %v2445
        %v2533 = vpop.f32.mrf.mxu0
        %v2534 = vadd.f32 0.0, %v2533
        %v2535 = vpop.f32.mrf.mxu0
        %v2536 = vpop.f32.mrf.mxu0
        %v2537 = vadd.f32 0.0, %v2536
        %v2538 = vpop.f32.mrf.mxu0
        %2539 = vmatprep.mubr.bf16.mxu0 0
        %2540 = vmatmul.mubr.bf16.gmra.mxu0 %v2448
        %v2541 = vpop.f32.mrf.mxu0
        %v2542 = vadd.f32 0.0, %v2541
        %v2543 = vpop.f32.mrf.mxu0
        %v2544 = vpop.f32.mrf.mxu0
        %v2545 = vadd.f32 0.0, %v2544
        %v2546 = vpop.f32.mrf.mxu0
        %2547 = vmatprep.mubr.bf16.mxu0 0
        %2548 = vmatmul.mubr.bf16.gmra.mxu0 %v2451
        %v2549 = vpop.f32.mrf.mxu0
        %v2550 = vadd.f32 0.0, %v2549
        %v2551 = vpop.f32.mrf.mxu0
        %v2552 = vpop.f32.mrf.mxu0
        %v2553 = vadd.f32 0.0, %v2552
        %v2554 = vpop.f32.mrf.mxu0
        %2555 = vmatprep.mubr.bf16.mxu0 0
        %2556 = vmatmul.mubr.bf16.gmra.mxu0 %v2454
        %v2557 = vpop.f32.mrf.mxu0
        %v2558 = vadd.f32 0.0, %v2557
        %v2559 = vpop.f32.mrf.mxu0
        %v2560 = vpop.f32.mrf.mxu0
        %v2561 = vadd.f32 0.0, %v2560
        %v2562 = vpop.f32.mrf.mxu0
        %2563 = vdwg.mxu0
        %v2564 = vadd.f32 %v2139, %v2494
        %v2565 = vadd.f32 %v2140, %v2497
        %v2566 = vadd.f32 %v2141, %v2502
        %v2567 = vadd.f32 %v2142, %v2505
        %v2568 = vadd.f32 %v2143, %v2510
        %v2569 = vadd.f32 %v2144, %v2513
        %v2570 = vadd.f32 %v2145, %v2518
        %v2571 = vadd.f32 %v2146, %v2521
        %v2572 = vadd.f32 %v2147, %v2526
        %v2573 = vadd.f32 %v2148, %v2529
        %v2574 = vadd.f32 %v2149, %v2534
        %v2575 = vadd.f32 %v2150, %v2537
        %v2576 = vadd.f32 %v2151, %v2542
        %v2577 = vadd.f32 %v2152, %v2545
        %v2578 = vadd.f32 %v2153, %v2550
        %v2579 = vadd.f32 %v2154, %v2553
        %v2580 = vadd.f32 %v2155, %v2558
        %v2581 = vadd.f32 %v2156, %v2561
        %v2582 = vld [vmem:[%s1513 + $0x8] sm:$0xe]
        %v2583 = vld [vmem:[%s1513 + $0x1c] sm:$0xe]
        %v2584 = vld [vmem:[%s1513 + $0x30] sm:$0xe]
        %v2585 = vld [vmem:[%s1513 + $0x44] sm:$0xe]
        %v2586 = vld [vmem:[%s1513 + $0x58] sm:$0xe]
        %v2587 = vld [vmem:[%s1513 + $0x6c] sm:$0xe]
        %v2588 = vld [vmem:[%s1513 + $0x80] sm:$0xe]
        %v2589 = vld [vmem:[%s1513 + $0x94] sm:$0xe]
        %v2590 = vld [vmem:[%s1513 + $0xa8] sm:$0xe]
        %v2618 = vrot.slane %v2582, 5
        %v2619 = vrot.slane %v2618, 4
        %v2620 = vrot.slane %v1733, 5
        %v2621 = vsel %vm1264, %v2619, %v2620
        %v2622 = vrot.slane %v2620, 4
        %v2623 = vrot.slane %v1734, 5
        %v2624 = vsel %vm1264, %v2622, %v2623
        %v2625 = vrot.slane %v2583, 5
        %v2626 = vrot.slane %v2625, 4
        %v2627 = vrot.slane %v1736, 5
        %v2628 = vsel %vm1264, %v2626, %v2627
        %v2629 = vrot.slane %v2627, 4
        %v2630 = vrot.slane %v1737, 5
        %v2631 = vsel %vm1264, %v2629, %v2630
        %v2632 = vrot.slane %v2584, 5
        %v2633 = vrot.slane %v2632, 4
        %v2634 = vrot.slane %v1739, 5
        %v2635 = vsel %vm1264, %v2633, %v2634
        %v2636 = vrot.slane %v2634, 4
        %v2637 = vrot.slane %v1740, 5
        %v2638 = vsel %vm1264, %v2636, %v2637
        %v2639 = vrot.slane %v2585, 5
        %v2640 = vrot.slane %v2639, 4
        %v2641 = vrot.slane %v1742, 5
        %v2642 = vsel %vm1264, %v2640, %v2641
        %v2643 = vrot.slane %v2641, 4
        %v2644 = vrot.slane %v1743, 5
        %v2645 = vsel %vm1264, %v2643, %v2644
        %v2646 = vrot.slane %v2586, 5
        %v2647 = vrot.slane %v2646, 4
        %v2648 = vrot.slane %v1745, 5
        %v2649 = vsel %vm1264, %v2647, %v2648
        %v2650 = vrot.slane %v2648, 4
        %v2651 = vrot.slane %v1746, 5
        %v2652 = vsel %vm1264, %v2650, %v2651
        %v2653 = vrot.slane %v2587, 5
        %v2654 = vrot.slane %v2653, 4
        %v2655 = vrot.slane %v1748, 5
        %v2656 = vsel %vm1264, %v2654, %v2655
        %v2657 = vrot.slane %v2655, 4
        %v2658 = vrot.slane %v1749, 5
        %v2659 = vsel %vm1264, %v2657, %v2658
        %v2660 = vrot.slane %v2588, 5
        %v2661 = vrot.slane %v2660, 4
        %v2662 = vrot.slane %v1751, 5
        %v2663 = vsel %vm1264, %v2661, %v2662
        %v2664 = vrot.slane %v2662, 4
        %v2665 = vrot.slane %v1752, 5
        %v2666 = vsel %vm1264, %v2664, %v2665
        %v2667 = vrot.slane %v2589, 5
        %v2668 = vrot.slane %v2667, 4
        %v2669 = vrot.slane %v1754, 5
        %v2670 = vsel %vm1264, %v2668, %v2669
        %v2671 = vrot.slane %v2669, 4
        %v2672 = vrot.slane %v1755, 5
        %v2673 = vsel %vm1264, %v2671, %v2672
        %v2674 = vrot.slane %v2590, 5
        %v2675 = vrot.slane %v2674, 4
        %v2676 = vrot.slane %v1757, 5
        %v2677 = vsel %vm1264, %v2675, %v2676
        %v2678 = vrot.slane %v2676, 4
        %v2679 = vrot.slane %v1758, 5
        %v2680 = vsel %vm1264, %v2678, %v2679
        %s2681 = scalar_lea.vmem %s1, 14
        %v2682 = vld [vmem:[%s2681] sm:$0x3]
        %v2683 = vunpack.c.l.b16 %v2621
        %v2684 = vunpack.c.l.b16 %v2624
        %v2685 = vunpack.c.l.b16 %v2628
        %v2686 = vunpack.c.l.b16 %v2631
        %v2687 = vunpack.c.l.b16 %v2635
        %v2688 = vunpack.c.l.b16 %v2638
        %v2689 = vunpack.c.l.b16 %v2642
        %v2690 = vunpack.c.l.b16 %v2645
        %v2691 = vunpack.c.l.b16 %v2649
        %v2692 = vunpack.c.l.b16 %v2652
        %v2693 = vunpack.c.l.b16 %v2656
        %v2694 = vunpack.c.l.b16 %v2659
        %v2695 = vunpack.c.l.b16 %v2663
        %v2696 = vunpack.c.l.b16 %v2666
        %v2697 = vunpack.c.l.b16 %v2670
        %v2698 = vunpack.c.l.b16 %v2673
        %v2699 = vunpack.c.l.b16 %v2677
        %v2700 = vunpack.c.l.b16 %v2680
        %v2701 = vpack.c.b16 %v2684, %v2683
        %v2702 = vpack.c.b16 %v2686, %v2685
        %v2703 = vpack.c.b16 %v2688, %v2687
        %v2704 = vpack.c.b16 %v2690, %v2689
        %v2705 = vpack.c.b16 %v2692, %v2691
        %v2706 = vpack.c.b16 %v2694, %v2693
        %v2707 = vpack.c.b16 %v2696, %v2695
        %v2708 = vpack.c.b16 %v2698, %v2697
        %v2709 = vpack.c.b16 %v2700, %v2699
        %v2711 = vsel %vm484, %v2701, 0
        %v2714 = vsel %vm484, %v2702, 0
        %v2717 = vsel %vm484, %v2703, 0
        %v2720 = vsel %vm484, %v2704, 0
        %v2723 = vsel %vm484, %v2705, 0
        %v2726 = vsel %vm484, %v2706, 0
        %v2729 = vsel %vm484, %v2707, 0
        %v2732 = vsel %vm484, %v2708, 0
        %v2735 = vsel %vm484, %v2709, 0
        %v2738 = vsel %vm512, %v2682, 0
        %2740 = vmatprep.subr.bf16.mxu0 0
        %2741 = vmatpush1.bf16.msra.mxu0 0
        %2742 = vmatprep.subr.bf16.mxu0 0
        %2743 = vmatpush1.bf16.msra.mxu0 0
        %2744 = vmatprep.subr.bf16.mxu0 0
        %2745 = vmatpush1.bf16.msra.mxu0 0
        %2746 = vmatprep.subr.bf16.mxu0 0
        %2747 = vmatpush1.bf16.msra.mxu0 0
        %2748 = vmatprep.subr.bf16.mxu0 0
        %2749 = vmatpush1.bf16.msra.mxu0 0
        %2750 = vmatprep.subr.bf16.mxu0 0
        %2751 = vmatpush1.bf16.msra.mxu0 0
        %2752 = vmatprep.subr.bf16.mxu0 0
        %2753 = vmatpush1.bf16.msra.mxu0 0
        %2754 = vmatprep.subr.bf16.mxu0 0
        %2755 = vmatpush1.bf16.msra.mxu0 %v2738
        %2756 = vmatprep.subr.bf16.mxu0 0
        %2757 = vmatpush2.bf16.msra.mxu0 0
        %2758 = vmatprep.subr.bf16.mxu0 0
        %2759 = vmatpush2.bf16.msra.mxu0 0
        %2760 = vmatprep.subr.bf16.mxu0 0
        %2761 = vmatpush2.bf16.msra.mxu0 0
        %2762 = vmatprep.subr.bf16.mxu0 0
        %2763 = vmatpush2.bf16.msra.mxu0 0
        %2764 = vmatprep.subr.bf16.mxu0 0
        %2765 = vmatpush2.bf16.msra.mxu0 0
        %2766 = vmatprep.subr.bf16.mxu0 0
        %2767 = vmatpush2.bf16.msra.mxu0 0
        %2768 = vmatprep.subr.bf16.mxu0 0
        %2769 = vmatpush2.bf16.msra.mxu0 0
        %2770 = vmatprep.subr.bf16.mxu0 0
        %2771 = vmatpush2.bf16.msra.mxu0 0
        %2772 = vmatprep.mubr.bf16.mxu0 0
        %2773 = vmatmul.mubr.bf16.gmra.mxu0 %v2711
        %v2774 = vpop.f32.mrf.mxu0
        %v2775 = vadd.f32 0.0, %v2774
        %v2776 = vpop.f32.mrf.mxu0
        %v2777 = vpop.f32.mrf.mxu0
        %v2778 = vadd.f32 0.0, %v2777
        %v2779 = vpop.f32.mrf.mxu0
        %2780 = vmatprep.mubr.bf16.mxu0 0
        %2781 = vmatmul.mubr.bf16.gmra.mxu0 %v2714
        %v2782 = vpop.f32.mrf.mxu0
        %v2783 = vadd.f32 0.0, %v2782
        %v2784 = vpop.f32.mrf.mxu0
        %v2785 = vpop.f32.mrf.mxu0
        %v2786 = vadd.f32 0.0, %v2785
        %v2787 = vpop.f32.mrf.mxu0
        %2788 = vmatprep.mubr.bf16.mxu0 0
        %2789 = vmatmul.mubr.bf16.gmra.mxu0 %v2717
        %v2790 = vpop.f32.mrf.mxu0
        %v2791 = vadd.f32 0.0, %v2790
        %v2792 = vpop.f32.mrf.mxu0
        %v2793 = vpop.f32.mrf.mxu0
        %v2794 = vadd.f32 0.0, %v2793
        %v2795 = vpop.f32.mrf.mxu0
        %2796 = vmatprep.mubr.bf16.mxu0 0
        %2797 = vmatmul.mubr.bf16.gmra.mxu0 %v2720
        %v2798 = vpop.f32.mrf.mxu0
        %v2799 = vadd.f32 0.0, %v2798
        %v2800 = vpop.f32.mrf.mxu0
        %v2801 = vpop.f32.mrf.mxu0
        %v2802 = vadd.f32 0.0, %v2801
        %v2803 = vpop.f32.mrf.mxu0
        %2804 = vmatprep.mubr.bf16.mxu0 0
        %2805 = vmatmul.mubr.bf16.gmra.mxu0 %v2723
        %v2806 = vpop.f32.mrf.mxu0
        %v2807 = vadd.f32 0.0, %v2806
        %v2808 = vpop.f32.mrf.mxu0
        %v2809 = vpop.f32.mrf.mxu0
        %v2810 = vadd.f32 0.0, %v2809
        %v2811 = vpop.f32.mrf.mxu0
        %2812 = vmatprep.mubr.bf16.mxu0 0
        %2813 = vmatmul.mubr.bf16.gmra.mxu0 %v2726
        %v2814 = vpop.f32.mrf.mxu0
        %v2815 = vadd.f32 0.0, %v2814
        %v2816 = vpop.f32.mrf.mxu0
        %v2817 = vpop.f32.mrf.mxu0
        %v2818 = vadd.f32 0.0, %v2817
        %v2819 = vpop.f32.mrf.mxu0
        %2820 = vmatprep.mubr.bf16.mxu0 0
        %2821 = vmatmul.mubr.bf16.gmra.mxu0 %v2729
        %v2822 = vpop.f32.mrf.mxu0
        %v2823 = vadd.f32 0.0, %v2822
        %v2824 = vpop.f32.mrf.mxu0
        %v2825 = vpop.f32.mrf.mxu0
        %v2826 = vadd.f32 0.0, %v2825
        %v2827 = vpop.f32.mrf.mxu0
        %2828 = vmatprep.mubr.bf16.mxu0 0
        %2829 = vmatmul.mubr.bf16.gmra.mxu0 %v2732
        %v2830 = vpop.f32.mrf.mxu0
        %v2831 = vadd.f32 0.0, %v2830
        %v2832 = vpop.f32.mrf.mxu0
        %v2833 = vpop.f32.mrf.mxu0
        %v2834 = vadd.f32 0.0, %v2833
        %v2835 = vpop.f32.mrf.mxu0
        %2836 = vmatprep.mubr.bf16.mxu0 0
        %2837 = vmatmul.mubr.bf16.gmra.mxu0 %v2735
        %v2838 = vpop.f32.mrf.mxu0
        %v2839 = vadd.f32 0.0, %v2838
        %v2840 = vpop.f32.mrf.mxu0
        %v2841 = vpop.f32.mrf.mxu0
        %v2842 = vadd.f32 0.0, %v2841
        %v2843 = vpop.f32.mrf.mxu0
        %2844 = vdwg.mxu0
        %v2845 = vadd.f32 %v2564, %v2775
        %v2846 = vadd.f32 %v2565, %v2778
        %v2847 = vadd.f32 %v2566, %v2783
        %v2848 = vadd.f32 %v2567, %v2786
        %v2849 = vadd.f32 %v2568, %v2791
        %v2850 = vadd.f32 %v2569, %v2794
        %v2851 = vadd.f32 %v2570, %v2799
        %v2852 = vadd.f32 %v2571, %v2802
        %v2853 = vadd.f32 %v2572, %v2807
        %v2854 = vadd.f32 %v2573, %v2810
        %v2855 = vadd.f32 %v2574, %v2815
        %v2856 = vadd.f32 %v2575, %v2818
        %v2857 = vadd.f32 %v2576, %v2823
        %v2858 = vadd.f32 %v2577, %v2826
        %v2859 = vadd.f32 %v2578, %v2831
        %v2860 = vadd.f32 %v2579, %v2834
        %v2861 = vadd.f32 %v2580, %v2839
        %v2862 = vadd.f32 %v2581, %v2842
        %s2863 = sadd.s32 %s186, 1
        %s2864 = smul.u32 %s2863, 5
        %s2865 = smul.addr %s2864, 4
        %s2866 = scalar_lea.vmem %s182, %s2865
        %v2867 = vld [vmem:[%s2866] sm:$0xf]
        %v2868 = vld [vmem:[%s2866 + $0x4] sm:$0xf]
        %v2869 = vld [vmem:[%s2866 + $0x14] sm:$0xf]
        %v2870 = vld [vmem:[%s2866 + $0x18] sm:$0xf]
        %v2871 = vld [vmem:[%s2866 + $0x28] sm:$0xf]
        %v2872 = vld [vmem:[%s2866 + $0x2c] sm:$0xf]
        %v2873 = vld [vmem:[%s2866 + $0x3c] sm:$0xf]
        %v2874 = vld [vmem:[%s2866 + $0x40] sm:$0xf]
        %v2875 = vld [vmem:[%s2866 + $0x50] sm:$0xf]
        %v2876 = vld [vmem:[%s2866 + $0x54] sm:$0xf]
        %v2877 = vld [vmem:[%s2866 + $0x64] sm:$0xf]
        %v2878 = vld [vmem:[%s2866 + $0x68] sm:$0xf]
        %v2879 = vld [vmem:[%s2866 + $0x78] sm:$0xf]
        %v2880 = vld [vmem:[%s2866 + $0x7c] sm:$0xf]
        %v2881 = vld [vmem:[%s2866 + $0x8c] sm:$0xf]
        %v2882 = vld [vmem:[%s2866 + $0x90] sm:$0xf]
        %v2883 = vld [vmem:[%s2866 + $0xa0] sm:$0xf]
        %v2884 = vld [vmem:[%s2866 + $0xa4] sm:$0xf]
        %s2885 = scalar_lea.vmem %s1, 16
        %v2886 = vld [vmem:[%s2885] sm:$0x3]
        %v2905 = vunpack.c.l.b16 %v2867
        %v2906 = vunpack.c.l.b16 %v2868
        %v2907 = vunpack.c.l.b16 %v2869
        %v2908 = vunpack.c.l.b16 %v2870
        %v2909 = vunpack.c.l.b16 %v2871
        %v2910 = vunpack.c.l.b16 %v2872
        %v2911 = vunpack.c.l.b16 %v2873
        %v2912 = vunpack.c.l.b16 %v2874
        %v2913 = vunpack.c.l.b16 %v2875
        %v2914 = vunpack.c.l.b16 %v2876
        %v2915 = vunpack.c.l.b16 %v2877
        %v2916 = vunpack.c.l.b16 %v2878
        %v2917 = vunpack.c.l.b16 %v2879
        %v2918 = vunpack.c.l.b16 %v2880
        %v2919 = vunpack.c.l.b16 %v2881
        %v2920 = vunpack.c.l.b16 %v2882
        %v2921 = vunpack.c.l.b16 %v2883
        %v2922 = vunpack.c.l.b16 %v2884
        %v2923 = vpack.c.b16 %v2906, %v2905
        %v2924 = vpack.c.b16 %v2908, %v2907
        %v2925 = vpack.c.b16 %v2910, %v2909
        %v2926 = vpack.c.b16 %v2912, %v2911
        %v2927 = vpack.c.b16 %v2914, %v2913
        %v2928 = vpack.c.b16 %v2916, %v2915
        %v2929 = vpack.c.b16 %v2918, %v2917
        %v2930 = vpack.c.b16 %v2920, %v2919
        %v2931 = vpack.c.b16 %v2922, %v2921
        %v2933 = vsel %vm484, %v2923, 0
        %v2936 = vsel %vm484, %v2924, 0
        %v2939 = vsel %vm484, %v2925, 0
        %v2942 = vsel %vm484, %v2926, 0
        %v2945 = vsel %vm484, %v2927, 0
        %v2948 = vsel %vm484, %v2928, 0
        %v2951 = vsel %vm484, %v2929, 0
        %v2954 = vsel %vm484, %v2930, 0
        %v2957 = vsel %vm484, %v2931, 0
        %v2960 = vsel %vm512, %v2886, 0
        %2962 = vmatprep.subr.bf16.mxu0 0
        %2963 = vmatpush1.bf16.msra.mxu0 0
        %2964 = vmatprep.subr.bf16.mxu0 0
        %2965 = vmatpush1.bf16.msra.mxu0 0
        %2966 = vmatprep.subr.bf16.mxu0 0
        %2967 = vmatpush1.bf16.msra.mxu0 0
        %2968 = vmatprep.subr.bf16.mxu0 0
        %2969 = vmatpush1.bf16.msra.mxu0 0
        %2970 = vmatprep.subr.bf16.mxu0 0
        %2971 = vmatpush1.bf16.msra.mxu0 0
        %2972 = vmatprep.subr.bf16.mxu0 0
        %2973 = vmatpush1.bf16.msra.mxu0 0
        %2974 = vmatprep.subr.bf16.mxu0 0
        %2975 = vmatpush1.bf16.msra.mxu0 0
        %2976 = vmatprep.subr.bf16.mxu0 0
        %2977 = vmatpush1.bf16.msra.mxu0 %v2960
        %2978 = vmatprep.subr.bf16.mxu0 0
        %2979 = vmatpush2.bf16.msra.mxu0 0
        %2980 = vmatprep.subr.bf16.mxu0 0
        %2981 = vmatpush2.bf16.msra.mxu0 0
        %2982 = vmatprep.subr.bf16.mxu0 0
        %2983 = vmatpush2.bf16.msra.mxu0 0
        %2984 = vmatprep.subr.bf16.mxu0 0
        %2985 = vmatpush2.bf16.msra.mxu0 0
        %2986 = vmatprep.subr.bf16.mxu0 0
        %2987 = vmatpush2.bf16.msra.mxu0 0
        %2988 = vmatprep.subr.bf16.mxu0 0
        %2989 = vmatpush2.bf16.msra.mxu0 0
        %2990 = vmatprep.subr.bf16.mxu0 0
        %2991 = vmatpush2.bf16.msra.mxu0 0
        %2992 = vmatprep.subr.bf16.mxu0 0
        %2993 = vmatpush2.bf16.msra.mxu0 0
        %2994 = vmatprep.mubr.bf16.mxu0 0
        %2995 = vmatmul.mubr.bf16.gmra.mxu0 %v2933
        %v2996 = vpop.f32.mrf.mxu0
        %v2997 = vadd.f32 0.0, %v2996
        %v2998 = vpop.f32.mrf.mxu0
        %v2999 = vpop.f32.mrf.mxu0
        %v3000 = vadd.f32 0.0, %v2999
        %v3001 = vpop.f32.mrf.mxu0
        %3002 = vmatprep.mubr.bf16.mxu0 0
        %3003 = vmatmul.mubr.bf16.gmra.mxu0 %v2936
        %v3004 = vpop.f32.mrf.mxu0
        %v3005 = vadd.f32 0.0, %v3004
        %v3006 = vpop.f32.mrf.mxu0
        %v3007 = vpop.f32.mrf.mxu0
        %v3008 = vadd.f32 0.0, %v3007
        %v3009 = vpop.f32.mrf.mxu0
        %3010 = vmatprep.mubr.bf16.mxu0 0
        %3011 = vmatmul.mubr.bf16.gmra.mxu0 %v2939
        %v3012 = vpop.f32.mrf.mxu0
        %v3013 = vadd.f32 0.0, %v3012
        %v3014 = vpop.f32.mrf.mxu0
        %v3015 = vpop.f32.mrf.mxu0
        %v3016 = vadd.f32 0.0, %v3015
        %v3017 = vpop.f32.mrf.mxu0
        %3018 = vmatprep.mubr.bf16.mxu0 0
        %3019 = vmatmul.mubr.bf16.gmra.mxu0 %v2942
        %v3020 = vpop.f32.mrf.mxu0
        %v3021 = vadd.f32 0.0, %v3020
        %v3022 = vpop.f32.mrf.mxu0
        %v3023 = vpop.f32.mrf.mxu0
        %v3024 = vadd.f32 0.0, %v3023
        %v3025 = vpop.f32.mrf.mxu0
        %3026 = vmatprep.mubr.bf16.mxu0 0
        %3027 = vmatmul.mubr.bf16.gmra.mxu0 %v2945
        %v3028 = vpop.f32.mrf.mxu0
        %v3029 = vadd.f32 0.0, %v3028
        %v3030 = vpop.f32.mrf.mxu0
        %v3031 = vpop.f32.mrf.mxu0
        %v3032 = vadd.f32 0.0, %v3031
        %v3033 = vpop.f32.mrf.mxu0
        %3034 = vmatprep.mubr.bf16.mxu0 0
        %3035 = vmatmul.mubr.bf16.gmra.mxu0 %v2948
        %v3036 = vpop.f32.mrf.mxu0
        %v3037 = vadd.f32 0.0, %v3036
        %v3038 = vpop.f32.mrf.mxu0
        %v3039 = vpop.f32.mrf.mxu0
        %v3040 = vadd.f32 0.0, %v3039
        %v3041 = vpop.f32.mrf.mxu0
        %3042 = vmatprep.mubr.bf16.mxu0 0
        %3043 = vmatmul.mubr.bf16.gmra.mxu0 %v2951
        %v3044 = vpop.f32.mrf.mxu0
        %v3045 = vadd.f32 0.0, %v3044
        %v3046 = vpop.f32.mrf.mxu0
        %v3047 = vpop.f32.mrf.mxu0
        %v3048 = vadd.f32 0.0, %v3047
        %v3049 = vpop.f32.mrf.mxu0
        %3050 = vmatprep.mubr.bf16.mxu0 0
        %3051 = vmatmul.mubr.bf16.gmra.mxu0 %v2954
        %v3052 = vpop.f32.mrf.mxu0
        %v3053 = vadd.f32 0.0, %v3052
        %v3054 = vpop.f32.mrf.mxu0
        %v3055 = vpop.f32.mrf.mxu0
        %v3056 = vadd.f32 0.0, %v3055
        %v3057 = vpop.f32.mrf.mxu0
        %3058 = vmatprep.mubr.bf16.mxu0 0
        %3059 = vmatmul.mubr.bf16.gmra.mxu0 %v2957
        %v3060 = vpop.f32.mrf.mxu0
        %v3061 = vadd.f32 0.0, %v3060
        %v3062 = vpop.f32.mrf.mxu0
        %v3063 = vpop.f32.mrf.mxu0
        %v3064 = vadd.f32 0.0, %v3063
        %v3065 = vpop.f32.mrf.mxu0
        %3066 = vdwg.mxu0
        %v3067 = vadd.f32 %v2845, %v2997
        %v3068 = vadd.f32 %v2846, %v3000
        %v3069 = vadd.f32 %v2847, %v3005
        %v3070 = vadd.f32 %v2848, %v3008
        %v3071 = vadd.f32 %v2849, %v3013
        %v3072 = vadd.f32 %v2850, %v3016
        %v3073 = vadd.f32 %v2851, %v3021
        %v3074 = vadd.f32 %v2852, %v3024
        %v3075 = vadd.f32 %v2853, %v3029
        %v3076 = vadd.f32 %v2854, %v3032
        %v3077 = vadd.f32 %v2855, %v3037
        %v3078 = vadd.f32 %v2856, %v3040
        %v3079 = vadd.f32 %v2857, %v3045
        %v3080 = vadd.f32 %v2858, %v3048
        %v3081 = vadd.f32 %v2859, %v3053
        %v3082 = vadd.f32 %v2860, %v3056
        %v3083 = vadd.f32 %v2861, %v3061
        %v3084 = vadd.f32 %v2862, %v3064
        %v3085 = vld [vmem:[%s2866 + $0x8] sm:$0xf]
        %v3086 = vld [vmem:[%s2866 + $0xc] sm:$0xf]
        %v3087 = vld [vmem:[%s2866 + $0x10] sm:$0x1]
        %v3088 = vld [vmem:[%s2866 + $0x1c] sm:$0xf]
        %v3089 = vld [vmem:[%s2866 + $0x20] sm:$0xf]
        %v3090 = vld [vmem:[%s2866 + $0x24] sm:$0x1]
        %v3091 = vld [vmem:[%s2866 + $0x30] sm:$0xf]
        %v3092 = vld [vmem:[%s2866 + $0x34] sm:$0xf]
        %v3093 = vld [vmem:[%s2866 + $0x38] sm:$0x1]
        %v3094 = vld [vmem:[%s2866 + $0x44] sm:$0xf]
        %v3095 = vld [vmem:[%s2866 + $0x48] sm:$0xf]
        %v3096 = vld [vmem:[%s2866 + $0x4c] sm:$0x1]
        %v3097 = vld [vmem:[%s2866 + $0x58] sm:$0xf]
        %v3098 = vld [vmem:[%s2866 + $0x5c] sm:$0xf]
        %v3099 = vld [vmem:[%s2866 + $0x60] sm:$0x1]
        %v3100 = vld [vmem:[%s2866 + $0x6c] sm:$0xf]
        %v3101 = vld [vmem:[%s2866 + $0x70] sm:$0xf]
        %v3102 = vld [vmem:[%s2866 + $0x74] sm:$0x1]
        %v3103 = vld [vmem:[%s2866 + $0x80] sm:$0xf]
        %v3104 = vld [vmem:[%s2866 + $0x84] sm:$0xf]
        %v3105 = vld [vmem:[%s2866 + $0x88] sm:$0x1]
        %v3106 = vld [vmem:[%s2866 + $0x94] sm:$0xf]
        %v3107 = vld [vmem:[%s2866 + $0x98] sm:$0xf]
        %v3108 = vld [vmem:[%s2866 + $0x9c] sm:$0x1]
        %v3109 = vld [vmem:[%s2866 + $0xa8] sm:$0xf]
        %v3110 = vld [vmem:[%s2866 + $0xac] sm:$0xf]
        %v3111 = vld [vmem:[%s2866 + $0xb0] sm:$0x1]
        %v3113 = vshrl.u32 %v3085, 16
        %v3115 = vrot.slane %v3113, 4
        %v3116 = vshll.u32 %v3085, 16
        %v3118 = vrot.slane %v3116, 5
        %v3119 = vor.u32 %v3115, %v3118
        %v3120 = vrot.slane %v3119, 4
        %v3122 = vshll.u32 %v3086, 16
        %v3124 = vrot.slane %v3122, 5
        %v3125 = vsel %vm238, %v3120, %v3124
        %v3126 = vshrl.u32 %v3086, 16
        %v3128 = vrot.slane %v3126, 4
        %v3129 = vor.u32 %v3128, %v3124
        %v3130 = vrot.slane %v3129, 4
        %v3132 = vshll.u32 %v3087, 16
        %v3134 = vrot.slane %v3132, 5
        %v3135 = vsel %vm238, %v3130, %v3134
        %v3137 = vshrl.u32 %v3088, 16
        %v3139 = vrot.slane %v3137, 4
        %v3140 = vshll.u32 %v3088, 16
        %v3142 = vrot.slane %v3140, 5
        %v3143 = vor.u32 %v3139, %v3142
        %v3144 = vrot.slane %v3143, 4
        %v3146 = vshll.u32 %v3089, 16
        %v3148 = vrot.slane %v3146, 5
        %v3149 = vsel %vm238, %v3144, %v3148
        %v3150 = vshrl.u32 %v3089, 16
        %v3152 = vrot.slane %v3150, 4
        %v3153 = vor.u32 %v3152, %v3148
        %v3154 = vrot.slane %v3153, 4
        %v3156 = vshll.u32 %v3090, 16
        %v3158 = vrot.slane %v3156, 5
        %v3159 = vsel %vm238, %v3154, %v3158
        %v3161 = vshrl.u32 %v3091, 16
        %v3163 = vrot.slane %v3161, 4
        %v3164 = vshll.u32 %v3091, 16
        %v3166 = vrot.slane %v3164, 5
        %v3167 = vor.u32 %v3163, %v3166
        %v3168 = vrot.slane %v3167, 4
        %v3170 = vshll.u32 %v3092, 16
        %v3172 = vrot.slane %v3170, 5
        %v3173 = vsel %vm238, %v3168, %v3172
        %v3174 = vshrl.u32 %v3092, 16
        %v3176 = vrot.slane %v3174, 4
        %v3177 = vor.u32 %v3176, %v3172
        %v3178 = vrot.slane %v3177, 4
        %v3180 = vshll.u32 %v3093, 16
        %v3182 = vrot.slane %v3180, 5
        %v3183 = vsel %vm238, %v3178, %v3182
        %v3185 = vshrl.u32 %v3094, 16
        %v3187 = vrot.slane %v3185, 4
        %v3188 = vshll.u32 %v3094, 16
        %v3190 = vrot.slane %v3188, 5
        %v3191 = vor.u32 %v3187, %v3190
        %v3192 = vrot.slane %v3191, 4
        %v3194 = vshll.u32 %v3095, 16
        %v3196 = vrot.slane %v3194, 5
        %v3197 = vsel %vm238, %v3192, %v3196
        %v3198 = vshrl.u32 %v3095, 16
        %v3200 = vrot.slane %v3198, 4
        %v3201 = vor.u32 %v3200, %v3196
        %v3202 = vrot.slane %v3201, 4
        %v3204 = vshll.u32 %v3096, 16
        %v3206 = vrot.slane %v3204, 5
        %v3207 = vsel %vm238, %v3202, %v3206
        %v3209 = vshrl.u32 %v3097, 16
        %v3211 = vrot.slane %v3209, 4
        %v3212 = vshll.u32 %v3097, 16
        %v3214 = vrot.slane %v3212, 5
        %v3215 = vor.u32 %v3211, %v3214
        %v3216 = vrot.slane %v3215, 4
        %v3218 = vshll.u32 %v3098, 16
        %v3220 = vrot.slane %v3218, 5
        %v3221 = vsel %vm238, %v3216, %v3220
        %v3222 = vshrl.u32 %v3098, 16
        %v3224 = vrot.slane %v3222, 4
        %v3225 = vor.u32 %v3224, %v3220
        %v3226 = vrot.slane %v3225, 4
        %v3228 = vshll.u32 %v3099, 16
        %v3230 = vrot.slane %v3228, 5
        %v3231 = vsel %vm238, %v3226, %v3230
        %v3233 = vshrl.u32 %v3100, 16
        %v3235 = vrot.slane %v3233, 4
        %v3236 = vshll.u32 %v3100, 16
        %v3238 = vrot.slane %v3236, 5
        %v3239 = vor.u32 %v3235, %v3238
        %v3240 = vrot.slane %v3239, 4
        %v3242 = vshll.u32 %v3101, 16
        %v3244 = vrot.slane %v3242, 5
        %v3245 = vsel %vm238, %v3240, %v3244
        %v3246 = vshrl.u32 %v3101, 16
        %v3248 = vrot.slane %v3246, 4
        %v3249 = vor.u32 %v3248, %v3244
        %v3250 = vrot.slane %v3249, 4
        %v3252 = vshll.u32 %v3102, 16
        %v3254 = vrot.slane %v3252, 5
        %v3255 = vsel %vm238, %v3250, %v3254
        %v3257 = vshrl.u32 %v3103, 16
        %v3259 = vrot.slane %v3257, 4
        %v3260 = vshll.u32 %v3103, 16
        %v3262 = vrot.slane %v3260, 5
        %v3263 = vor.u32 %v3259, %v3262
        %v3264 = vrot.slane %v3263, 4
        %v3266 = vshll.u32 %v3104, 16
        %v3268 = vrot.slane %v3266, 5
        %v3269 = vsel %vm238, %v3264, %v3268
        %v3270 = vshrl.u32 %v3104, 16
        %v3272 = vrot.slane %v3270, 4
        %v3273 = vor.u32 %v3272, %v3268
        %v3274 = vrot.slane %v3273, 4
        %v3276 = vshll.u32 %v3105, 16
        %v3278 = vrot.slane %v3276, 5
        %v3279 = vsel %vm238, %v3274, %v3278
        %v3281 = vshrl.u32 %v3106, 16
        %v3283 = vrot.slane %v3281, 4
        %v3284 = vshll.u32 %v3106, 16
        %v3286 = vrot.slane %v3284, 5
        %v3287 = vor.u32 %v3283, %v3286
        %v3288 = vrot.slane %v3287, 4
        %v3290 = vshll.u32 %v3107, 16
        %v3292 = vrot.slane %v3290, 5
        %v3293 = vsel %vm238, %v3288, %v3292
        %v3294 = vshrl.u32 %v3107, 16
        %v3296 = vrot.slane %v3294, 4
        %v3297 = vor.u32 %v3296, %v3292
        %v3298 = vrot.slane %v3297, 4
        %v3300 = vshll.u32 %v3108, 16
        %v3302 = vrot.slane %v3300, 5
        %v3303 = vsel %vm238, %v3298, %v3302
        %v3305 = vshrl.u32 %v3109, 16
        %v3307 = vrot.slane %v3305, 4
        %v3308 = vshll.u32 %v3109, 16
        %v3310 = vrot.slane %v3308, 5
        %v3311 = vor.u32 %v3307, %v3310
        %v3312 = vrot.slane %v3311, 4
        %v3314 = vshll.u32 %v3110, 16
        %v3316 = vrot.slane %v3314, 5
        %v3317 = vsel %vm238, %v3312, %v3316
        %v3318 = vshrl.u32 %v3110, 16
        %v3320 = vrot.slane %v3318, 4
        %v3321 = vor.u32 %v3320, %v3316
        %v3322 = vrot.slane %v3321, 4
        %v3324 = vshll.u32 %v3111, 16
        %v3326 = vrot.slane %v3324, 5
        %v3327 = vsel %vm238, %v3322, %v3326
        %s3328 = scalar_lea.vmem %s1, 18
        %v3329 = vld [vmem:[%s3328] sm:$0x3]
        %v3330 = vunpack.c.l.b16 %v3125
        %v3331 = vunpack.c.l.b16 %v3135
        %v3332 = vunpack.c.l.b16 %v3149
        %v3333 = vunpack.c.l.b16 %v3159
        %v3334 = vunpack.c.l.b16 %v3173
        %v3335 = vunpack.c.l.b16 %v3183
        %v3336 = vunpack.c.l.b16 %v3197
        %v3337 = vunpack.c.l.b16 %v3207
        %v3338 = vunpack.c.l.b16 %v3221
        %v3339 = vunpack.c.l.b16 %v3231
        %v3340 = vunpack.c.l.b16 %v3245
        %v3341 = vunpack.c.l.b16 %v3255
        %v3342 = vunpack.c.l.b16 %v3269
        %v3343 = vunpack.c.l.b16 %v3279
        %v3344 = vunpack.c.l.b16 %v3293
        %v3345 = vunpack.c.l.b16 %v3303
        %v3346 = vunpack.c.l.b16 %v3317
        %v3347 = vunpack.c.l.b16 %v3327
        %v3348 = vpack.c.b16 %v3331, %v3330
        %v3349 = vpack.c.b16 %v3333, %v3332
        %v3350 = vpack.c.b16 %v3335, %v3334
        %v3351 = vpack.c.b16 %v3337, %v3336
        %v3352 = vpack.c.b16 %v3339, %v3338
        %v3353 = vpack.c.b16 %v3341, %v3340
        %v3354 = vpack.c.b16 %v3343, %v3342
        %v3355 = vpack.c.b16 %v3345, %v3344
        %v3356 = vpack.c.b16 %v3347, %v3346
        %v3358 = vsel %vm484, %v3348, 0
        %v3361 = vsel %vm484, %v3349, 0
        %v3364 = vsel %vm484, %v3350, 0
        %v3367 = vsel %vm484, %v3351, 0
        %v3370 = vsel %vm484, %v3352, 0
        %v3373 = vsel %vm484, %v3353, 0
        %v3376 = vsel %vm484, %v3354, 0
        %v3379 = vsel %vm484, %v3355, 0
        %v3382 = vsel %vm484, %v3356, 0
        %v3385 = vsel %vm512, %v3329, 0
        %3387 = vmatprep.subr.bf16.mxu0 0
        %3388 = vmatpush1.bf16.msra.mxu0 0
        %3389 = vmatprep.subr.bf16.mxu0 0
        %3390 = vmatpush1.bf16.msra.mxu0 0
        %3391 = vmatprep.subr.bf16.mxu0 0
        %3392 = vmatpush1.bf16.msra.mxu0 0
        %3393 = vmatprep.subr.bf16.mxu0 0
        %3394 = vmatpush1.bf16.msra.mxu0 0
        %3395 = vmatprep.subr.bf16.mxu0 0
        %3396 = vmatpush1.bf16.msra.mxu0 0
        %3397 = vmatprep.subr.bf16.mxu0 0
        %3398 = vmatpush1.bf16.msra.mxu0 0
        %3399 = vmatprep.subr.bf16.mxu0 0
        %3400 = vmatpush1.bf16.msra.mxu0 0
        %3401 = vmatprep.subr.bf16.mxu0 0
        %3402 = vmatpush1.bf16.msra.mxu0 %v3385
        %3403 = vmatprep.subr.bf16.mxu0 0
        %3404 = vmatpush2.bf16.msra.mxu0 0
        %3405 = vmatprep.subr.bf16.mxu0 0
        %3406 = vmatpush2.bf16.msra.mxu0 0
        %3407 = vmatprep.subr.bf16.mxu0 0
        %3408 = vmatpush2.bf16.msra.mxu0 0
        %3409 = vmatprep.subr.bf16.mxu0 0
        %3410 = vmatpush2.bf16.msra.mxu0 0
        %3411 = vmatprep.subr.bf16.mxu0 0
        %3412 = vmatpush2.bf16.msra.mxu0 0
        %3413 = vmatprep.subr.bf16.mxu0 0
        %3414 = vmatpush2.bf16.msra.mxu0 0
        %3415 = vmatprep.subr.bf16.mxu0 0
        %3416 = vmatpush2.bf16.msra.mxu0 0
        %3417 = vmatprep.subr.bf16.mxu0 0
        %3418 = vmatpush2.bf16.msra.mxu0 0
        %3419 = vmatprep.mubr.bf16.mxu0 0
        %3420 = vmatmul.mubr.bf16.gmra.mxu0 %v3358
        %v3421 = vpop.f32.mrf.mxu0
        %v3422 = vadd.f32 0.0, %v3421
        %v3423 = vpop.f32.mrf.mxu0
        %v3424 = vpop.f32.mrf.mxu0
        %v3425 = vadd.f32 0.0, %v3424
        %v3426 = vpop.f32.mrf.mxu0
        %3427 = vmatprep.mubr.bf16.mxu0 0
        %3428 = vmatmul.mubr.bf16.gmra.mxu0 %v3361
        %v3429 = vpop.f32.mrf.mxu0
        %v3430 = vadd.f32 0.0, %v3429
        %v3431 = vpop.f32.mrf.mxu0
        %v3432 = vpop.f32.mrf.mxu0
        %v3433 = vadd.f32 0.0, %v3432
        %v3434 = vpop.f32.mrf.mxu0
        %3435 = vmatprep.mubr.bf16.mxu0 0
        %3436 = vmatmul.mubr.bf16.gmra.mxu0 %v3364
        %v3437 = vpop.f32.mrf.mxu0
        %v3438 = vadd.f32 0.0, %v3437
        %v3439 = vpop.f32.mrf.mxu0
        %v3440 = vpop.f32.mrf.mxu0
        %v3441 = vadd.f32 0.0, %v3440
        %v3442 = vpop.f32.mrf.mxu0
        %3443 = vmatprep.mubr.bf16.mxu0 0
        %3444 = vmatmul.mubr.bf16.gmra.mxu0 %v3367
        %v3445 = vpop.f32.mrf.mxu0
        %v3446 = vadd.f32 0.0, %v3445
        %v3447 = vpop.f32.mrf.mxu0
        %v3448 = vpop.f32.mrf.mxu0
        %v3449 = vadd.f32 0.0, %v3448
        %v3450 = vpop.f32.mrf.mxu0
        %3451 = vmatprep.mubr.bf16.mxu0 0
        %3452 = vmatmul.mubr.bf16.gmra.mxu0 %v3370
        %v3453 = vpop.f32.mrf.mxu0
        %v3454 = vadd.f32 0.0, %v3453
        %v3455 = vpop.f32.mrf.mxu0
        %v3456 = vpop.f32.mrf.mxu0
        %v3457 = vadd.f32 0.0, %v3456
        %v3458 = vpop.f32.mrf.mxu0
        %3459 = vmatprep.mubr.bf16.mxu0 0
        %3460 = vmatmul.mubr.bf16.gmra.mxu0 %v3373
        %v3461 = vpop.f32.mrf.mxu0
        %v3462 = vadd.f32 0.0, %v3461
        %v3463 = vpop.f32.mrf.mxu0
        %v3464 = vpop.f32.mrf.mxu0
        %v3465 = vadd.f32 0.0, %v3464
        %v3466 = vpop.f32.mrf.mxu0
        %3467 = vmatprep.mubr.bf16.mxu0 0
        %3468 = vmatmul.mubr.bf16.gmra.mxu0 %v3376
        %v3469 = vpop.f32.mrf.mxu0
        %v3470 = vadd.f32 0.0, %v3469
        %v3471 = vpop.f32.mrf.mxu0
        %v3472 = vpop.f32.mrf.mxu0
        %v3473 = vadd.f32 0.0, %v3472
        %v3474 = vpop.f32.mrf.mxu0
        %3475 = vmatprep.mubr.bf16.mxu0 0
        %3476 = vmatmul.mubr.bf16.gmra.mxu0 %v3379
        %v3477 = vpop.f32.mrf.mxu0
        %v3478 = vadd.f32 0.0, %v3477
        %v3479 = vpop.f32.mrf.mxu0
        %v3480 = vpop.f32.mrf.mxu0
        %v3481 = vadd.f32 0.0, %v3480
        %v3482 = vpop.f32.mrf.mxu0
        %3483 = vmatprep.mubr.bf16.mxu0 0
        %3484 = vmatmul.mubr.bf16.gmra.mxu0 %v3382
        %v3485 = vpop.f32.mrf.mxu0
        %v3486 = vadd.f32 0.0, %v3485
        %v3487 = vpop.f32.mrf.mxu0
        %v3488 = vpop.f32.mrf.mxu0
        %v3489 = vadd.f32 0.0, %v3488
        %v3490 = vpop.f32.mrf.mxu0
        %3491 = vdwg.mxu0
        %v3492 = vadd.f32 %v3067, %v3422
        %v3493 = vadd.f32 %v3068, %v3425
        %v3494 = vadd.f32 %v3069, %v3430
        %v3495 = vadd.f32 %v3070, %v3433
        %v3496 = vadd.f32 %v3071, %v3438
        %v3497 = vadd.f32 %v3072, %v3441
        %v3498 = vadd.f32 %v3073, %v3446
        %v3499 = vadd.f32 %v3074, %v3449
        %v3500 = vadd.f32 %v3075, %v3454
        %v3501 = vadd.f32 %v3076, %v3457
        %v3502 = vadd.f32 %v3077, %v3462
        %v3503 = vadd.f32 %v3078, %v3465
        %v3504 = vadd.f32 %v3079, %v3470
        %v3505 = vadd.f32 %v3080, %v3473
        %v3506 = vadd.f32 %v3081, %v3478
        %v3507 = vadd.f32 %v3082, %v3481
        %v3508 = vadd.f32 %v3083, %v3486
        %v3509 = vadd.f32 %v3084, %v3489
        %v3510 = vld [vmem:[%s2866] sm:$0xf]
        %v3511 = vld [vmem:[%s2866 + $0x4] sm:$0xf]
        %v3512 = vld [vmem:[%s2866 + $0x8] sm:$0x1]
        %v3513 = vld [vmem:[%s2866 + $0x14] sm:$0xf]
        %v3514 = vld [vmem:[%s2866 + $0x18] sm:$0xf]
        %v3515 = vld [vmem:[%s2866 + $0x1c] sm:$0x1]
        %v3516 = vld [vmem:[%s2866 + $0x28] sm:$0xf]
        %v3517 = vld [vmem:[%s2866 + $0x2c] sm:$0xf]
        %v3518 = vld [vmem:[%s2866 + $0x30] sm:$0x1]
        %v3519 = vld [vmem:[%s2866 + $0x3c] sm:$0xf]
        %v3520 = vld [vmem:[%s2866 + $0x40] sm:$0xf]
        %v3521 = vld [vmem:[%s2866 + $0x44] sm:$0x1]
        %v3522 = vld [vmem:[%s2866 + $0x50] sm:$0xf]
        %v3523 = vld [vmem:[%s2866 + $0x54] sm:$0xf]
        %v3524 = vld [vmem:[%s2866 + $0x58] sm:$0x1]
        %v3525 = vld [vmem:[%s2866 + $0x64] sm:$0xf]
        %v3526 = vld [vmem:[%s2866 + $0x68] sm:$0xf]
        %v3527 = vld [vmem:[%s2866 + $0x6c] sm:$0x1]
        %v3528 = vld [vmem:[%s2866 + $0x78] sm:$0xf]
        %v3529 = vld [vmem:[%s2866 + $0x7c] sm:$0xf]
        %v3530 = vld [vmem:[%s2866 + $0x80] sm:$0x1]
        %v3531 = vld [vmem:[%s2866 + $0x8c] sm:$0xf]
        %v3532 = vld [vmem:[%s2866 + $0x90] sm:$0xf]
        %v3533 = vld [vmem:[%s2866 + $0x94] sm:$0x1]
        %v3534 = vld [vmem:[%s2866 + $0xa0] sm:$0xf]
        %v3535 = vld [vmem:[%s2866 + $0xa4] sm:$0xf]
        %v3536 = vld [vmem:[%s2866 + $0xa8] sm:$0x1]
        %v3538 = vshrl.u32 %v3510, 16
        %v3540 = vrot.slane %v3538, 4
        %v3541 = vshll.u32 %v3510, 16
        %v3543 = vrot.slane %v3541, 5
        %v3544 = vor.u32 %v3540, %v3543
        %v3545 = vrot.slane %v3544, 4
        %v3547 = vshll.u32 %v3511, 16
        %v3549 = vrot.slane %v3547, 5
        %v3550 = vsel %vm238, %v3545, %v3549
        %v3551 = vshrl.u32 %v3511, 16
        %v3553 = vrot.slane %v3551, 4
        %v3554 = vor.u32 %v3553, %v3549
        %v3555 = vrot.slane %v3554, 4
        %v3557 = vshll.u32 %v3512, 16
        %v3559 = vrot.slane %v3557, 5
        %v3560 = vsel %vm238, %v3555, %v3559
        %v3562 = vshrl.u32 %v3513, 16
        %v3564 = vrot.slane %v3562, 4
        %v3565 = vshll.u32 %v3513, 16
        %v3567 = vrot.slane %v3565, 5
        %v3568 = vor.u32 %v3564, %v3567
        %v3569 = vrot.slane %v3568, 4
        %v3571 = vshll.u32 %v3514, 16
        %v3573 = vrot.slane %v3571, 5
        %v3574 = vsel %vm238, %v3569, %v3573
        %v3575 = vshrl.u32 %v3514, 16
        %v3577 = vrot.slane %v3575, 4
        %v3578 = vor.u32 %v3577, %v3573
        %v3579 = vrot.slane %v3578, 4
        %v3581 = vshll.u32 %v3515, 16
        %v3583 = vrot.slane %v3581, 5
        %v3584 = vsel %vm238, %v3579, %v3583
        %v3586 = vshrl.u32 %v3516, 16
        %v3588 = vrot.slane %v3586, 4
        %v3589 = vshll.u32 %v3516, 16
        %v3591 = vrot.slane %v3589, 5
        %v3592 = vor.u32 %v3588, %v3591
        %v3593 = vrot.slane %v3592, 4
        %v3595 = vshll.u32 %v3517, 16
        %v3597 = vrot.slane %v3595, 5
        %v3598 = vsel %vm238, %v3593, %v3597
        %v3599 = vshrl.u32 %v3517, 16
        %v3601 = vrot.slane %v3599, 4
        %v3602 = vor.u32 %v3601, %v3597
        %v3603 = vrot.slane %v3602, 4
        %v3605 = vshll.u32 %v3518, 16
        %v3607 = vrot.slane %v3605, 5
        %v3608 = vsel %vm238, %v3603, %v3607
        %v3610 = vshrl.u32 %v3519, 16
        %v3612 = vrot.slane %v3610, 4
        %v3613 = vshll.u32 %v3519, 16
        %v3615 = vrot.slane %v3613, 5
        %v3616 = vor.u32 %v3612, %v3615
        %v3617 = vrot.slane %v3616, 4
        %v3619 = vshll.u32 %v3520, 16
        %v3621 = vrot.slane %v3619, 5
        %v3622 = vsel %vm238, %v3617, %v3621
        %v3623 = vshrl.u32 %v3520, 16
        %v3625 = vrot.slane %v3623, 4
        %v3626 = vor.u32 %v3625, %v3621
        %v3627 = vrot.slane %v3626, 4
        %v3629 = vshll.u32 %v3521, 16
        %v3631 = vrot.slane %v3629, 5
        %v3632 = vsel %vm238, %v3627, %v3631
        %v3634 = vshrl.u32 %v3522, 16
        %v3636 = vrot.slane %v3634, 4
        %v3637 = vshll.u32 %v3522, 16
        %v3639 = vrot.slane %v3637, 5
        %v3640 = vor.u32 %v3636, %v3639
        %v3641 = vrot.slane %v3640, 4
        %v3643 = vshll.u32 %v3523, 16
        %v3645 = vrot.slane %v3643, 5
        %v3646 = vsel %vm238, %v3641, %v3645
        %v3647 = vshrl.u32 %v3523, 16
        %v3649 = vrot.slane %v3647, 4
        %v3650 = vor.u32 %v3649, %v3645
        %v3651 = vrot.slane %v3650, 4
        %v3653 = vshll.u32 %v3524, 16
        %v3655 = vrot.slane %v3653, 5
        %v3656 = vsel %vm238, %v3651, %v3655
        %v3658 = vshrl.u32 %v3525, 16
        %v3660 = vrot.slane %v3658, 4
        %v3661 = vshll.u32 %v3525, 16
        %v3663 = vrot.slane %v3661, 5
        %v3664 = vor.u32 %v3660, %v3663
        %v3665 = vrot.slane %v3664, 4
        %v3667 = vshll.u32 %v3526, 16
        %v3669 = vrot.slane %v3667, 5
        %v3670 = vsel %vm238, %v3665, %v3669
        %v3671 = vshrl.u32 %v3526, 16
        %v3673 = vrot.slane %v3671, 4
        %v3674 = vor.u32 %v3673, %v3669
        %v3675 = vrot.slane %v3674, 4
        %v3677 = vshll.u32 %v3527, 16
        %v3679 = vrot.slane %v3677, 5
        %v3680 = vsel %vm238, %v3675, %v3679
        %v3682 = vshrl.u32 %v3528, 16
        %v3684 = vrot.slane %v3682, 4
        %v3685 = vshll.u32 %v3528, 16
        %v3687 = vrot.slane %v3685, 5
        %v3688 = vor.u32 %v3684, %v3687
        %v3689 = vrot.slane %v3688, 4
        %v3691 = vshll.u32 %v3529, 16
        %v3693 = vrot.slane %v3691, 5
        %v3694 = vsel %vm238, %v3689, %v3693
        %v3695 = vshrl.u32 %v3529, 16
        %v3697 = vrot.slane %v3695, 4
        %v3698 = vor.u32 %v3697, %v3693
        %v3699 = vrot.slane %v3698, 4
        %v3701 = vshll.u32 %v3530, 16
        %v3703 = vrot.slane %v3701, 5
        %v3704 = vsel %vm238, %v3699, %v3703
        %v3706 = vshrl.u32 %v3531, 16
        %v3708 = vrot.slane %v3706, 4
        %v3709 = vshll.u32 %v3531, 16
        %v3711 = vrot.slane %v3709, 5
        %v3712 = vor.u32 %v3708, %v3711
        %v3713 = vrot.slane %v3712, 4
        %v3715 = vshll.u32 %v3532, 16
        %v3717 = vrot.slane %v3715, 5
        %v3718 = vsel %vm238, %v3713, %v3717
        %v3719 = vshrl.u32 %v3532, 16
        %v3721 = vrot.slane %v3719, 4
        %v3722 = vor.u32 %v3721, %v3717
        %v3723 = vrot.slane %v3722, 4
        %v3725 = vshll.u32 %v3533, 16
        %v3727 = vrot.slane %v3725, 5
        %v3728 = vsel %vm238, %v3723, %v3727
        %v3730 = vshrl.u32 %v3534, 16
        %v3732 = vrot.slane %v3730, 4
        %v3733 = vshll.u32 %v3534, 16
        %v3735 = vrot.slane %v3733, 5
        %v3736 = vor.u32 %v3732, %v3735
        %v3737 = vrot.slane %v3736, 4
        %v3739 = vshll.u32 %v3535, 16
        %v3741 = vrot.slane %v3739, 5
        %v3742 = vsel %vm238, %v3737, %v3741
        %v3743 = vshrl.u32 %v3535, 16
        %v3745 = vrot.slane %v3743, 4
        %v3746 = vor.u32 %v3745, %v3741
        %v3747 = vrot.slane %v3746, 4
        %v3749 = vshll.u32 %v3536, 16
        %v3751 = vrot.slane %v3749, 5
        %v3752 = vsel %vm238, %v3747, %v3751
        %s3753 = scalar_lea.vmem %s1, 20
        %v3754 = vld [vmem:[%s3753] sm:$0x3]
        %v3755 = vunpack.c.l.b16 %v3550
        %v3756 = vunpack.c.l.b16 %v3560
        %v3757 = vunpack.c.l.b16 %v3574
        %v3758 = vunpack.c.l.b16 %v3584
        %v3759 = vunpack.c.l.b16 %v3598
        %v3760 = vunpack.c.l.b16 %v3608
        %v3761 = vunpack.c.l.b16 %v3622
        %v3762 = vunpack.c.l.b16 %v3632
        %v3763 = vunpack.c.l.b16 %v3646
        %v3764 = vunpack.c.l.b16 %v3656
        %v3765 = vunpack.c.l.b16 %v3670
        %v3766 = vunpack.c.l.b16 %v3680
        %v3767 = vunpack.c.l.b16 %v3694
        %v3768 = vunpack.c.l.b16 %v3704
        %v3769 = vunpack.c.l.b16 %v3718
        %v3770 = vunpack.c.l.b16 %v3728
        %v3771 = vunpack.c.l.b16 %v3742
        %v3772 = vunpack.c.l.b16 %v3752
        %v3773 = vpack.c.b16 %v3756, %v3755
        %v3774 = vpack.c.b16 %v3758, %v3757
        %v3775 = vpack.c.b16 %v3760, %v3759
        %v3776 = vpack.c.b16 %v3762, %v3761
        %v3777 = vpack.c.b16 %v3764, %v3763
        %v3778 = vpack.c.b16 %v3766, %v3765
        %v3779 = vpack.c.b16 %v3768, %v3767
        %v3780 = vpack.c.b16 %v3770, %v3769
        %v3781 = vpack.c.b16 %v3772, %v3771
        %v3783 = vsel %vm484, %v3773, 0
        %v3786 = vsel %vm484, %v3774, 0
        %v3789 = vsel %vm484, %v3775, 0
        %v3792 = vsel %vm484, %v3776, 0
        %v3795 = vsel %vm484, %v3777, 0
        %v3798 = vsel %vm484, %v3778, 0
        %v3801 = vsel %vm484, %v3779, 0
        %v3804 = vsel %vm484, %v3780, 0
        %v3807 = vsel %vm484, %v3781, 0
        %v3810 = vsel %vm512, %v3754, 0
        %3812 = vmatprep.subr.bf16.mxu0 0
        %3813 = vmatpush1.bf16.msra.mxu0 0
        %3814 = vmatprep.subr.bf16.mxu0 0
        %3815 = vmatpush1.bf16.msra.mxu0 0
        %3816 = vmatprep.subr.bf16.mxu0 0
        %3817 = vmatpush1.bf16.msra.mxu0 0
        %3818 = vmatprep.subr.bf16.mxu0 0
        %3819 = vmatpush1.bf16.msra.mxu0 0
        %3820 = vmatprep.subr.bf16.mxu0 0
        %3821 = vmatpush1.bf16.msra.mxu0 0
        %3822 = vmatprep.subr.bf16.mxu0 0
        %3823 = vmatpush1.bf16.msra.mxu0 0
        %3824 = vmatprep.subr.bf16.mxu0 0
        %3825 = vmatpush1.bf16.msra.mxu0 0
        %3826 = vmatprep.subr.bf16.mxu0 0
        %3827 = vmatpush1.bf16.msra.mxu0 %v3810
        %3828 = vmatprep.subr.bf16.mxu0 0
        %3829 = vmatpush2.bf16.msra.mxu0 0
        %3830 = vmatprep.subr.bf16.mxu0 0
        %3831 = vmatpush2.bf16.msra.mxu0 0
        %3832 = vmatprep.subr.bf16.mxu0 0
        %3833 = vmatpush2.bf16.msra.mxu0 0
        %3834 = vmatprep.subr.bf16.mxu0 0
        %3835 = vmatpush2.bf16.msra.mxu0 0
        %3836 = vmatprep.subr.bf16.mxu0 0
        %3837 = vmatpush2.bf16.msra.mxu0 0
        %3838 = vmatprep.subr.bf16.mxu0 0
        %3839 = vmatpush2.bf16.msra.mxu0 0
        %3840 = vmatprep.subr.bf16.mxu0 0
        %3841 = vmatpush2.bf16.msra.mxu0 0
        %3842 = vmatprep.subr.bf16.mxu0 0
        %3843 = vmatpush2.bf16.msra.mxu0 0
        %3844 = vmatprep.mubr.bf16.mxu0 0
        %3845 = vmatmul.mubr.bf16.gmra.mxu0 %v3783
        %v3846 = vpop.f32.mrf.mxu0
        %v3847 = vadd.f32 0.0, %v3846
        %v3848 = vpop.f32.mrf.mxu0
        %v3849 = vpop.f32.mrf.mxu0
        %v3850 = vadd.f32 0.0, %v3849
        %v3851 = vpop.f32.mrf.mxu0
        %3852 = vmatprep.mubr.bf16.mxu0 0
        %3853 = vmatmul.mubr.bf16.gmra.mxu0 %v3786
        %v3854 = vpop.f32.mrf.mxu0
        %v3855 = vadd.f32 0.0, %v3854
        %v3856 = vpop.f32.mrf.mxu0
        %v3857 = vpop.f32.mrf.mxu0
        %v3858 = vadd.f32 0.0, %v3857
        %v3859 = vpop.f32.mrf.mxu0
        %3860 = vmatprep.mubr.bf16.mxu0 0
        %3861 = vmatmul.mubr.bf16.gmra.mxu0 %v3789
        %v3862 = vpop.f32.mrf.mxu0
        %v3863 = vadd.f32 0.0, %v3862
        %v3864 = vpop.f32.mrf.mxu0
        %v3865 = vpop.f32.mrf.mxu0
        %v3866 = vadd.f32 0.0, %v3865
        %v3867 = vpop.f32.mrf.mxu0
        %3868 = vmatprep.mubr.bf16.mxu0 0
        %3869 = vmatmul.mubr.bf16.gmra.mxu0 %v3792
        %v3870 = vpop.f32.mrf.mxu0
        %v3871 = vadd.f32 0.0, %v3870
        %v3872 = vpop.f32.mrf.mxu0
        %v3873 = vpop.f32.mrf.mxu0
        %v3874 = vadd.f32 0.0, %v3873
        %v3875 = vpop.f32.mrf.mxu0
        %3876 = vmatprep.mubr.bf16.mxu0 0
        %3877 = vmatmul.mubr.bf16.gmra.mxu0 %v3795
        %v3878 = vpop.f32.mrf.mxu0
        %v3879 = vadd.f32 0.0, %v3878
        %v3880 = vpop.f32.mrf.mxu0
        %v3881 = vpop.f32.mrf.mxu0
        %v3882 = vadd.f32 0.0, %v3881
        %v3883 = vpop.f32.mrf.mxu0
        %3884 = vmatprep.mubr.bf16.mxu0 0
        %3885 = vmatmul.mubr.bf16.gmra.mxu0 %v3798
        %v3886 = vpop.f32.mrf.mxu0
        %v3887 = vadd.f32 0.0, %v3886
        %v3888 = vpop.f32.mrf.mxu0
        %v3889 = vpop.f32.mrf.mxu0
        %v3890 = vadd.f32 0.0, %v3889
        %v3891 = vpop.f32.mrf.mxu0
        %3892 = vmatprep.mubr.bf16.mxu0 0
        %3893 = vmatmul.mubr.bf16.gmra.mxu0 %v3801
        %v3894 = vpop.f32.mrf.mxu0
        %v3895 = vadd.f32 0.0, %v3894
        %v3896 = vpop.f32.mrf.mxu0
        %v3897 = vpop.f32.mrf.mxu0
        %v3898 = vadd.f32 0.0, %v3897
        %v3899 = vpop.f32.mrf.mxu0
        %3900 = vmatprep.mubr.bf16.mxu0 0
        %3901 = vmatmul.mubr.bf16.gmra.mxu0 %v3804
        %v3902 = vpop.f32.mrf.mxu0
        %v3903 = vadd.f32 0.0, %v3902
        %v3904 = vpop.f32.mrf.mxu0
        %v3905 = vpop.f32.mrf.mxu0
        %v3906 = vadd.f32 0.0, %v3905
        %v3907 = vpop.f32.mrf.mxu0
        %3908 = vmatprep.mubr.bf16.mxu0 0
        %3909 = vmatmul.mubr.bf16.gmra.mxu0 %v3807
        %v3910 = vpop.f32.mrf.mxu0
        %v3911 = vadd.f32 0.0, %v3910
        %v3912 = vpop.f32.mrf.mxu0
        %v3913 = vpop.f32.mrf.mxu0
        %v3914 = vadd.f32 0.0, %v3913
        %v3915 = vpop.f32.mrf.mxu0
        %3916 = vdwg.mxu0
        %v3917 = vadd.f32 %v3492, %v3847
        %v3918 = vadd.f32 %v3493, %v3850
        %v3919 = vadd.f32 %v3494, %v3855
        %v3920 = vadd.f32 %v3495, %v3858
        %v3921 = vadd.f32 %v3496, %v3863
        %v3922 = vadd.f32 %v3497, %v3866
        %v3923 = vadd.f32 %v3498, %v3871
        %v3924 = vadd.f32 %v3499, %v3874
        %v3925 = vadd.f32 %v3500, %v3879
        %v3926 = vadd.f32 %v3501, %v3882
        %v3927 = vadd.f32 %v3502, %v3887
        %v3928 = vadd.f32 %v3503, %v3890
        %v3929 = vadd.f32 %v3504, %v3895
        %v3930 = vadd.f32 %v3505, %v3898
        %v3931 = vadd.f32 %v3506, %v3903
        %v3932 = vadd.f32 %v3507, %v3906
        %v3933 = vadd.f32 %v3508, %v3911
        %v3934 = vadd.f32 %v3509, %v3914
        %v3935 = vld [vmem:[%s2866 + $0x8] sm:$0xe]
        %v3936 = vld [vmem:[%s2866 + $0x1c] sm:$0xe]
        %v3937 = vld [vmem:[%s2866 + $0x30] sm:$0xe]
        %v3938 = vld [vmem:[%s2866 + $0x44] sm:$0xe]
        %v3939 = vld [vmem:[%s2866 + $0x58] sm:$0xe]
        %v3940 = vld [vmem:[%s2866 + $0x6c] sm:$0xe]
        %v3941 = vld [vmem:[%s2866 + $0x80] sm:$0xe]
        %v3942 = vld [vmem:[%s2866 + $0x94] sm:$0xe]
        %v3943 = vld [vmem:[%s2866 + $0xa8] sm:$0xe]
        %v3971 = vrot.slane %v3935, 5
        %v3972 = vrot.slane %v3971, 4
        %v3973 = vrot.slane %v3086, 5
        %v3974 = vsel %vm1264, %v3972, %v3973
        %v3975 = vrot.slane %v3973, 4
        %v3976 = vrot.slane %v3087, 5
        %v3977 = vsel %vm1264, %v3975, %v3976
        %v3978 = vrot.slane %v3936, 5
        %v3979 = vrot.slane %v3978, 4
        %v3980 = vrot.slane %v3089, 5
        %v3981 = vsel %vm1264, %v3979, %v3980
        %v3982 = vrot.slane %v3980, 4
        %v3983 = vrot.slane %v3090, 5
        %v3984 = vsel %vm1264, %v3982, %v3983
        %v3985 = vrot.slane %v3937, 5
        %v3986 = vrot.slane %v3985, 4
        %v3987 = vrot.slane %v3092, 5
        %v3988 = vsel %vm1264, %v3986, %v3987
        %v3989 = vrot.slane %v3987, 4
        %v3990 = vrot.slane %v3093, 5
        %v3991 = vsel %vm1264, %v3989, %v3990
        %v3992 = vrot.slane %v3938, 5
        %v3993 = vrot.slane %v3992, 4
        %v3994 = vrot.slane %v3095, 5
        %v3995 = vsel %vm1264, %v3993, %v3994
        %v3996 = vrot.slane %v3994, 4
        %v3997 = vrot.slane %v3096, 5
        %v3998 = vsel %vm1264, %v3996, %v3997
        %v3999 = vrot.slane %v3939, 5
        %v4000 = vrot.slane %v3999, 4
        %v4001 = vrot.slane %v3098, 5
        %v4002 = vsel %vm1264, %v4000, %v4001
        %v4003 = vrot.slane %v4001, 4
        %v4004 = vrot.slane %v3099, 5
        %v4005 = vsel %vm1264, %v4003, %v4004
        %v4006 = vrot.slane %v3940, 5
        %v4007 = vrot.slane %v4006, 4
        %v4008 = vrot.slane %v3101, 5
        %v4009 = vsel %vm1264, %v4007, %v4008
        %v4010 = vrot.slane %v4008, 4
        %v4011 = vrot.slane %v3102, 5
        %v4012 = vsel %vm1264, %v4010, %v4011
        %v4013 = vrot.slane %v3941, 5
        %v4014 = vrot.slane %v4013, 4
        %v4015 = vrot.slane %v3104, 5
        %v4016 = vsel %vm1264, %v4014, %v4015
        %v4017 = vrot.slane %v4015, 4
        %v4018 = vrot.slane %v3105, 5
        %v4019 = vsel %vm1264, %v4017, %v4018
        %v4020 = vrot.slane %v3942, 5
        %v4021 = vrot.slane %v4020, 4
        %v4022 = vrot.slane %v3107, 5
        %v4023 = vsel %vm1264, %v4021, %v4022
        %v4024 = vrot.slane %v4022, 4
        %v4025 = vrot.slane %v3108, 5
        %v4026 = vsel %vm1264, %v4024, %v4025
        %v4027 = vrot.slane %v3943, 5
        %v4028 = vrot.slane %v4027, 4
        %v4029 = vrot.slane %v3110, 5
        %v4030 = vsel %vm1264, %v4028, %v4029
        %v4031 = vrot.slane %v4029, 4
        %v4032 = vrot.slane %v3111, 5
        %v4033 = vsel %vm1264, %v4031, %v4032
        %s4034 = scalar_lea.vmem %s1, 22
        %v4035 = vld [vmem:[%s4034] sm:$0x3]
        %v4036 = vunpack.c.l.b16 %v3974
        %v4037 = vunpack.c.l.b16 %v3977
        %v4038 = vunpack.c.l.b16 %v3981
        %v4039 = vunpack.c.l.b16 %v3984
        %v4040 = vunpack.c.l.b16 %v3988
        %v4041 = vunpack.c.l.b16 %v3991
        %v4042 = vunpack.c.l.b16 %v3995
        %v4043 = vunpack.c.l.b16 %v3998
        %v4044 = vunpack.c.l.b16 %v4002
        %v4045 = vunpack.c.l.b16 %v4005
        %v4046 = vunpack.c.l.b16 %v4009
        %v4047 = vunpack.c.l.b16 %v4012
        %v4048 = vunpack.c.l.b16 %v4016
        %v4049 = vunpack.c.l.b16 %v4019
        %v4050 = vunpack.c.l.b16 %v4023
        %v4051 = vunpack.c.l.b16 %v4026
        %v4052 = vunpack.c.l.b16 %v4030
        %v4053 = vunpack.c.l.b16 %v4033
        %v4054 = vpack.c.b16 %v4037, %v4036
        %v4055 = vpack.c.b16 %v4039, %v4038
        %v4056 = vpack.c.b16 %v4041, %v4040
        %v4057 = vpack.c.b16 %v4043, %v4042
        %v4058 = vpack.c.b16 %v4045, %v4044
        %v4059 = vpack.c.b16 %v4047, %v4046
        %v4060 = vpack.c.b16 %v4049, %v4048
        %v4061 = vpack.c.b16 %v4051, %v4050
        %v4062 = vpack.c.b16 %v4053, %v4052
        %v4064 = vsel %vm484, %v4054, 0
        %v4067 = vsel %vm484, %v4055, 0
        %v4070 = vsel %vm484, %v4056, 0
        %v4073 = vsel %vm484, %v4057, 0
        %v4076 = vsel %vm484, %v4058, 0
        %v4079 = vsel %vm484, %v4059, 0
        %v4082 = vsel %vm484, %v4060, 0
        %v4085 = vsel %vm484, %v4061, 0
        %v4088 = vsel %vm484, %v4062, 0
        %v4091 = vsel %vm512, %v4035, 0
        %4093 = vmatprep.subr.bf16.mxu0 0
        %4094 = vmatpush1.bf16.msra.mxu0 0
        %4095 = vmatprep.subr.bf16.mxu0 0
        %4096 = vmatpush1.bf16.msra.mxu0 0
        %4097 = vmatprep.subr.bf16.mxu0 0
        %4098 = vmatpush1.bf16.msra.mxu0 0
        %4099 = vmatprep.subr.bf16.mxu0 0
        %4100 = vmatpush1.bf16.msra.mxu0 0
        %4101 = vmatprep.subr.bf16.mxu0 0
        %4102 = vmatpush1.bf16.msra.mxu0 0
        %4103 = vmatprep.subr.bf16.mxu0 0
        %4104 = vmatpush1.bf16.msra.mxu0 0
        %4105 = vmatprep.subr.bf16.mxu0 0
        %4106 = vmatpush1.bf16.msra.mxu0 0
        %4107 = vmatprep.subr.bf16.mxu0 0
        %4108 = vmatpush1.bf16.msra.mxu0 %v4091
        %4109 = vmatprep.subr.bf16.mxu0 0
        %4110 = vmatpush2.bf16.msra.mxu0 0
        %4111 = vmatprep.subr.bf16.mxu0 0
        %4112 = vmatpush2.bf16.msra.mxu0 0
        %4113 = vmatprep.subr.bf16.mxu0 0
        %4114 = vmatpush2.bf16.msra.mxu0 0
        %4115 = vmatprep.subr.bf16.mxu0 0
        %4116 = vmatpush2.bf16.msra.mxu0 0
        %4117 = vmatprep.subr.bf16.mxu0 0
        %4118 = vmatpush2.bf16.msra.mxu0 0
        %4119 = vmatprep.subr.bf16.mxu0 0
        %4120 = vmatpush2.bf16.msra.mxu0 0
        %4121 = vmatprep.subr.bf16.mxu0 0
        %4122 = vmatpush2.bf16.msra.mxu0 0
        %4123 = vmatprep.subr.bf16.mxu0 0
        %4124 = vmatpush2.bf16.msra.mxu0 0
        %4125 = vmatprep.mubr.bf16.mxu0 0
        %4126 = vmatmul.mubr.bf16.gmra.mxu0 %v4064
        %v4127 = vpop.f32.mrf.mxu0
        %v4128 = vadd.f32 0.0, %v4127
        %v4129 = vpop.f32.mrf.mxu0
        %v4130 = vpop.f32.mrf.mxu0
        %v4131 = vadd.f32 0.0, %v4130
        %v4132 = vpop.f32.mrf.mxu0
        %4133 = vmatprep.mubr.bf16.mxu0 0
        %4134 = vmatmul.mubr.bf16.gmra.mxu0 %v4067
        %v4135 = vpop.f32.mrf.mxu0
        %v4136 = vadd.f32 0.0, %v4135
        %v4137 = vpop.f32.mrf.mxu0
        %v4138 = vpop.f32.mrf.mxu0
        %v4139 = vadd.f32 0.0, %v4138
        %v4140 = vpop.f32.mrf.mxu0
        %4141 = vmatprep.mubr.bf16.mxu0 0
        %4142 = vmatmul.mubr.bf16.gmra.mxu0 %v4070
        %v4143 = vpop.f32.mrf.mxu0
        %v4144 = vadd.f32 0.0, %v4143
        %v4145 = vpop.f32.mrf.mxu0
        %v4146 = vpop.f32.mrf.mxu0
        %v4147 = vadd.f32 0.0, %v4146
        %v4148 = vpop.f32.mrf.mxu0
        %4149 = vmatprep.mubr.bf16.mxu0 0
        %4150 = vmatmul.mubr.bf16.gmra.mxu0 %v4073
        %v4151 = vpop.f32.mrf.mxu0
        %v4152 = vadd.f32 0.0, %v4151
        %v4153 = vpop.f32.mrf.mxu0
        %v4154 = vpop.f32.mrf.mxu0
        %v4155 = vadd.f32 0.0, %v4154
        %v4156 = vpop.f32.mrf.mxu0
        %4157 = vmatprep.mubr.bf16.mxu0 0
        %4158 = vmatmul.mubr.bf16.gmra.mxu0 %v4076
        %v4159 = vpop.f32.mrf.mxu0
        %v4160 = vadd.f32 0.0, %v4159
        %v4161 = vpop.f32.mrf.mxu0
        %v4162 = vpop.f32.mrf.mxu0
        %v4163 = vadd.f32 0.0, %v4162
        %v4164 = vpop.f32.mrf.mxu0
        %4165 = vmatprep.mubr.bf16.mxu0 0
        %4166 = vmatmul.mubr.bf16.gmra.mxu0 %v4079
        %v4167 = vpop.f32.mrf.mxu0
        %v4168 = vadd.f32 0.0, %v4167
        %v4169 = vpop.f32.mrf.mxu0
        %v4170 = vpop.f32.mrf.mxu0
        %v4171 = vadd.f32 0.0, %v4170
        %v4172 = vpop.f32.mrf.mxu0
        %4173 = vmatprep.mubr.bf16.mxu0 0
        %4174 = vmatmul.mubr.bf16.gmra.mxu0 %v4082
        %v4175 = vpop.f32.mrf.mxu0
        %v4176 = vadd.f32 0.0, %v4175
        %v4177 = vpop.f32.mrf.mxu0
        %v4178 = vpop.f32.mrf.mxu0
        %v4179 = vadd.f32 0.0, %v4178
        %v4180 = vpop.f32.mrf.mxu0
        %4181 = vmatprep.mubr.bf16.mxu0 0
        %4182 = vmatmul.mubr.bf16.gmra.mxu0 %v4085
        %v4183 = vpop.f32.mrf.mxu0
        %v4184 = vadd.f32 0.0, %v4183
        %v4185 = vpop.f32.mrf.mxu0
        %v4186 = vpop.f32.mrf.mxu0
        %v4187 = vadd.f32 0.0, %v4186
        %v4188 = vpop.f32.mrf.mxu0
        %4189 = vmatprep.mubr.bf16.mxu0 0
        %4190 = vmatmul.mubr.bf16.gmra.mxu0 %v4088
        %v4191 = vpop.f32.mrf.mxu0
        %v4192 = vadd.f32 0.0, %v4191
        %v4193 = vpop.f32.mrf.mxu0
        %v4194 = vpop.f32.mrf.mxu0
        %v4195 = vadd.f32 0.0, %v4194
        %v4196 = vpop.f32.mrf.mxu0
        %4197 = vdwg.mxu0
        %v4198 = vadd.f32 %v3917, %v4128
        %v4199 = vadd.f32 %v3918, %v4131
        %v4200 = vadd.f32 %v3919, %v4136
        %v4201 = vadd.f32 %v3920, %v4139
        %v4202 = vadd.f32 %v3921, %v4144
        %v4203 = vadd.f32 %v3922, %v4147
        %v4204 = vadd.f32 %v3923, %v4152
        %v4205 = vadd.f32 %v3924, %v4155
        %v4206 = vadd.f32 %v3925, %v4160
        %v4207 = vadd.f32 %v3926, %v4163
        %v4208 = vadd.f32 %v3927, %v4168
        %v4209 = vadd.f32 %v3928, %v4171
        %v4210 = vadd.f32 %v3929, %v4176
        %v4211 = vadd.f32 %v3930, %v4179
        %v4212 = vadd.f32 %v3931, %v4184
        %v4213 = vadd.f32 %v3932, %v4187
        %v4214 = vadd.f32 %v3933, %v4192
        %v4215 = vadd.f32 %v3934, %v4195
        %s4216 = sadd.s32 %s186, 11
        %s4217 = smul.u32 %s4216, 5
        %s4218 = smul.addr %s4217, 4
        %s4219 = scalar_lea.vmem %s182, %s4218
        %v4220 = vld [vmem:[%s4219] sm:$0xf]
        %v4221 = vld [vmem:[%s4219 + $0x4] sm:$0xf]
        %v4222 = vld [vmem:[%s4219 + $0x14] sm:$0xf]
        %v4223 = vld [vmem:[%s4219 + $0x18] sm:$0xf]
        %v4224 = vld [vmem:[%s4219 + $0x28] sm:$0xf]
        %v4225 = vld [vmem:[%s4219 + $0x2c] sm:$0xf]
        %v4226 = vld [vmem:[%s4219 + $0x3c] sm:$0xf]
        %v4227 = vld [vmem:[%s4219 + $0x40] sm:$0xf]
        %v4228 = vld [vmem:[%s4219 + $0x50] sm:$0xf]
        %v4229 = vld [vmem:[%s4219 + $0x54] sm:$0xf]
        %v4230 = vld [vmem:[%s4219 + $0x64] sm:$0xf]
        %v4231 = vld [vmem:[%s4219 + $0x68] sm:$0xf]
        %v4232 = vld [vmem:[%s4219 + $0x78] sm:$0xf]
        %v4233 = vld [vmem:[%s4219 + $0x7c] sm:$0xf]
        %v4234 = vld [vmem:[%s4219 + $0x8c] sm:$0xf]
        %v4235 = vld [vmem:[%s4219 + $0x90] sm:$0xf]
        %v4236 = vld [vmem:[%s4219 + $0xa0] sm:$0xf]
        %v4237 = vld [vmem:[%s4219 + $0xa4] sm:$0xf]
        %s4238 = scalar_lea.vmem %s1, 24
        %v4239 = vld [vmem:[%s4238] sm:$0x3]
        %v4258 = vunpack.c.l.b16 %v4220
        %v4259 = vunpack.c.l.b16 %v4221
        %v4260 = vunpack.c.l.b16 %v4222
        %v4261 = vunpack.c.l.b16 %v4223
        %v4262 = vunpack.c.l.b16 %v4224
        %v4263 = vunpack.c.l.b16 %v4225
        %v4264 = vunpack.c.l.b16 %v4226
        %v4265 = vunpack.c.l.b16 %v4227
        %v4266 = vunpack.c.l.b16 %v4228
        %v4267 = vunpack.c.l.b16 %v4229
        %v4268 = vunpack.c.l.b16 %v4230
        %v4269 = vunpack.c.l.b16 %v4231
        %v4270 = vunpack.c.l.b16 %v4232
        %v4271 = vunpack.c.l.b16 %v4233
        %v4272 = vunpack.c.l.b16 %v4234
        %v4273 = vunpack.c.l.b16 %v4235
        %v4274 = vunpack.c.l.b16 %v4236
        %v4275 = vunpack.c.l.b16 %v4237
        %v4276 = vpack.c.b16 %v4259, %v4258
        %v4277 = vpack.c.b16 %v4261, %v4260
        %v4278 = vpack.c.b16 %v4263, %v4262
        %v4279 = vpack.c.b16 %v4265, %v4264
        %v4280 = vpack.c.b16 %v4267, %v4266
        %v4281 = vpack.c.b16 %v4269, %v4268
        %v4282 = vpack.c.b16 %v4271, %v4270
        %v4283 = vpack.c.b16 %v4273, %v4272
        %v4284 = vpack.c.b16 %v4275, %v4274
        %v4286 = vsel %vm484, %v4276, 0
        %v4289 = vsel %vm484, %v4277, 0
        %v4292 = vsel %vm484, %v4278, 0
        %v4295 = vsel %vm484, %v4279, 0
        %v4298 = vsel %vm484, %v4280, 0
        %v4301 = vsel %vm484, %v4281, 0
        %v4304 = vsel %vm484, %v4282, 0
        %v4307 = vsel %vm484, %v4283, 0
        %v4310 = vsel %vm484, %v4284, 0
        %v4313 = vsel %vm512, %v4239, 0
        %4315 = vmatprep.subr.bf16.mxu0 0
        %4316 = vmatpush1.bf16.msra.mxu0 0
        %4317 = vmatprep.subr.bf16.mxu0 0
        %4318 = vmatpush1.bf16.msra.mxu0 0
        %4319 = vmatprep.subr.bf16.mxu0 0
        %4320 = vmatpush1.bf16.msra.mxu0 0
        %4321 = vmatprep.subr.bf16.mxu0 0
        %4322 = vmatpush1.bf16.msra.mxu0 0
        %4323 = vmatprep.subr.bf16.mxu0 0
        %4324 = vmatpush1.bf16.msra.mxu0 0
        %4325 = vmatprep.subr.bf16.mxu0 0
        %4326 = vmatpush1.bf16.msra.mxu0 0
        %4327 = vmatprep.subr.bf16.mxu0 0
        %4328 = vmatpush1.bf16.msra.mxu0 0
        %4329 = vmatprep.subr.bf16.mxu0 0
        %4330 = vmatpush1.bf16.msra.mxu0 %v4313
        %4331 = vmatprep.subr.bf16.mxu0 0
        %4332 = vmatpush2.bf16.msra.mxu0 0
        %4333 = vmatprep.subr.bf16.mxu0 0
        %4334 = vmatpush2.bf16.msra.mxu0 0
        %4335 = vmatprep.subr.bf16.mxu0 0
        %4336 = vmatpush2.bf16.msra.mxu0 0
        %4337 = vmatprep.subr.bf16.mxu0 0
        %4338 = vmatpush2.bf16.msra.mxu0 0
        %4339 = vmatprep.subr.bf16.mxu0 0
        %4340 = vmatpush2.bf16.msra.mxu0 0
        %4341 = vmatprep.subr.bf16.mxu0 0
        %4342 = vmatpush2.bf16.msra.mxu0 0
        %4343 = vmatprep.subr.bf16.mxu0 0
        %4344 = vmatpush2.bf16.msra.mxu0 0
        %4345 = vmatprep.subr.bf16.mxu0 0
        %4346 = vmatpush2.bf16.msra.mxu0 0
        %4347 = vmatprep.mubr.bf16.mxu0 0
        %4348 = vmatmul.mubr.bf16.gmra.mxu0 %v4286
        %v4349 = vpop.f32.mrf.mxu0
        %v4350 = vadd.f32 0.0, %v4349
        %v4351 = vpop.f32.mrf.mxu0
        %v4352 = vpop.f32.mrf.mxu0
        %v4353 = vadd.f32 0.0, %v4352
        %v4354 = vpop.f32.mrf.mxu0
        %4355 = vmatprep.mubr.bf16.mxu0 0
        %4356 = vmatmul.mubr.bf16.gmra.mxu0 %v4289
        %v4357 = vpop.f32.mrf.mxu0
        %v4358 = vadd.f32 0.0, %v4357
        %v4359 = vpop.f32.mrf.mxu0
        %v4360 = vpop.f32.mrf.mxu0
        %v4361 = vadd.f32 0.0, %v4360
        %v4362 = vpop.f32.mrf.mxu0
        %4363 = vmatprep.mubr.bf16.mxu0 0
        %4364 = vmatmul.mubr.bf16.gmra.mxu0 %v4292
        %v4365 = vpop.f32.mrf.mxu0
        %v4366 = vadd.f32 0.0, %v4365
        %v4367 = vpop.f32.mrf.mxu0
        %v4368 = vpop.f32.mrf.mxu0
        %v4369 = vadd.f32 0.0, %v4368
        %v4370 = vpop.f32.mrf.mxu0
        %4371 = vmatprep.mubr.bf16.mxu0 0
        %4372 = vmatmul.mubr.bf16.gmra.mxu0 %v4295
        %v4373 = vpop.f32.mrf.mxu0
        %v4374 = vadd.f32 0.0, %v4373
        %v4375 = vpop.f32.mrf.mxu0
        %v4376 = vpop.f32.mrf.mxu0
        %v4377 = vadd.f32 0.0, %v4376
        %v4378 = vpop.f32.mrf.mxu0
        %4379 = vmatprep.mubr.bf16.mxu0 0
        %4380 = vmatmul.mubr.bf16.gmra.mxu0 %v4298
        %v4381 = vpop.f32.mrf.mxu0
        %v4382 = vadd.f32 0.0, %v4381
        %v4383 = vpop.f32.mrf.mxu0
        %v4384 = vpop.f32.mrf.mxu0
        %v4385 = vadd.f32 0.0, %v4384
        %v4386 = vpop.f32.mrf.mxu0
        %4387 = vmatprep.mubr.bf16.mxu0 0
        %4388 = vmatmul.mubr.bf16.gmra.mxu0 %v4301
        %v4389 = vpop.f32.mrf.mxu0
        %v4390 = vadd.f32 0.0, %v4389
        %v4391 = vpop.f32.mrf.mxu0
        %v4392 = vpop.f32.mrf.mxu0
        %v4393 = vadd.f32 0.0, %v4392
        %v4394 = vpop.f32.mrf.mxu0
        %4395 = vmatprep.mubr.bf16.mxu0 0
        %4396 = vmatmul.mubr.bf16.gmra.mxu0 %v4304
        %v4397 = vpop.f32.mrf.mxu0
        %v4398 = vadd.f32 0.0, %v4397
        %v4399 = vpop.f32.mrf.mxu0
        %v4400 = vpop.f32.mrf.mxu0
        %v4401 = vadd.f32 0.0, %v4400
        %v4402 = vpop.f32.mrf.mxu0
        %4403 = vmatprep.mubr.bf16.mxu0 0
        %4404 = vmatmul.mubr.bf16.gmra.mxu0 %v4307
        %v4405 = vpop.f32.mrf.mxu0
        %v4406 = vadd.f32 0.0, %v4405
        %v4407 = vpop.f32.mrf.mxu0
        %v4408 = vpop.f32.mrf.mxu0
        %v4409 = vadd.f32 0.0, %v4408
        %v4410 = vpop.f32.mrf.mxu0
        %4411 = vmatprep.mubr.bf16.mxu0 0
        %4412 = vmatmul.mubr.bf16.gmra.mxu0 %v4310
        %v4413 = vpop.f32.mrf.mxu0
        %v4414 = vadd.f32 0.0, %v4413
        %v4415 = vpop.f32.mrf.mxu0
        %v4416 = vpop.f32.mrf.mxu0
        %v4417 = vadd.f32 0.0, %v4416
        %v4418 = vpop.f32.mrf.mxu0
        %4419 = vdwg.mxu0
        %v4420 = vadd.f32 %v4198, %v4350
        %v4421 = vadd.f32 %v4199, %v4353
        %v4422 = vadd.f32 %v4200, %v4358
        %v4423 = vadd.f32 %v4201, %v4361
        %v4424 = vadd.f32 %v4202, %v4366
        %v4425 = vadd.f32 %v4203, %v4369
        %v4426 = vadd.f32 %v4204, %v4374
        %v4427 = vadd.f32 %v4205, %v4377
        %v4428 = vadd.f32 %v4206, %v4382
        %v4429 = vadd.f32 %v4207, %v4385
        %v4430 = vadd.f32 %v4208, %v4390
        %v4431 = vadd.f32 %v4209, %v4393
        %v4432 = vadd.f32 %v4210, %v4398
        %v4433 = vadd.f32 %v4211, %v4401
        %v4434 = vadd.f32 %v4212, %v4406
        %v4435 = vadd.f32 %v4213, %v4409
        %v4436 = vadd.f32 %v4214, %v4414
        %v4437 = vadd.f32 %v4215, %v4417
        %v4438 = vld [vmem:[%s4219 + $0x8] sm:$0xf]
        %v4439 = vld [vmem:[%s4219 + $0xc] sm:$0xf]
        %v4440 = vld [vmem:[%s4219 + $0x10] sm:$0x1]
        %v4441 = vld [vmem:[%s4219 + $0x1c] sm:$0xf]
        %v4442 = vld [vmem:[%s4219 + $0x20] sm:$0xf]
        %v4443 = vld [vmem:[%s4219 + $0x24] sm:$0x1]
        %v4444 = vld [vmem:[%s4219 + $0x30] sm:$0xf]
        %v4445 = vld [vmem:[%s4219 + $0x34] sm:$0xf]
        %v4446 = vld [vmem:[%s4219 + $0x38] sm:$0x1]
        %v4447 = vld [vmem:[%s4219 + $0x44] sm:$0xf]
        %v4448 = vld [vmem:[%s4219 + $0x48] sm:$0xf]
        %v4449 = vld [vmem:[%s4219 + $0x4c] sm:$0x1]
        %v4450 = vld [vmem:[%s4219 + $0x58] sm:$0xf]
        %v4451 = vld [vmem:[%s4219 + $0x5c] sm:$0xf]
        %v4452 = vld [vmem:[%s4219 + $0x60] sm:$0x1]
        %v4453 = vld [vmem:[%s4219 + $0x6c] sm:$0xf]
        %v4454 = vld [vmem:[%s4219 + $0x70] sm:$0xf]
        %v4455 = vld [vmem:[%s4219 + $0x74] sm:$0x1]
        %v4456 = vld [vmem:[%s4219 + $0x80] sm:$0xf]
        %v4457 = vld [vmem:[%s4219 + $0x84] sm:$0xf]
        %v4458 = vld [vmem:[%s4219 + $0x88] sm:$0x1]
        %v4459 = vld [vmem:[%s4219 + $0x94] sm:$0xf]
        %v4460 = vld [vmem:[%s4219 + $0x98] sm:$0xf]
        %v4461 = vld [vmem:[%s4219 + $0x9c] sm:$0x1]
        %v4462 = vld [vmem:[%s4219 + $0xa8] sm:$0xf]
        %v4463 = vld [vmem:[%s4219 + $0xac] sm:$0xf]
        %v4464 = vld [vmem:[%s4219 + $0xb0] sm:$0x1]
        %v4466 = vshrl.u32 %v4438, 16
        %v4468 = vrot.slane %v4466, 4
        %v4469 = vshll.u32 %v4438, 16
        %v4471 = vrot.slane %v4469, 5
        %v4472 = vor.u32 %v4468, %v4471
        %v4473 = vrot.slane %v4472, 4
        %v4475 = vshll.u32 %v4439, 16
        %v4477 = vrot.slane %v4475, 5
        %v4478 = vsel %vm238, %v4473, %v4477
        %v4479 = vshrl.u32 %v4439, 16
        %v4481 = vrot.slane %v4479, 4
        %v4482 = vor.u32 %v4481, %v4477
        %v4483 = vrot.slane %v4482, 4
        %v4485 = vshll.u32 %v4440, 16
        %v4487 = vrot.slane %v4485, 5
        %v4488 = vsel %vm238, %v4483, %v4487
        %v4490 = vshrl.u32 %v4441, 16
        %v4492 = vrot.slane %v4490, 4
        %v4493 = vshll.u32 %v4441, 16
        %v4495 = vrot.slane %v4493, 5
        %v4496 = vor.u32 %v4492, %v4495
        %v4497 = vrot.slane %v4496, 4
        %v4499 = vshll.u32 %v4442, 16
        %v4501 = vrot.slane %v4499, 5
        %v4502 = vsel %vm238, %v4497, %v4501
        %v4503 = vshrl.u32 %v4442, 16
        %v4505 = vrot.slane %v4503, 4
        %v4506 = vor.u32 %v4505, %v4501
        %v4507 = vrot.slane %v4506, 4
        %v4509 = vshll.u32 %v4443, 16
        %v4511 = vrot.slane %v4509, 5
        %v4512 = vsel %vm238, %v4507, %v4511
        %v4514 = vshrl.u32 %v4444, 16
        %v4516 = vrot.slane %v4514, 4
        %v4517 = vshll.u32 %v4444, 16
        %v4519 = vrot.slane %v4517, 5
        %v4520 = vor.u32 %v4516, %v4519
        %v4521 = vrot.slane %v4520, 4
        %v4523 = vshll.u32 %v4445, 16
        %v4525 = vrot.slane %v4523, 5
        %v4526 = vsel %vm238, %v4521, %v4525
        %v4527 = vshrl.u32 %v4445, 16
        %v4529 = vrot.slane %v4527, 4
        %v4530 = vor.u32 %v4529, %v4525
        %v4531 = vrot.slane %v4530, 4
        %v4533 = vshll.u32 %v4446, 16
        %v4535 = vrot.slane %v4533, 5
        %v4536 = vsel %vm238, %v4531, %v4535
        %v4538 = vshrl.u32 %v4447, 16
        %v4540 = vrot.slane %v4538, 4
        %v4541 = vshll.u32 %v4447, 16
        %v4543 = vrot.slane %v4541, 5
        %v4544 = vor.u32 %v4540, %v4543
        %v4545 = vrot.slane %v4544, 4
        %v4547 = vshll.u32 %v4448, 16
        %v4549 = vrot.slane %v4547, 5
        %v4550 = vsel %vm238, %v4545, %v4549
        %v4551 = vshrl.u32 %v4448, 16
        %v4553 = vrot.slane %v4551, 4
        %v4554 = vor.u32 %v4553, %v4549
        %v4555 = vrot.slane %v4554, 4
        %v4557 = vshll.u32 %v4449, 16
        %v4559 = vrot.slane %v4557, 5
        %v4560 = vsel %vm238, %v4555, %v4559
        %v4562 = vshrl.u32 %v4450, 16
        %v4564 = vrot.slane %v4562, 4
        %v4565 = vshll.u32 %v4450, 16
        %v4567 = vrot.slane %v4565, 5
        %v4568 = vor.u32 %v4564, %v4567
        %v4569 = vrot.slane %v4568, 4
        %v4571 = vshll.u32 %v4451, 16
        %v4573 = vrot.slane %v4571, 5
        %v4574 = vsel %vm238, %v4569, %v4573
        %v4575 = vshrl.u32 %v4451, 16
        %v4577 = vrot.slane %v4575, 4
        %v4578 = vor.u32 %v4577, %v4573
        %v4579 = vrot.slane %v4578, 4
        %v4581 = vshll.u32 %v4452, 16
        %v4583 = vrot.slane %v4581, 5
        %v4584 = vsel %vm238, %v4579, %v4583
        %v4586 = vshrl.u32 %v4453, 16
        %v4588 = vrot.slane %v4586, 4
        %v4589 = vshll.u32 %v4453, 16
        %v4591 = vrot.slane %v4589, 5
        %v4592 = vor.u32 %v4588, %v4591
        %v4593 = vrot.slane %v4592, 4
        %v4595 = vshll.u32 %v4454, 16
        %v4597 = vrot.slane %v4595, 5
        %v4598 = vsel %vm238, %v4593, %v4597
        %v4599 = vshrl.u32 %v4454, 16
        %v4601 = vrot.slane %v4599, 4
        %v4602 = vor.u32 %v4601, %v4597
        %v4603 = vrot.slane %v4602, 4
        %v4605 = vshll.u32 %v4455, 16
        %v4607 = vrot.slane %v4605, 5
        %v4608 = vsel %vm238, %v4603, %v4607
        %v4610 = vshrl.u32 %v4456, 16
        %v4612 = vrot.slane %v4610, 4
        %v4613 = vshll.u32 %v4456, 16
        %v4615 = vrot.slane %v4613, 5
        %v4616 = vor.u32 %v4612, %v4615
        %v4617 = vrot.slane %v4616, 4
        %v4619 = vshll.u32 %v4457, 16
        %v4621 = vrot.slane %v4619, 5
        %v4622 = vsel %vm238, %v4617, %v4621
        %v4623 = vshrl.u32 %v4457, 16
        %v4625 = vrot.slane %v4623, 4
        %v4626 = vor.u32 %v4625, %v4621
        %v4627 = vrot.slane %v4626, 4
        %v4629 = vshll.u32 %v4458, 16
        %v4631 = vrot.slane %v4629, 5
        %v4632 = vsel %vm238, %v4627, %v4631
        %v4634 = vshrl.u32 %v4459, 16
        %v4636 = vrot.slane %v4634, 4
        %v4637 = vshll.u32 %v4459, 16
        %v4639 = vrot.slane %v4637, 5
        %v4640 = vor.u32 %v4636, %v4639
        %v4641 = vrot.slane %v4640, 4
        %v4643 = vshll.u32 %v4460, 16
        %v4645 = vrot.slane %v4643, 5
        %v4646 = vsel %vm238, %v4641, %v4645
        %v4647 = vshrl.u32 %v4460, 16
        %v4649 = vrot.slane %v4647, 4
        %v4650 = vor.u32 %v4649, %v4645
        %v4651 = vrot.slane %v4650, 4
        %v4653 = vshll.u32 %v4461, 16
        %v4655 = vrot.slane %v4653, 5
        %v4656 = vsel %vm238, %v4651, %v4655
        %v4658 = vshrl.u32 %v4462, 16
        %v4660 = vrot.slane %v4658, 4
        %v4661 = vshll.u32 %v4462, 16
        %v4663 = vrot.slane %v4661, 5
        %v4664 = vor.u32 %v4660, %v4663
        %v4665 = vrot.slane %v4664, 4
        %v4667 = vshll.u32 %v4463, 16
        %v4669 = vrot.slane %v4667, 5
        %v4670 = vsel %vm238, %v4665, %v4669
        %v4671 = vshrl.u32 %v4463, 16
        %v4673 = vrot.slane %v4671, 4
        %v4674 = vor.u32 %v4673, %v4669
        %v4675 = vrot.slane %v4674, 4
        %v4677 = vshll.u32 %v4464, 16
        %v4679 = vrot.slane %v4677, 5
        %v4680 = vsel %vm238, %v4675, %v4679
        %s4681 = scalar_lea.vmem %s1, 26
        %v4682 = vld [vmem:[%s4681] sm:$0x3]
        %v4683 = vunpack.c.l.b16 %v4478
        %v4684 = vunpack.c.l.b16 %v4488
        %v4685 = vunpack.c.l.b16 %v4502
        %v4686 = vunpack.c.l.b16 %v4512
        %v4687 = vunpack.c.l.b16 %v4526
        %v4688 = vunpack.c.l.b16 %v4536
        %v4689 = vunpack.c.l.b16 %v4550
        %v4690 = vunpack.c.l.b16 %v4560
        %v4691 = vunpack.c.l.b16 %v4574
        %v4692 = vunpack.c.l.b16 %v4584
        %v4693 = vunpack.c.l.b16 %v4598
        %v4694 = vunpack.c.l.b16 %v4608
        %v4695 = vunpack.c.l.b16 %v4622
        %v4696 = vunpack.c.l.b16 %v4632
        %v4697 = vunpack.c.l.b16 %v4646
        %v4698 = vunpack.c.l.b16 %v4656
        %v4699 = vunpack.c.l.b16 %v4670
        %v4700 = vunpack.c.l.b16 %v4680
        %v4701 = vpack.c.b16 %v4684, %v4683
        %v4702 = vpack.c.b16 %v4686, %v4685
        %v4703 = vpack.c.b16 %v4688, %v4687
        %v4704 = vpack.c.b16 %v4690, %v4689
        %v4705 = vpack.c.b16 %v4692, %v4691
        %v4706 = vpack.c.b16 %v4694, %v4693
        %v4707 = vpack.c.b16 %v4696, %v4695
        %v4708 = vpack.c.b16 %v4698, %v4697
        %v4709 = vpack.c.b16 %v4700, %v4699
        %v4711 = vsel %vm484, %v4701, 0
        %v4714 = vsel %vm484, %v4702, 0
        %v4717 = vsel %vm484, %v4703, 0
        %v4720 = vsel %vm484, %v4704, 0
        %v4723 = vsel %vm484, %v4705, 0
        %v4726 = vsel %vm484, %v4706, 0
        %v4729 = vsel %vm484, %v4707, 0
        %v4732 = vsel %vm484, %v4708, 0
        %v4735 = vsel %vm484, %v4709, 0
        %v4738 = vsel %vm512, %v4682, 0
        %4740 = vmatprep.subr.bf16.mxu0 0
        %4741 = vmatpush1.bf16.msra.mxu0 0
        %4742 = vmatprep.subr.bf16.mxu0 0
        %4743 = vmatpush1.bf16.msra.mxu0 0
        %4744 = vmatprep.subr.bf16.mxu0 0
        %4745 = vmatpush1.bf16.msra.mxu0 0
        %4746 = vmatprep.subr.bf16.mxu0 0
        %4747 = vmatpush1.bf16.msra.mxu0 0
        %4748 = vmatprep.subr.bf16.mxu0 0
        %4749 = vmatpush1.bf16.msra.mxu0 0
        %4750 = vmatprep.subr.bf16.mxu0 0
        %4751 = vmatpush1.bf16.msra.mxu0 0
        %4752 = vmatprep.subr.bf16.mxu0 0
        %4753 = vmatpush1.bf16.msra.mxu0 0
        %4754 = vmatprep.subr.bf16.mxu0 0
        %4755 = vmatpush1.bf16.msra.mxu0 %v4738
        %4756 = vmatprep.subr.bf16.mxu0 0
        %4757 = vmatpush2.bf16.msra.mxu0 0
        %4758 = vmatprep.subr.bf16.mxu0 0
        %4759 = vmatpush2.bf16.msra.mxu0 0
        %4760 = vmatprep.subr.bf16.mxu0 0
        %4761 = vmatpush2.bf16.msra.mxu0 0
        %4762 = vmatprep.subr.bf16.mxu0 0
        %4763 = vmatpush2.bf16.msra.mxu0 0
        %4764 = vmatprep.subr.bf16.mxu0 0
        %4765 = vmatpush2.bf16.msra.mxu0 0
        %4766 = vmatprep.subr.bf16.mxu0 0
        %4767 = vmatpush2.bf16.msra.mxu0 0
        %4768 = vmatprep.subr.bf16.mxu0 0
        %4769 = vmatpush2.bf16.msra.mxu0 0
        %4770 = vmatprep.subr.bf16.mxu0 0
        %4771 = vmatpush2.bf16.msra.mxu0 0
        %4772 = vmatprep.mubr.bf16.mxu0 0
        %4773 = vmatmul.mubr.bf16.gmra.mxu0 %v4711
        %v4774 = vpop.f32.mrf.mxu0
        %v4775 = vadd.f32 0.0, %v4774
        %v4776 = vpop.f32.mrf.mxu0
        %v4777 = vpop.f32.mrf.mxu0
        %v4778 = vadd.f32 0.0, %v4777
        %v4779 = vpop.f32.mrf.mxu0
        %4780 = vmatprep.mubr.bf16.mxu0 0
        %4781 = vmatmul.mubr.bf16.gmra.mxu0 %v4714
        %v4782 = vpop.f32.mrf.mxu0
        %v4783 = vadd.f32 0.0, %v4782
        %v4784 = vpop.f32.mrf.mxu0
        %v4785 = vpop.f32.mrf.mxu0
        %v4786 = vadd.f32 0.0, %v4785
        %v4787 = vpop.f32.mrf.mxu0
        %4788 = vmatprep.mubr.bf16.mxu0 0
        %4789 = vmatmul.mubr.bf16.gmra.mxu0 %v4717
        %v4790 = vpop.f32.mrf.mxu0
        %v4791 = vadd.f32 0.0, %v4790
        %v4792 = vpop.f32.mrf.mxu0
        %v4793 = vpop.f32.mrf.mxu0
        %v4794 = vadd.f32 0.0, %v4793
        %v4795 = vpop.f32.mrf.mxu0
        %4796 = vmatprep.mubr.bf16.mxu0 0
        %4797 = vmatmul.mubr.bf16.gmra.mxu0 %v4720
        %v4798 = vpop.f32.mrf.mxu0
        %v4799 = vadd.f32 0.0, %v4798
        %v4800 = vpop.f32.mrf.mxu0
        %v4801 = vpop.f32.mrf.mxu0
        %v4802 = vadd.f32 0.0, %v4801
        %v4803 = vpop.f32.mrf.mxu0
        %4804 = vmatprep.mubr.bf16.mxu0 0
        %4805 = vmatmul.mubr.bf16.gmra.mxu0 %v4723
        %v4806 = vpop.f32.mrf.mxu0
        %v4807 = vadd.f32 0.0, %v4806
        %v4808 = vpop.f32.mrf.mxu0
        %v4809 = vpop.f32.mrf.mxu0
        %v4810 = vadd.f32 0.0, %v4809
        %v4811 = vpop.f32.mrf.mxu0
        %4812 = vmatprep.mubr.bf16.mxu0 0
        %4813 = vmatmul.mubr.bf16.gmra.mxu0 %v4726
        %v4814 = vpop.f32.mrf.mxu0
        %v4815 = vadd.f32 0.0, %v4814
        %v4816 = vpop.f32.mrf.mxu0
        %v4817 = vpop.f32.mrf.mxu0
        %v4818 = vadd.f32 0.0, %v4817
        %v4819 = vpop.f32.mrf.mxu0
        %4820 = vmatprep.mubr.bf16.mxu0 0
        %4821 = vmatmul.mubr.bf16.gmra.mxu0 %v4729
        %v4822 = vpop.f32.mrf.mxu0
        %v4823 = vadd.f32 0.0, %v4822
        %v4824 = vpop.f32.mrf.mxu0
        %v4825 = vpop.f32.mrf.mxu0
        %v4826 = vadd.f32 0.0, %v4825
        %v4827 = vpop.f32.mrf.mxu0
        %4828 = vmatprep.mubr.bf16.mxu0 0
        %4829 = vmatmul.mubr.bf16.gmra.mxu0 %v4732
        %v4830 = vpop.f32.mrf.mxu0
        %v4831 = vadd.f32 0.0, %v4830
        %v4832 = vpop.f32.mrf.mxu0
        %v4833 = vpop.f32.mrf.mxu0
        %v4834 = vadd.f32 0.0, %v4833
        %v4835 = vpop.f32.mrf.mxu0
        %4836 = vmatprep.mubr.bf16.mxu0 0
        %4837 = vmatmul.mubr.bf16.gmra.mxu0 %v4735
        %v4838 = vpop.f32.mrf.mxu0
        %v4839 = vadd.f32 0.0, %v4838
        %v4840 = vpop.f32.mrf.mxu0
        %v4841 = vpop.f32.mrf.mxu0
        %v4842 = vadd.f32 0.0, %v4841
        %v4843 = vpop.f32.mrf.mxu0
        %4844 = vdwg.mxu0
        %v4845 = vadd.f32 %v4420, %v4775
        %v4846 = vadd.f32 %v4421, %v4778
        %v4847 = vadd.f32 %v4422, %v4783
        %v4848 = vadd.f32 %v4423, %v4786
        %v4849 = vadd.f32 %v4424, %v4791
        %v4850 = vadd.f32 %v4425, %v4794
        %v4851 = vadd.f32 %v4426, %v4799
        %v4852 = vadd.f32 %v4427, %v4802
        %v4853 = vadd.f32 %v4428, %v4807
        %v4854 = vadd.f32 %v4429, %v4810
        %v4855 = vadd.f32 %v4430, %v4815
        %v4856 = vadd.f32 %v4431, %v4818
        %v4857 = vadd.f32 %v4432, %v4823
        %v4858 = vadd.f32 %v4433, %v4826
        %v4859 = vadd.f32 %v4434, %v4831
        %v4860 = vadd.f32 %v4435, %v4834
        %v4861 = vadd.f32 %v4436, %v4839
        %v4862 = vadd.f32 %v4437, %v4842
        %v4863 = vld [vmem:[%s4219] sm:$0xf]
        %v4864 = vld [vmem:[%s4219 + $0x4] sm:$0xf]
        %v4865 = vld [vmem:[%s4219 + $0x8] sm:$0x1]
        %v4866 = vld [vmem:[%s4219 + $0x14] sm:$0xf]
        %v4867 = vld [vmem:[%s4219 + $0x18] sm:$0xf]
        %v4868 = vld [vmem:[%s4219 + $0x1c] sm:$0x1]
        %v4869 = vld [vmem:[%s4219 + $0x28] sm:$0xf]
        %v4870 = vld [vmem:[%s4219 + $0x2c] sm:$0xf]
        %v4871 = vld [vmem:[%s4219 + $0x30] sm:$0x1]
        %v4872 = vld [vmem:[%s4219 + $0x3c] sm:$0xf]
        %v4873 = vld [vmem:[%s4219 + $0x40] sm:$0xf]
        %v4874 = vld [vmem:[%s4219 + $0x44] sm:$0x1]
        %v4875 = vld [vmem:[%s4219 + $0x50] sm:$0xf]
        %v4876 = vld [vmem:[%s4219 + $0x54] sm:$0xf]
        %v4877 = vld [vmem:[%s4219 + $0x58] sm:$0x1]
        %v4878 = vld [vmem:[%s4219 + $0x64] sm:$0xf]
        %v4879 = vld [vmem:[%s4219 + $0x68] sm:$0xf]
        %v4880 = vld [vmem:[%s4219 + $0x6c] sm:$0x1]
        %v4881 = vld [vmem:[%s4219 + $0x78] sm:$0xf]
        %v4882 = vld [vmem:[%s4219 + $0x7c] sm:$0xf]
        %v4883 = vld [vmem:[%s4219 + $0x80] sm:$0x1]
        %v4884 = vld [vmem:[%s4219 + $0x8c] sm:$0xf]
        %v4885 = vld [vmem:[%s4219 + $0x90] sm:$0xf]
        %v4886 = vld [vmem:[%s4219 + $0x94] sm:$0x1]
        %v4887 = vld [vmem:[%s4219 + $0xa0] sm:$0xf]
        %v4888 = vld [vmem:[%s4219 + $0xa4] sm:$0xf]
        %v4889 = vld [vmem:[%s4219 + $0xa8] sm:$0x1]
        %v4891 = vshrl.u32 %v4863, 16
        %v4893 = vrot.slane %v4891, 4
        %v4894 = vshll.u32 %v4863, 16
        %v4896 = vrot.slane %v4894, 5
        %v4897 = vor.u32 %v4893, %v4896
        %v4898 = vrot.slane %v4897, 4
        %v4900 = vshll.u32 %v4864, 16
        %v4902 = vrot.slane %v4900, 5
        %v4903 = vsel %vm238, %v4898, %v4902
        %v4904 = vshrl.u32 %v4864, 16
        %v4906 = vrot.slane %v4904, 4
        %v4907 = vor.u32 %v4906, %v4902
        %v4908 = vrot.slane %v4907, 4
        %v4910 = vshll.u32 %v4865, 16
        %v4912 = vrot.slane %v4910, 5
        %v4913 = vsel %vm238, %v4908, %v4912
        %v4915 = vshrl.u32 %v4866, 16
        %v4917 = vrot.slane %v4915, 4
        %v4918 = vshll.u32 %v4866, 16
        %v4920 = vrot.slane %v4918, 5
        %v4921 = vor.u32 %v4917, %v4920
        %v4922 = vrot.slane %v4921, 4
        %v4924 = vshll.u32 %v4867, 16
        %v4926 = vrot.slane %v4924, 5
        %v4927 = vsel %vm238, %v4922, %v4926
        %v4928 = vshrl.u32 %v4867, 16
        %v4930 = vrot.slane %v4928, 4
        %v4931 = vor.u32 %v4930, %v4926
        %v4932 = vrot.slane %v4931, 4
        %v4934 = vshll.u32 %v4868, 16
        %v4936 = vrot.slane %v4934, 5
        %v4937 = vsel %vm238, %v4932, %v4936
        %v4939 = vshrl.u32 %v4869, 16
        %v4941 = vrot.slane %v4939, 4
        %v4942 = vshll.u32 %v4869, 16
        %v4944 = vrot.slane %v4942, 5
        %v4945 = vor.u32 %v4941, %v4944
        %v4946 = vrot.slane %v4945, 4
        %v4948 = vshll.u32 %v4870, 16
        %v4950 = vrot.slane %v4948, 5
        %v4951 = vsel %vm238, %v4946, %v4950
        %v4952 = vshrl.u32 %v4870, 16
        %v4954 = vrot.slane %v4952, 4
        %v4955 = vor.u32 %v4954, %v4950
        %v4956 = vrot.slane %v4955, 4
        %v4958 = vshll.u32 %v4871, 16
        %v4960 = vrot.slane %v4958, 5
        %v4961 = vsel %vm238, %v4956, %v4960
        %v4963 = vshrl.u32 %v4872, 16
        %v4965 = vrot.slane %v4963, 4
        %v4966 = vshll.u32 %v4872, 16
        %v4968 = vrot.slane %v4966, 5
        %v4969 = vor.u32 %v4965, %v4968
        %v4970 = vrot.slane %v4969, 4
        %v4972 = vshll.u32 %v4873, 16
        %v4974 = vrot.slane %v4972, 5
        %v4975 = vsel %vm238, %v4970, %v4974
        %v4976 = vshrl.u32 %v4873, 16
        %v4978 = vrot.slane %v4976, 4
        %v4979 = vor.u32 %v4978, %v4974
        %v4980 = vrot.slane %v4979, 4
        %v4982 = vshll.u32 %v4874, 16
        %v4984 = vrot.slane %v4982, 5
        %v4985 = vsel %vm238, %v4980, %v4984
        %v4987 = vshrl.u32 %v4875, 16
        %v4989 = vrot.slane %v4987, 4
        %v4990 = vshll.u32 %v4875, 16
        %v4992 = vrot.slane %v4990, 5
        %v4993 = vor.u32 %v4989, %v4992
        %v4994 = vrot.slane %v4993, 4
        %v4996 = vshll.u32 %v4876, 16
        %v4998 = vrot.slane %v4996, 5
        %v4999 = vsel %vm238, %v4994, %v4998
        %v5000 = vshrl.u32 %v4876, 16
        %v5002 = vrot.slane %v5000, 4
        %v5003 = vor.u32 %v5002, %v4998
        %v5004 = vrot.slane %v5003, 4
        %v5006 = vshll.u32 %v4877, 16
        %v5008 = vrot.slane %v5006, 5
        %v5009 = vsel %vm238, %v5004, %v5008
        %v5011 = vshrl.u32 %v4878, 16
        %v5013 = vrot.slane %v5011, 4
        %v5014 = vshll.u32 %v4878, 16
        %v5016 = vrot.slane %v5014, 5
        %v5017 = vor.u32 %v5013, %v5016
        %v5018 = vrot.slane %v5017, 4
        %v5020 = vshll.u32 %v4879, 16
        %v5022 = vrot.slane %v5020, 5
        %v5023 = vsel %vm238, %v5018, %v5022
        %v5024 = vshrl.u32 %v4879, 16
        %v5026 = vrot.slane %v5024, 4
        %v5027 = vor.u32 %v5026, %v5022
        %v5028 = vrot.slane %v5027, 4
        %v5030 = vshll.u32 %v4880, 16
        %v5032 = vrot.slane %v5030, 5
        %v5033 = vsel %vm238, %v5028, %v5032
        %v5035 = vshrl.u32 %v4881, 16
        %v5037 = vrot.slane %v5035, 4
        %v5038 = vshll.u32 %v4881, 16
        %v5040 = vrot.slane %v5038, 5
        %v5041 = vor.u32 %v5037, %v5040
        %v5042 = vrot.slane %v5041, 4
        %v5044 = vshll.u32 %v4882, 16
        %v5046 = vrot.slane %v5044, 5
        %v5047 = vsel %vm238, %v5042, %v5046
        %v5048 = vshrl.u32 %v4882, 16
        %v5050 = vrot.slane %v5048, 4
        %v5051 = vor.u32 %v5050, %v5046
        %v5052 = vrot.slane %v5051, 4
        %v5054 = vshll.u32 %v4883, 16
        %v5056 = vrot.slane %v5054, 5
        %v5057 = vsel %vm238, %v5052, %v5056
        %v5059 = vshrl.u32 %v4884, 16
        %v5061 = vrot.slane %v5059, 4
        %v5062 = vshll.u32 %v4884, 16
        %v5064 = vrot.slane %v5062, 5
        %v5065 = vor.u32 %v5061, %v5064
        %v5066 = vrot.slane %v5065, 4
        %v5068 = vshll.u32 %v4885, 16
        %v5070 = vrot.slane %v5068, 5
        %v5071 = vsel %vm238, %v5066, %v5070
        %v5072 = vshrl.u32 %v4885, 16
        %v5074 = vrot.slane %v5072, 4
        %v5075 = vor.u32 %v5074, %v5070
        %v5076 = vrot.slane %v5075, 4
        %v5078 = vshll.u32 %v4886, 16
        %v5080 = vrot.slane %v5078, 5
        %v5081 = vsel %vm238, %v5076, %v5080
        %v5083 = vshrl.u32 %v4887, 16
        %v5085 = vrot.slane %v5083, 4
        %v5086 = vshll.u32 %v4887, 16
        %v5088 = vrot.slane %v5086, 5
        %v5089 = vor.u32 %v5085, %v5088
        %v5090 = vrot.slane %v5089, 4
        %v5092 = vshll.u32 %v4888, 16
        %v5094 = vrot.slane %v5092, 5
        %v5095 = vsel %vm238, %v5090, %v5094
        %v5096 = vshrl.u32 %v4888, 16
        %v5098 = vrot.slane %v5096, 4
        %v5099 = vor.u32 %v5098, %v5094
        %v5100 = vrot.slane %v5099, 4
        %v5102 = vshll.u32 %v4889, 16
        %v5104 = vrot.slane %v5102, 5
        %v5105 = vsel %vm238, %v5100, %v5104
        %s5106 = scalar_lea.vmem %s1, 28
        %v5107 = vld [vmem:[%s5106] sm:$0x3]
        %v5108 = vunpack.c.l.b16 %v4903
        %v5109 = vunpack.c.l.b16 %v4913
        %v5110 = vunpack.c.l.b16 %v4927
        %v5111 = vunpack.c.l.b16 %v4937
        %v5112 = vunpack.c.l.b16 %v4951
        %v5113 = vunpack.c.l.b16 %v4961
        %v5114 = vunpack.c.l.b16 %v4975
        %v5115 = vunpack.c.l.b16 %v4985
        %v5116 = vunpack.c.l.b16 %v4999
        %v5117 = vunpack.c.l.b16 %v5009
        %v5118 = vunpack.c.l.b16 %v5023
        %v5119 = vunpack.c.l.b16 %v5033
        %v5120 = vunpack.c.l.b16 %v5047
        %v5121 = vunpack.c.l.b16 %v5057
        %v5122 = vunpack.c.l.b16 %v5071
        %v5123 = vunpack.c.l.b16 %v5081
        %v5124 = vunpack.c.l.b16 %v5095
        %v5125 = vunpack.c.l.b16 %v5105
        %v5126 = vpack.c.b16 %v5109, %v5108
        %v5127 = vpack.c.b16 %v5111, %v5110
        %v5128 = vpack.c.b16 %v5113, %v5112
        %v5129 = vpack.c.b16 %v5115, %v5114
        %v5130 = vpack.c.b16 %v5117, %v5116
        %v5131 = vpack.c.b16 %v5119, %v5118
        %v5132 = vpack.c.b16 %v5121, %v5120
        %v5133 = vpack.c.b16 %v5123, %v5122
        %v5134 = vpack.c.b16 %v5125, %v5124
        %v5136 = vsel %vm484, %v5126, 0
        %v5139 = vsel %vm484, %v5127, 0
        %v5142 = vsel %vm484, %v5128, 0
        %v5145 = vsel %vm484, %v5129, 0
        %v5148 = vsel %vm484, %v5130, 0
        %v5151 = vsel %vm484, %v5131, 0
        %v5154 = vsel %vm484, %v5132, 0
        %v5157 = vsel %vm484, %v5133, 0
        %v5160 = vsel %vm484, %v5134, 0
        %v5163 = vsel %vm512, %v5107, 0
        %5165 = vmatprep.subr.bf16.mxu0 0
        %5166 = vmatpush1.bf16.msra.mxu0 0
        %5167 = vmatprep.subr.bf16.mxu0 0
        %5168 = vmatpush1.bf16.msra.mxu0 0
        %5169 = vmatprep.subr.bf16.mxu0 0
        %5170 = vmatpush1.bf16.msra.mxu0 0
        %5171 = vmatprep.subr.bf16.mxu0 0
        %5172 = vmatpush1.bf16.msra.mxu0 0
        %5173 = vmatprep.subr.bf16.mxu0 0
        %5174 = vmatpush1.bf16.msra.mxu0 0
        %5175 = vmatprep.subr.bf16.mxu0 0
        %5176 = vmatpush1.bf16.msra.mxu0 0
        %5177 = vmatprep.subr.bf16.mxu0 0
        %5178 = vmatpush1.bf16.msra.mxu0 0
        %5179 = vmatprep.subr.bf16.mxu0 0
        %5180 = vmatpush1.bf16.msra.mxu0 %v5163
        %5181 = vmatprep.subr.bf16.mxu0 0
        %5182 = vmatpush2.bf16.msra.mxu0 0
        %5183 = vmatprep.subr.bf16.mxu0 0
        %5184 = vmatpush2.bf16.msra.mxu0 0
        %5185 = vmatprep.subr.bf16.mxu0 0
        %5186 = vmatpush2.bf16.msra.mxu0 0
        %5187 = vmatprep.subr.bf16.mxu0 0
        %5188 = vmatpush2.bf16.msra.mxu0 0
        %5189 = vmatprep.subr.bf16.mxu0 0
        %5190 = vmatpush2.bf16.msra.mxu0 0
        %5191 = vmatprep.subr.bf16.mxu0 0
        %5192 = vmatpush2.bf16.msra.mxu0 0
        %5193 = vmatprep.subr.bf16.mxu0 0
        %5194 = vmatpush2.bf16.msra.mxu0 0
        %5195 = vmatprep.subr.bf16.mxu0 0
        %5196 = vmatpush2.bf16.msra.mxu0 0
        %5197 = vmatprep.mubr.bf16.mxu0 0
        %5198 = vmatmul.mubr.bf16.gmra.mxu0 %v5136
        %v5199 = vpop.f32.mrf.mxu0
        %v5200 = vadd.f32 0.0, %v5199
        %v5201 = vpop.f32.mrf.mxu0
        %v5202 = vpop.f32.mrf.mxu0
        %v5203 = vadd.f32 0.0, %v5202
        %v5204 = vpop.f32.mrf.mxu0
        %5205 = vmatprep.mubr.bf16.mxu0 0
        %5206 = vmatmul.mubr.bf16.gmra.mxu0 %v5139
        %v5207 = vpop.f32.mrf.mxu0
        %v5208 = vadd.f32 0.0, %v5207
        %v5209 = vpop.f32.mrf.mxu0
        %v5210 = vpop.f32.mrf.mxu0
        %v5211 = vadd.f32 0.0, %v5210
        %v5212 = vpop.f32.mrf.mxu0
        %5213 = vmatprep.mubr.bf16.mxu0 0
        %5214 = vmatmul.mubr.bf16.gmra.mxu0 %v5142
        %v5215 = vpop.f32.mrf.mxu0
        %v5216 = vadd.f32 0.0, %v5215
        %v5217 = vpop.f32.mrf.mxu0
        %v5218 = vpop.f32.mrf.mxu0
        %v5219 = vadd.f32 0.0, %v5218
        %v5220 = vpop.f32.mrf.mxu0
        %5221 = vmatprep.mubr.bf16.mxu0 0
        %5222 = vmatmul.mubr.bf16.gmra.mxu0 %v5145
        %v5223 = vpop.f32.mrf.mxu0
        %v5224 = vadd.f32 0.0, %v5223
        %v5225 = vpop.f32.mrf.mxu0
        %v5226 = vpop.f32.mrf.mxu0
        %v5227 = vadd.f32 0.0, %v5226
        %v5228 = vpop.f32.mrf.mxu0
        %5229 = vmatprep.mubr.bf16.mxu0 0
        %5230 = vmatmul.mubr.bf16.gmra.mxu0 %v5148
        %v5231 = vpop.f32.mrf.mxu0
        %v5232 = vadd.f32 0.0, %v5231
        %v5233 = vpop.f32.mrf.mxu0
        %v5234 = vpop.f32.mrf.mxu0
        %v5235 = vadd.f32 0.0, %v5234
        %v5236 = vpop.f32.mrf.mxu0
        %5237 = vmatprep.mubr.bf16.mxu0 0
        %5238 = vmatmul.mubr.bf16.gmra.mxu0 %v5151
        %v5239 = vpop.f32.mrf.mxu0
        %v5240 = vadd.f32 0.0, %v5239
        %v5241 = vpop.f32.mrf.mxu0
        %v5242 = vpop.f32.mrf.mxu0
        %v5243 = vadd.f32 0.0, %v5242
        %v5244 = vpop.f32.mrf.mxu0
        %5245 = vmatprep.mubr.bf16.mxu0 0
        %5246 = vmatmul.mubr.bf16.gmra.mxu0 %v5154
        %v5247 = vpop.f32.mrf.mxu0
        %v5248 = vadd.f32 0.0, %v5247
        %v5249 = vpop.f32.mrf.mxu0
        %v5250 = vpop.f32.mrf.mxu0
        %v5251 = vadd.f32 0.0, %v5250
        %v5252 = vpop.f32.mrf.mxu0
        %5253 = vmatprep.mubr.bf16.mxu0 0
        %5254 = vmatmul.mubr.bf16.gmra.mxu0 %v5157
        %v5255 = vpop.f32.mrf.mxu0
        %v5256 = vadd.f32 0.0, %v5255
        %v5257 = vpop.f32.mrf.mxu0
        %v5258 = vpop.f32.mrf.mxu0
        %v5259 = vadd.f32 0.0, %v5258
        %v5260 = vpop.f32.mrf.mxu0
        %5261 = vmatprep.mubr.bf16.mxu0 0
        %5262 = vmatmul.mubr.bf16.gmra.mxu0 %v5160
        %v5263 = vpop.f32.mrf.mxu0
        %v5264 = vadd.f32 0.0, %v5263
        %v5265 = vpop.f32.mrf.mxu0
        %v5266 = vpop.f32.mrf.mxu0
        %v5267 = vadd.f32 0.0, %v5266
        %v5268 = vpop.f32.mrf.mxu0
        %5269 = vdwg.mxu0
        %v5270 = vadd.f32 %v4845, %v5200
        %v5271 = vadd.f32 %v4846, %v5203
        %v5272 = vadd.f32 %v4847, %v5208
        %v5273 = vadd.f32 %v4848, %v5211
        %v5274 = vadd.f32 %v4849, %v5216
        %v5275 = vadd.f32 %v4850, %v5219
        %v5276 = vadd.f32 %v4851, %v5224
        %v5277 = vadd.f32 %v4852, %v5227
        %v5278 = vadd.f32 %v4853, %v5232
        %v5279 = vadd.f32 %v4854, %v5235
        %v5280 = vadd.f32 %v4855, %v5240
        %v5281 = vadd.f32 %v4856, %v5243
        %v5282 = vadd.f32 %v4857, %v5248
        %v5283 = vadd.f32 %v4858, %v5251
        %v5284 = vadd.f32 %v4859, %v5256
        %v5285 = vadd.f32 %v4860, %v5259
        %v5286 = vadd.f32 %v4861, %v5264
        %v5287 = vadd.f32 %v4862, %v5267
        %v5288 = vld [vmem:[%s4219 + $0x8] sm:$0xe]
        %v5289 = vld [vmem:[%s4219 + $0x1c] sm:$0xe]
        %v5290 = vld [vmem:[%s4219 + $0x30] sm:$0xe]
        %v5291 = vld [vmem:[%s4219 + $0x44] sm:$0xe]
        %v5292 = vld [vmem:[%s4219 + $0x58] sm:$0xe]
        %v5293 = vld [vmem:[%s4219 + $0x6c] sm:$0xe]
        %v5294 = vld [vmem:[%s4219 + $0x80] sm:$0xe]
        %v5295 = vld [vmem:[%s4219 + $0x94] sm:$0xe]
        %v5296 = vld [vmem:[%s4219 + $0xa8] sm:$0xe]
        %v5324 = vrot.slane %v5288, 5
        %v5325 = vrot.slane %v5324, 4
        %v5326 = vrot.slane %v4439, 5
        %v5327 = vsel %vm1264, %v5325, %v5326
        %v5328 = vrot.slane %v5326, 4
        %v5329 = vrot.slane %v4440, 5
        %v5330 = vsel %vm1264, %v5328, %v5329
        %v5331 = vrot.slane %v5289, 5
        %v5332 = vrot.slane %v5331, 4
        %v5333 = vrot.slane %v4442, 5
        %v5334 = vsel %vm1264, %v5332, %v5333
        %v5335 = vrot.slane %v5333, 4
        %v5336 = vrot.slane %v4443, 5
        %v5337 = vsel %vm1264, %v5335, %v5336
        %v5338 = vrot.slane %v5290, 5
        %v5339 = vrot.slane %v5338, 4
        %v5340 = vrot.slane %v4445, 5
        %v5341 = vsel %vm1264, %v5339, %v5340
        %v5342 = vrot.slane %v5340, 4
        %v5343 = vrot.slane %v4446, 5
        %v5344 = vsel %vm1264, %v5342, %v5343
        %v5345 = vrot.slane %v5291, 5
        %v5346 = vrot.slane %v5345, 4
        %v5347 = vrot.slane %v4448, 5
        %v5348 = vsel %vm1264, %v5346, %v5347
        %v5349 = vrot.slane %v5347, 4
        %v5350 = vrot.slane %v4449, 5
        %v5351 = vsel %vm1264, %v5349, %v5350
        %v5352 = vrot.slane %v5292, 5
        %v5353 = vrot.slane %v5352, 4
        %v5354 = vrot.slane %v4451, 5
        %v5355 = vsel %vm1264, %v5353, %v5354
        %v5356 = vrot.slane %v5354, 4
        %v5357 = vrot.slane %v4452, 5
        %v5358 = vsel %vm1264, %v5356, %v5357
        %v5359 = vrot.slane %v5293, 5
        %v5360 = vrot.slane %v5359, 4
        %v5361 = vrot.slane %v4454, 5
        %v5362 = vsel %vm1264, %v5360, %v5361
        %v5363 = vrot.slane %v5361, 4
        %v5364 = vrot.slane %v4455, 5
        %v5365 = vsel %vm1264, %v5363, %v5364
        %v5366 = vrot.slane %v5294, 5
        %v5367 = vrot.slane %v5366, 4
        %v5368 = vrot.slane %v4457, 5
        %v5369 = vsel %vm1264, %v5367, %v5368
        %v5370 = vrot.slane %v5368, 4
        %v5371 = vrot.slane %v4458, 5
        %v5372 = vsel %vm1264, %v5370, %v5371
        %v5373 = vrot.slane %v5295, 5
        %v5374 = vrot.slane %v5373, 4
        %v5375 = vrot.slane %v4460, 5
        %v5376 = vsel %vm1264, %v5374, %v5375
        %v5377 = vrot.slane %v5375, 4
        %v5378 = vrot.slane %v4461, 5
        %v5379 = vsel %vm1264, %v5377, %v5378
        %v5380 = vrot.slane %v5296, 5
        %v5381 = vrot.slane %v5380, 4
        %v5382 = vrot.slane %v4463, 5
        %v5383 = vsel %vm1264, %v5381, %v5382
        %v5384 = vrot.slane %v5382, 4
        %v5385 = vrot.slane %v4464, 5
        %v5386 = vsel %vm1264, %v5384, %v5385
        %s5387 = scalar_lea.vmem %s1, 30
        %v5388 = vld [vmem:[%s5387] sm:$0x3]
        %v5389 = vunpack.c.l.b16 %v5327
        %v5390 = vunpack.c.l.b16 %v5330
        %v5391 = vunpack.c.l.b16 %v5334
        %v5392 = vunpack.c.l.b16 %v5337
        %v5393 = vunpack.c.l.b16 %v5341
        %v5394 = vunpack.c.l.b16 %v5344
        %v5395 = vunpack.c.l.b16 %v5348
        %v5396 = vunpack.c.l.b16 %v5351
        %v5397 = vunpack.c.l.b16 %v5355
        %v5398 = vunpack.c.l.b16 %v5358
        %v5399 = vunpack.c.l.b16 %v5362
        %v5400 = vunpack.c.l.b16 %v5365
        %v5401 = vunpack.c.l.b16 %v5369
        %v5402 = vunpack.c.l.b16 %v5372
        %v5403 = vunpack.c.l.b16 %v5376
        %v5404 = vunpack.c.l.b16 %v5379
        %v5405 = vunpack.c.l.b16 %v5383
        %v5406 = vunpack.c.l.b16 %v5386
        %v5407 = vpack.c.b16 %v5390, %v5389
        %v5408 = vpack.c.b16 %v5392, %v5391
        %v5409 = vpack.c.b16 %v5394, %v5393
        %v5410 = vpack.c.b16 %v5396, %v5395
        %v5411 = vpack.c.b16 %v5398, %v5397
        %v5412 = vpack.c.b16 %v5400, %v5399
        %v5413 = vpack.c.b16 %v5402, %v5401
        %v5414 = vpack.c.b16 %v5404, %v5403
        %v5415 = vpack.c.b16 %v5406, %v5405
        %v5417 = vsel %vm484, %v5407, 0
        %v5420 = vsel %vm484, %v5408, 0
        %v5423 = vsel %vm484, %v5409, 0
        %v5426 = vsel %vm484, %v5410, 0
        %v5429 = vsel %vm484, %v5411, 0
        %v5432 = vsel %vm484, %v5412, 0
        %v5435 = vsel %vm484, %v5413, 0
        %v5438 = vsel %vm484, %v5414, 0
        %v5441 = vsel %vm484, %v5415, 0
        %v5444 = vsel %vm512, %v5388, 0
        %5446 = vmatprep.subr.bf16.mxu0 0
        %5447 = vmatpush1.bf16.msra.mxu0 0
        %5448 = vmatprep.subr.bf16.mxu0 0
        %5449 = vmatpush1.bf16.msra.mxu0 0
        %5450 = vmatprep.subr.bf16.mxu0 0
        %5451 = vmatpush1.bf16.msra.mxu0 0
        %5452 = vmatprep.subr.bf16.mxu0 0
        %5453 = vmatpush1.bf16.msra.mxu0 0
        %5454 = vmatprep.subr.bf16.mxu0 0
        %5455 = vmatpush1.bf16.msra.mxu0 0
        %5456 = vmatprep.subr.bf16.mxu0 0
        %5457 = vmatpush1.bf16.msra.mxu0 0
        %5458 = vmatprep.subr.bf16.mxu0 0
        %5459 = vmatpush1.bf16.msra.mxu0 0
        %5460 = vmatprep.subr.bf16.mxu0 0
        %5461 = vmatpush1.bf16.msra.mxu0 %v5444
        %5462 = vmatprep.subr.bf16.mxu0 0
        %5463 = vmatpush2.bf16.msra.mxu0 0
        %5464 = vmatprep.subr.bf16.mxu0 0
        %5465 = vmatpush2.bf16.msra.mxu0 0
        %5466 = vmatprep.subr.bf16.mxu0 0
        %5467 = vmatpush2.bf16.msra.mxu0 0
        %5468 = vmatprep.subr.bf16.mxu0 0
        %5469 = vmatpush2.bf16.msra.mxu0 0
        %5470 = vmatprep.subr.bf16.mxu0 0
        %5471 = vmatpush2.bf16.msra.mxu0 0
        %5472 = vmatprep.subr.bf16.mxu0 0
        %5473 = vmatpush2.bf16.msra.mxu0 0
        %5474 = vmatprep.subr.bf16.mxu0 0
        %5475 = vmatpush2.bf16.msra.mxu0 0
        %5476 = vmatprep.subr.bf16.mxu0 0
        %5477 = vmatpush2.bf16.msra.mxu0 0
        %5478 = vmatprep.mubr.bf16.mxu0 0
        %5479 = vmatmul.mubr.bf16.gmra.mxu0 %v5417
        %v5480 = vpop.f32.mrf.mxu0
        %v5481 = vadd.f32 0.0, %v5480
        %v5482 = vpop.f32.mrf.mxu0
        %v5483 = vpop.f32.mrf.mxu0
        %v5484 = vadd.f32 0.0, %v5483
        %v5485 = vpop.f32.mrf.mxu0
        %5486 = vmatprep.mubr.bf16.mxu0 0
        %5487 = vmatmul.mubr.bf16.gmra.mxu0 %v5420
        %v5488 = vpop.f32.mrf.mxu0
        %v5489 = vadd.f32 0.0, %v5488
        %v5490 = vpop.f32.mrf.mxu0
        %v5491 = vpop.f32.mrf.mxu0
        %v5492 = vadd.f32 0.0, %v5491
        %v5493 = vpop.f32.mrf.mxu0
        %5494 = vmatprep.mubr.bf16.mxu0 0
        %5495 = vmatmul.mubr.bf16.gmra.mxu0 %v5423
        %v5496 = vpop.f32.mrf.mxu0
        %v5497 = vadd.f32 0.0, %v5496
        %v5498 = vpop.f32.mrf.mxu0
        %v5499 = vpop.f32.mrf.mxu0
        %v5500 = vadd.f32 0.0, %v5499
        %v5501 = vpop.f32.mrf.mxu0
        %5502 = vmatprep.mubr.bf16.mxu0 0
        %5503 = vmatmul.mubr.bf16.gmra.mxu0 %v5426
        %v5504 = vpop.f32.mrf.mxu0
        %v5505 = vadd.f32 0.0, %v5504
        %v5506 = vpop.f32.mrf.mxu0
        %v5507 = vpop.f32.mrf.mxu0
        %v5508 = vadd.f32 0.0, %v5507
        %v5509 = vpop.f32.mrf.mxu0
        %5510 = vmatprep.mubr.bf16.mxu0 0
        %5511 = vmatmul.mubr.bf16.gmra.mxu0 %v5429
        %v5512 = vpop.f32.mrf.mxu0
        %v5513 = vadd.f32 0.0, %v5512
        %v5514 = vpop.f32.mrf.mxu0
        %v5515 = vpop.f32.mrf.mxu0
        %v5516 = vadd.f32 0.0, %v5515
        %v5517 = vpop.f32.mrf.mxu0
        %5518 = vmatprep.mubr.bf16.mxu0 0
        %5519 = vmatmul.mubr.bf16.gmra.mxu0 %v5432
        %v5520 = vpop.f32.mrf.mxu0
        %v5521 = vadd.f32 0.0, %v5520
        %v5522 = vpop.f32.mrf.mxu0
        %v5523 = vpop.f32.mrf.mxu0
        %v5524 = vadd.f32 0.0, %v5523
        %v5525 = vpop.f32.mrf.mxu0
        %5526 = vmatprep.mubr.bf16.mxu0 0
        %5527 = vmatmul.mubr.bf16.gmra.mxu0 %v5435
        %v5528 = vpop.f32.mrf.mxu0
        %v5529 = vadd.f32 0.0, %v5528
        %v5530 = vpop.f32.mrf.mxu0
        %v5531 = vpop.f32.mrf.mxu0
        %v5532 = vadd.f32 0.0, %v5531
        %v5533 = vpop.f32.mrf.mxu0
        %5534 = vmatprep.mubr.bf16.mxu0 0
        %5535 = vmatmul.mubr.bf16.gmra.mxu0 %v5438
        %v5536 = vpop.f32.mrf.mxu0
        %v5537 = vadd.f32 0.0, %v5536
        %v5538 = vpop.f32.mrf.mxu0
        %v5539 = vpop.f32.mrf.mxu0
        %v5540 = vadd.f32 0.0, %v5539
        %v5541 = vpop.f32.mrf.mxu0
        %5542 = vmatprep.mubr.bf16.mxu0 0
        %5543 = vmatmul.mubr.bf16.gmra.mxu0 %v5441
        %v5544 = vpop.f32.mrf.mxu0
        %v5545 = vadd.f32 0.0, %v5544
        %v5546 = vpop.f32.mrf.mxu0
        %v5547 = vpop.f32.mrf.mxu0
        %v5548 = vadd.f32 0.0, %v5547
        %v5549 = vpop.f32.mrf.mxu0
        %5550 = vdwg.mxu0
        %v5551 = vadd.f32 %v5270, %v5481
        %v5552 = vadd.f32 %v5271, %v5484
        %v5553 = vadd.f32 %v5272, %v5489
        %v5554 = vadd.f32 %v5273, %v5492
        %v5555 = vadd.f32 %v5274, %v5497
        %v5556 = vadd.f32 %v5275, %v5500
        %v5557 = vadd.f32 %v5276, %v5505
        %v5558 = vadd.f32 %v5277, %v5508
        %v5559 = vadd.f32 %v5278, %v5513
        %v5560 = vadd.f32 %v5279, %v5516
        %v5561 = vadd.f32 %v5280, %v5521
        %v5562 = vadd.f32 %v5281, %v5524
        %v5563 = vadd.f32 %v5282, %v5529
        %v5564 = vadd.f32 %v5283, %v5532
        %v5565 = vadd.f32 %v5284, %v5537
        %v5566 = vadd.f32 %v5285, %v5540
        %v5567 = vadd.f32 %v5286, %v5545
        %v5568 = vadd.f32 %v5287, %v5548
        %v5569 = vld [vmem:[%s2] sm:$0x1]
        %v5571 = vlaneseq
        %v5572 = vshrl.u32 %v5571, 7
        %v5573 = vsub.s32 0, %v5572
        %v5574 = vrot.slane %v5569, %v5573
        %v5576 = vadd.f32 %v5551, %v5574
        %v5577 = vadd.f32 %v5552, %v5574
        %v5578 = vadd.f32 %v5553, %v5574
        %v5579 = vadd.f32 %v5554, %v5574
        %v5580 = vadd.f32 %v5555, %v5574
        %v5581 = vadd.f32 %v5556, %v5574
        %v5582 = vadd.f32 %v5557, %v5574
        %v5583 = vadd.f32 %v5558, %v5574
        %v5584 = vadd.f32 %v5559, %v5574
        %v5585 = vadd.f32 %v5560, %v5574
        %v5586 = vadd.f32 %v5561, %v5574
        %v5587 = vadd.f32 %v5562, %v5574
        %v5588 = vadd.f32 %v5563, %v5574
        %v5589 = vadd.f32 %v5564, %v5574
        %v5590 = vadd.f32 %v5565, %v5574
        %v5591 = vadd.f32 %v5566, %v5574
        %v5592 = vadd.f32 %v5567, %v5574
        %v5593 = vadd.f32 %v5568, %v5574
        %vm5594 = vcmp.ge.f32.partialorder %v5576, 0.0
        %vm5595 = vcmp.ge.f32.partialorder %v5577, 0.0
        %vm5596 = vcmp.ge.f32.partialorder %v5578, 0.0
        %vm5597 = vcmp.ge.f32.partialorder %v5579, 0.0
        %vm5598 = vcmp.ge.f32.partialorder %v5580, 0.0
        %vm5599 = vcmp.ge.f32.partialorder %v5581, 0.0
        %vm5600 = vcmp.ge.f32.partialorder %v5582, 0.0
        %vm5601 = vcmp.ge.f32.partialorder %v5583, 0.0
        %vm5602 = vcmp.ge.f32.partialorder %v5584, 0.0
        %vm5603 = vcmp.ge.f32.partialorder %v5585, 0.0
        %vm5604 = vcmp.ge.f32.partialorder %v5586, 0.0
        %vm5605 = vcmp.ge.f32.partialorder %v5587, 0.0
        %vm5606 = vcmp.ge.f32.partialorder %v5588, 0.0
        %vm5607 = vcmp.ge.f32.partialorder %v5589, 0.0
        %vm5608 = vcmp.ge.f32.partialorder %v5590, 0.0
        %vm5609 = vcmp.ge.f32.partialorder %v5591, 0.0
        %vm5610 = vcmp.ge.f32.partialorder %v5592, 0.0
        %vm5611 = vcmp.ge.f32.partialorder %v5593, 0.0
        %v5612 = vmul.f32 %v5576, 0.2
        %v5613 = vmul.f32 %v5577, 0.2
        %v5614 = vmul.f32 %v5578, 0.2
        %v5615 = vmul.f32 %v5579, 0.2
        %v5616 = vmul.f32 %v5580, 0.2
        %v5617 = vmul.f32 %v5581, 0.2
        %v5618 = vmul.f32 %v5582, 0.2
        %v5619 = vmul.f32 %v5583, 0.2
        %v5620 = vmul.f32 %v5584, 0.2
        %v5621 = vmul.f32 %v5585, 0.2
        %v5622 = vmul.f32 %v5586, 0.2
        %v5623 = vmul.f32 %v5587, 0.2
        %v5624 = vmul.f32 %v5588, 0.2
        %v5625 = vmul.f32 %v5589, 0.2
        %v5626 = vmul.f32 %v5590, 0.2
        %v5627 = vmul.f32 %v5591, 0.2
        %v5628 = vmul.f32 %v5592, 0.2
        %v5629 = vmul.f32 %v5593, 0.2
        %v5630 = vsel %vm5594, %v5576, %v5612
        %v5631 = vsel %vm5595, %v5577, %v5613
        %v5632 = vsel %vm5596, %v5578, %v5614
        %v5633 = vsel %vm5597, %v5579, %v5615
        %v5634 = vsel %vm5598, %v5580, %v5616
        %v5635 = vsel %vm5599, %v5581, %v5617
        %v5636 = vsel %vm5600, %v5582, %v5618
        %v5637 = vsel %vm5601, %v5583, %v5619
        %v5638 = vsel %vm5602, %v5584, %v5620
        %v5639 = vsel %vm5603, %v5585, %v5621
        %v5640 = vsel %vm5604, %v5586, %v5622
        %v5641 = vsel %vm5605, %v5587, %v5623
        %v5642 = vsel %vm5606, %v5588, %v5624
        %v5643 = vsel %vm5607, %v5589, %v5625
        %v5644 = vsel %vm5608, %v5590, %v5626
        %v5645 = vsel %vm5609, %v5591, %v5627
        %v5646 = vsel %vm5610, %v5592, %v5628
        %v5647 = vsel %vm5611, %v5593, %v5629
        %v5648 = vpack.c.bf16 %v5631, %v5630
        %v5649 = vpack.c.bf16 %v5633, %v5632
        %v5650 = vpack.c.bf16 %v5635, %v5634
        %v5651 = vpack.c.bf16 %v5637, %v5636
        %v5652 = vpack.c.bf16 %v5639, %v5638
        %v5653 = vpack.c.bf16 %v5641, %v5640
        %v5654 = vpack.c.bf16 %v5643, %v5642
        %v5655 = vpack.c.bf16 %v5645, %v5644
        %v5656 = vpack.c.bf16 %v5647, %v5646
        %v5666 = vunpack.c.l.b16 %v5648
        %v5667 = vunpack.c.h.b16 %v5648
        %v5668 = vunpack.c.l.b16 %v5649
        %v5669 = vunpack.c.h.b16 %v5649
        %v5670 = vunpack.c.l.b16 %v5650
        %v5671 = vunpack.c.h.b16 %v5650
        %v5672 = vunpack.c.l.b16 %v5651
        %v5673 = vunpack.c.h.b16 %v5651
        %v5674 = vunpack.c.l.b16 %v5652
        %v5675 = vunpack.c.h.b16 %v5652
        %v5676 = vunpack.c.l.b16 %v5653
        %v5677 = vunpack.c.h.b16 %v5653
        %v5678 = vunpack.c.l.b16 %v5654
        %v5679 = vunpack.c.h.b16 %v5654
        %v5680 = vunpack.c.l.b16 %v5655
        %v5681 = vunpack.c.h.b16 %v5655
        %v5682 = vunpack.c.l.b16 %v5656
        %v5683 = vunpack.c.h.b16 %v5656
        %v5684 = vpack.c.b16 %v5666, %v5666
        %v5685 = vpack.c.b16 %v5667, %v5667
        %v5686 = vpack.c.b16 %v5668, %v5668
        %v5687 = vpack.c.b16 %v5669, %v5669
        %v5688 = vpack.c.b16 %v5670, %v5670
        %v5689 = vpack.c.b16 %v5671, %v5671
        %v5690 = vpack.c.b16 %v5672, %v5672
        %v5691 = vpack.c.b16 %v5673, %v5673
        %v5692 = vpack.c.b16 %v5674, %v5674
        %v5693 = vpack.c.b16 %v5675, %v5675
        %v5694 = vpack.c.b16 %v5676, %v5676
        %v5695 = vpack.c.b16 %v5677, %v5677
        %v5696 = vpack.c.b16 %v5678, %v5678
        %v5697 = vpack.c.b16 %v5679, %v5679
        %v5698 = vpack.c.b16 %v5680, %v5680
        %v5699 = vpack.c.b16 %v5681, %v5681
        %v5700 = vpack.c.b16 %v5682, %v5682
        %v5701 = vpack.c.b16 %v5683, %v5683
        %5720 = vst [vmem:[%s177] sm:$0xf] %v5684
        %5721 = vst [vmem:[%s177 + $0x4] sm:$0xf] %v5685
        %5722 = vst [vmem:[%s177 + $0x8] sm:$0xf] %v5686
        %5723 = vst [vmem:[%s177 + $0xc] sm:$0xf] %v5687
        %5724 = vst [vmem:[%s177 + $0x10] sm:$0xf] %v5688
        %5725 = vst [vmem:[%s177 + $0x14] sm:$0xf] %v5689
        %5726 = vst [vmem:[%s177 + $0x18] sm:$0xf] %v5690
        %5727 = vst [vmem:[%s177 + $0x1c] sm:$0xf] %v5691
        %5728 = vst [vmem:[%s177 + $0x20] sm:$0xf] %v5692
        %5729 = vst [vmem:[%s177 + $0x24] sm:$0xf] %v5693
        %5730 = vst [vmem:[%s177 + $0x28] sm:$0xf] %v5694
        %5731 = vst [vmem:[%s177 + $0x2c] sm:$0xf] %v5695
        %5732 = vst [vmem:[%s177 + $0x30] sm:$0xf] %v5696
        %5733 = vst [vmem:[%s177 + $0x34] sm:$0xf] %v5697
        %5734 = vst [vmem:[%s177 + $0x38] sm:$0xf] %v5698
        %5735 = vst [vmem:[%s177 + $0x3c] sm:$0xf] %v5699
        %5736 = vst [vmem:[%s177 + $0x40] sm:$0xf] %v5700
        %5737 = vst [vmem:[%s177 + $0x44] sm:$0xf] %v5701
        %s5738 = sand.u32 %s107, 1
        %s5739 = scalar_lea.sflag [#allocation3], %s5738
        %s5740 = sand.u32 %s107, 1
        %s5741 = smul.addr %s5740, 72
        %s5742 = scalar_lea.vmem [#allocation2], %s5741
        // Predicated region
        $region33: #{tpu_custom_call.1} parent=31 // pred_check
          %p5743 = pneg %p117
        $region34: #{tpu_custom_call.1} parent=31 // pred_check_branch
          %5745 = sbr.rel (%p5743) target = $region36
        $region35: #{tpu_custom_call.1} parent=31 // pred_region
          %s5746 = sadd.s32 %s21, %s22
          %s5747 = smul.u32 18, %s5746
          %s5749 = ssub.s32 1152, 1152
          %5750 = vsyncadd %s5739, %s5749
          %s5751 = smul.addr %s5747, 64
          %s5752 = scalar_lea.hbm %s3, %s5751
          %s5753 = sshll.u32 %s5742, 4
          %s5754 = int_to_ptr.vmem [resolvable:$true] %s5753
          %5759 = dma.vmem_to_hbm [thread:$0]  %s5754, 1152, %s5752, %s5739, 64, 64, 4
        $region36: #{tpu_custom_call.1} parent=31 // pred_fallthru
          _
      $region32: #{tpu_custom_call.1} parent=5 // pred_fallthru
        _
      %p5760 = scmp.le.s32.totalorder 2, %s12
      // Predicated region
      $region37: #{tpu_custom_call.1} parent=5 // pred_check
        %p5761 = pneg %p5760
      $region38: #{tpu_custom_call.1} parent=5 // pred_check_branch
        %5763 = sbr.rel (%p5761) target = $region40
      $region39: #{tpu_custom_call.1} parent=5 // pred_region
        %s5764 = ssub.s32 %s12, 2
        // Predicated region
        $region41: #{tpu_custom_call.1} parent=39 // pred_check
          %p5765 = pneg %p123
        $region42: #{tpu_custom_call.1} parent=39 // pred_check_branch
          %5767 = sbr.rel (%p5765) target = $region44
        $region43: #{tpu_custom_call.1} parent=39 // pred_region
          %s5768 = sand.u32 %s108, 1
          %s5769 = scalar_lea.sflag [#allocation3], %s5768
          %s5770 = sand.u32 %s108, 1
          %s5771 = smul.addr %s5770, 72
          %s5772 = scalar_lea.vmem [#allocation2], %s5771
          %5773 = dma.done %s5769, 1152
        $region44: #{tpu_custom_call.1} parent=39 // pred_fallthru
          _
      $region40: #{tpu_custom_call.1} parent=5 // pred_fallthru
        _
    $region6: #{tpu_custom_call.1} parent=1 // loop_footer
      %s16 = sadd.s32 1, %s12
    $region7: #{tpu_custom_call.1} parent=1 // loop_footer_branch
      %11 = sbr.rel target = $region3
    $region8: #{tpu_custom_call.1} parent=1 // loop_exit
      _
    %5774 = vsyncpa [#allocation3], 1
    %s5775 = scalar_lea.sflag [#allocation3], 1
    %5776 = vsyncpa %s5775, 1

</llo_original>
